<compile_context>
chip_gen: v6e
topology: v6e:2x2x1
jax: 0.10.0
libtpu: 0.0.40
codegen_flags: <defaults>
</compile_context>

<pallas_src>
import functools

import jax
import jax.numpy as jnp
from jax import lax
from jax.experimental import pallas as pl
from jax.experimental.pallas import tpu as pltpu


VMEM_LIMIT_BYTES = 64 * 1024 * 1024   # <= v7x physical VMEM; generous on v5e/v6e


def _prelu(v, a):
  return jnp.where(v >= 0.0, v, a * v)


# --------------------------------------------------------------------------- #
# Phase 1: conv1x1 -> conv3x3 -> conv1x1 (per H-tile) + partial pooled mean.
# --------------------------------------------------------------------------- #
def _ir_phase1_kernel(
    x_ref, xu_ref, xd_ref,                       # bf16 main tile + 1-row halos
    w1_ref, w2_ref, w3_ref,                      # bf16 conv weights
    bn1s_ref, bn1b_ref, bn2s_ref, bn2b_ref,      # folded BN scale/bias (f32)
    bn3s_ref, bn3b_ref, bn4s_ref, bn4b_ref,
    maskl_ref, maskr_ref,                        # (Lp,1) f32 border-column masks
    alphas_ref,                                  # SMEM f32[4] PReLU slopes
    y3_ref, pooled_ref,                          # outputs
    *, inv_hw):
  _, TH, W, Cin = x_ref.shape
  P = w1_ref.shape[1]
  C4 = w3_ref.shape[1]
  R = TH * W
  Lp = (TH + 2) * W

  h = pl.program_id(1)
  n_h = pl.num_programs(1)
  a1 = alphas_ref[0]
  a2 = alphas_ref[1]

  bn1s = bn1s_ref[...]
  bn1b = bn1b_ref[...]
  bn2s = bn2s_ref[...]
  bn2b = bn2b_ref[...]
  w1 = w1_ref[...]

  def bn1_conv1_bn2(xm):                          # (rows, Cin) bf16 -> (rows, P) f32
    xb = xm.astype(jnp.float32) * bn1s + bn1b
    y = jnp.dot(xb.astype(jnp.bfloat16), w1, preferred_element_type=jnp.float32)
    return _prelu(y * bn2s + bn2b, a1)

  y_mid = bn1_conv1_bn2(x_ref[...].reshape(R, Cin))
  y_up = bn1_conv1_bn2(xu_ref[...].reshape(W, Cin))
  y_dn = bn1_conv1_bn2(xd_ref[...].reshape(W, Cin))
  # Halo rows outside the image are the conv2 zero padding.
  y_up = y_up * (h > 0).astype(jnp.float32)
  y_dn = y_dn * (h < n_h - 1).astype(jnp.float32)
  ypad = jnp.concatenate([y_up, y_mid, y_dn], axis=0)           # (Lp, P) f32

  # conv3x3: realize the +/-1 column shifts once per tap column via sublane
  # rotation + border masking (shifts are non-negative: Lp-1 == rotate by -1).
  left = maskl_ref[...] * pltpu.roll(ypad, shift=1, axis=0)      # column w-1
  right = maskr_ref[...] * pltpu.roll(ypad, shift=Lp - 1, axis=0)  # column w+1
  planes = (left, ypad, right)                                   # kx = 0, 1, 2
  w2 = w2_ref[...]                                               # (9, P, P) bf16

  y2 = jnp.zeros((R, P), jnp.float32)
  if P % 128 == 0:
    # Lane-aligned channels: fold the 3 ky taps of each kx into one K=3P matmul
    # (keeps MXU contraction depth high without a 9P-wide slab temporary).
    for kx in range(3):
      slab = jnp.concatenate(
          [planes[kx][ky * W: ky * W + R, :].astype(jnp.bfloat16)
           for ky in range(3)], axis=-1)                          # (R, 3P)
      wk = jnp.concatenate([w2[3 * ky + kx] for ky in range(3)], axis=0)
      y2 = y2 + jnp.dot(slab, wk, preferred_element_type=jnp.float32)
  else:
    # Small / unaligned channel counts: 9 accumulated whole-tile matmuls.
    for ky in range(3):
      for kx in range(3):
        tap = planes[kx][ky * W: ky * W + R, :].astype(jnp.bfloat16)
        y2 = y2 + jnp.dot(tap, w2[3 * ky + kx],
                          preferred_element_type=jnp.float32)
  y2 = _prelu(y2 * bn3s_ref[...] + bn3b_ref[...], a2)

  # conv1x1 (P -> C4) + BN4
  y3 = jnp.dot(y2.astype(jnp.bfloat16), w3_ref[...],
               preferred_element_type=jnp.float32)                # (R, C4)
  y3 = y3 * bn4s_ref[...] + bn4b_ref[...]
  y3_ref[...] = y3.reshape(1, TH, W, C4)

  # SE squeeze: accumulate the global mean across H-tiles (h axis is "arbitrary").
  @pl.when(h == 0)
  def _():
    pooled_ref[...] = jnp.zeros_like(pooled_ref)
  pooled_ref[...] += (jnp.sum(y3, axis=0) * inv_hw).reshape(1, 1, C4)


# --------------------------------------------------------------------------- #
# Phase 2: SE excitation + sigmoid scale + identity residual + final PReLU.
# --------------------------------------------------------------------------- #
def _ir_phase2_kernel(y3_ref, x_ref, pooled_ref, wse1_ref, wse2_ref,
                      alphas_ref, out_ref):
  _, TH, W, C4 = y3_ref.shape
  Cin = x_ref.shape[-1]
  R = TH * W
  a_se = alphas_ref[2]
  a_out = alphas_ref[3]

  pooled = pooled_ref[...].reshape(1, C4)                         # global mean
  s = jnp.dot(pooled.astype(jnp.bfloat16), wse1_ref[...],
              preferred_element_type=jnp.float32)                 # (1, Cr)
  s = _prelu(s, a_se)
  s = jnp.dot(s.astype(jnp.bfloat16), wse2_ref[...],
              preferred_element_type=jnp.float32)                 # (1, C4)
  s = 1.0 / (1.0 + jnp.exp(-s))                                   # sigmoid

  y3 = y3_ref[...].reshape(R, C4)
  xr = x_ref[...].reshape(R, Cin).astype(jnp.float32)
  out = _prelu(y3 * s + xr, a_out)
  out_ref[...] = out.astype(out_ref.dtype).reshape(1, TH, W, C4)


def _pick_tile_h(H, W, Cin, P, C4, budget_bytes):
  """Largest divisor of H whose estimated per-step working set fits the budget."""
  best = 1
  for th in range(1, H + 1):
    if H % th:
      continue
    r, rp = th * W, (th + 2) * W
    est = (r + 2 * W) * Cin * 2 * 2                # bf16 x tiles, double-buffered
    est += 4 * rp * P * 4                          # ypad / left / right / temps
    est += 3 * r * P * 2 + r * P * 4               # taps + y2
    est += 3 * r * C4 * 4                          # y3 + double-buffered y3 block
    if est <= budget_bytes:
      best = th
  return best


def ir_bottleneck_pallas(x_nhwc, params, tile_h=None):
  """Fused IR_Bottleneck forward. x_nhwc: (N,H,W,Cin), any float dtype (bf16 preferred)."""
  (w1, w2, w3, wse1, wse2,
   bn1s, bn1b, bn2s, bn2b, bn3s, bn3b, bn4s, bn4b, alphas) = params
  x = x_nhwc.astype(jnp.bfloat16)      # bf16 I/O halves x-read / out-write HBM bytes
  N, H, W, Cin = x.shape
  P = w1.shape[1]
  C4 = w3.shape[1]
  assert Cin == C4, "identity residual requires inplanes == planes * expansion"

  if tile_h is None:
    tile_h = _pick_tile_h(H, W, Cin, P, C4, VMEM_LIMIT_BYTES // 2)
  TH = int(tile_h)
  assert H % TH == 0, "tile_h must divide H"
  HT = H // TH
  Lp = (TH + 2) * W

  # MXU inputs in bf16 (f32 accumulation in-kernel); w2 stored tap-major.
  w1b = w1.astype(jnp.bfloat16)                       # (Cin, P)
  w2b = w2.reshape(9, P, P).astype(jnp.bfloat16)      # HWIO (3,3,P,P) -> (9,P,P)
  w3b = w3.astype(jnp.bfloat16)                       # (P, C4)
  wse1b = wse1.astype(jnp.bfloat16)                   # (C4, Cr)
  wse2b = wse2.astype(jnp.bfloat16)                   # (Cr, C4)

  # Precomputed border-column masks (hoisted out of the kernel body).
  col = jnp.arange(Lp, dtype=jnp.int32) % W
  maskl = (col != 0).astype(jnp.float32).reshape(Lp, 1)
  maskr = (col != W - 1).astype(jnp.float32).reshape(Lp, 1)

  def full(arr):
    return pl.BlockSpec(arr.shape, lambda *_, nd=arr.ndim: (0,) * nd)

  smem_spec = pl.BlockSpec(memory_space=pltpu.MemorySpace.SMEM)

  # ---- Phase 1: conv stack per tile + pooled-mean accumulator -------------- #
  phase1 = pl.pallas_call(
      functools.partial(_ir_phase1_kernel, inv_hw=1.0 / float(H * W)),
      out_shape=(jax.ShapeDtypeStruct((N, H, W, C4), jnp.float32),
                 jax.ShapeDtypeStruct((N, 1, C4), jnp.float32)),
      grid_spec=pltpu.PrefetchScalarGridSpec(
          num_scalar_prefetch=0,
          grid=(N, HT),
          in_specs=[
              pl.BlockSpec((1, TH, W, Cin), lambda b, h: (b, h, 0, 0)),
              # one halo row above / below (clamped; zeroed in-kernel at the border)
              pl.BlockSpec((1, 1, W, Cin),
                           lambda b, h: (b, jnp.maximum(h * TH - 1, 0), 0, 0)),
              pl.BlockSpec((1, 1, W, Cin),
                           lambda b, h: (b, jnp.minimum((h + 1) * TH, H - 1), 0, 0)),
              full(w1b), full(w2b), full(w3b),
              full(bn1s), full(bn1b), full(bn2s), full(bn2b),
              full(bn3s), full(bn3b), full(bn4s), full(bn4b),
              full(maskl), full(maskr),
              smem_spec,
          ],
          out_specs=(
              pl.BlockSpec((1, TH, W, C4), lambda b, h: (b, h, 0, 0)),
              pl.BlockSpec((1, 1, C4), lambda b, h: (b, 0, 0)),   # resident accumulator
          )),
      compiler_params=pltpu.CompilerParams(
          dimension_semantics=("parallel", "arbitrary"),
          vmem_limit_bytes=VMEM_LIMIT_BYTES),
  )
  y3, pooled = phase1(x, x, x, w1b, w2b, w3b,
                      bn1s, bn1b, bn2s, bn2b, bn3s, bn3b, bn4s, bn4b,
                      maskl, maskr, alphas)

  # ---- Phase 2: SE excitation + scale + residual + PReLU per tile ---------- #
  phase2 = pl.pallas_call(
      _ir_phase2_kernel,
      out_shape=jax.ShapeDtypeStruct((N, H, W, C4), jnp.bfloat16),
      grid_spec=pltpu.PrefetchScalarGridSpec(
          num_scalar_prefetch=0,
          grid=(N, HT),
          in_specs=[
              pl.BlockSpec((1, TH, W, C4), lambda b, h: (b, h, 0, 0)),    # y3
              pl.BlockSpec((1, TH, W, Cin), lambda b, h: (b, h, 0, 0)),   # x (residual)
              pl.BlockSpec((1, 1, C4), lambda b, h: (b, 0, 0)),           # pooled mean
              full(wse1b), full(wse2b),
              smem_spec,
          ],
          out_specs=pl.BlockSpec((1, TH, W, C4), lambda b, h: (b, h, 0, 0))),
      compiler_params=pltpu.CompilerParams(
          dimension_semantics=("parallel", "parallel"),
          vmem_limit_bytes=VMEM_LIMIT_BYTES),
  )
  return phase2(y3, x, pooled, wse1b, wse2b, alphas)


def ir_bottleneck_pallas_nchw(x_nchw, params, tile_h=None):
  """API-parity adapter for the PyTorch NCHW layout.

  Prefer the NHWC entry point: each transpose here is a full extra HBM pass.
  """
  x = jnp.transpose(x_nchw, (0, 2, 3, 1))
  out = ir_bottleneck_pallas(x, params, tile_h=tile_h)
  return jnp.transpose(out, (0, 3, 1, 2))


def ir_bottleneck_reference(x_nhwc, params):
  """Pure-JAX reference (eval-mode BN, same bf16-input / f32-accum / bf16-out policy)."""
  (w1, w2, w3, wse1, wse2,
   bn1s, bn1b, bn2s, bn2b, bn3s, bn3b, bn4s, bn4b, alphas) = params
  x = x_nhwc.astype(jnp.bfloat16).astype(jnp.float32)
  prelu = lambda v, a: jnp.where(v >= 0.0, v, a * v)
  bf = lambda t: t.astype(jnp.bfloat16)

  y = x * bn1s[0] + bn1b[0]
  y = jnp.einsum('nhwc,cp->nhwp', bf(y), bf(w1),
                 preferred_element_type=jnp.float32)
  y = prelu(y * bn2s[0] + bn2b[0], alphas[0])
  y = lax.conv_general_dilated(
      bf(y), bf(w2), window_strides=(1, 1), padding=((1, 1), (1, 1)),
      dimension_numbers=('NHWC', 'HWIO', 'NHWC'),
      preferred_element_type=jnp.float32)
  y = prelu(y * bn3s[0] + bn3b[0], alphas[1])
  y = jnp.einsum('nhwp,pc->nhwc', bf(y), bf(w3),
                 preferred_element_type=jnp.float32)
  y = y * bn4s[0] + bn4b[0]

  pooled = jnp.mean(y, axis=(1, 2))                               # (N, C4)
  s = jnp.einsum('nc,cr->nr', bf(pooled), bf(wse1),
                 preferred_element_type=jnp.float32)
  s = prelu(s, alphas[2])
  s = jnp.einsum('nr,rc->nc', bf(s), bf(wse2),
                 preferred_element_type=jnp.float32)
  s = jax.nn.sigmoid(s)
  y = prelu(y * s[:, None, None, :] + x, alphas[3])
  return y.astype(jnp.bfloat16)


if __name__ == "__main__":
  # Small config consistent with the module: planes=4, expansion=4, stride=1,
  # downsample=None -> identity residual -> inplanes = planes*4 = 16.
  N, H, W = 2, 16, 16
  planes = 4
  expansion = 4
  inplanes = planes * expansion
  C4 = planes * expansion
  Cr = max(C4 // 16, 1)   # SEBlock reduction = 16

  key = jax.random.PRNGKey(0)
  ks = jax.random.split(key, 24)

  def nrm(k, shape, scale=0.2):
    return (scale * jax.random.normal(k, shape)).astype(jnp.float32)

  def bn_fold(kg, kb, km, kv, c, eps=2e-5):
    gamma = 1.0 + 0.1 * jax.random.normal(kg, (c,))
    beta = 0.1 * jax.random.normal(kb, (c,))
    mean = 0.1 * jax.random.normal(km, (c,))
    var = jax.random.uniform(kv, (c,), minval=0.5, maxval=1.5)
    scale = gamma / jnp.sqrt(var + eps)
    bias = beta - mean * scale
    return (scale.reshape(1, c).astype(jnp.float32),
            bias.reshape(1, c).astype(jnp.float32))

  # Conv weights in matmul-friendly layouts: (Cin, Cout) / HWIO.
  w1 = nrm(ks[0], (inplanes, planes))          # conv1x1  inplanes -> planes
  w2 = nrm(ks[1], (3, 3, planes, planes))      # conv3x3  planes   -> planes (HWIO)
  w3 = nrm(ks[2], (planes, C4))                # conv1x1  planes   -> planes*4
  wse1 = nrm(ks[3], (C4, Cr))                  # SE fc1   C4 -> C4//16
  wse2 = nrm(ks[4], (Cr, C4))                  # SE fc2   C4//16 -> C4

  bn1s, bn1b = bn_fold(ks[5], ks[6], ks[7], ks[8], inplanes)
  bn2s, bn2b = bn_fold(ks[9], ks[10], ks[11], ks[12], planes)
  bn3s, bn3b = bn_fold(ks[13], ks[14], ks[15], ks[16], planes)
  bn4s, bn4b = bn_fold(ks[17], ks[18], ks[19], ks[20], C4)

  # PReLU slopes: nn.PReLU() default init = 0.25 (one scalar each, 4 instances).
  alphas = jnp.full((4,), 0.25, dtype=jnp.float32)

  params = (w1, w2, w3, wse1, wse2,
            bn1s, bn1b, bn2s, bn2b, bn3s, bn3b, bn4s, bn4b, alphas)

  # NHWC bf16 input (no boundary transposes / f32 casts around the kernel).
  x = jax.random.normal(ks[21], (N, H, W, inplanes),
                        dtype=jnp.float32).astype(jnp.bfloat16)

  ref = jax.block_until_ready(ir_bottleneck_reference(x, params)).astype(jnp.float32)

  # tile_h=8 exercises the multi-tile path (halo rows + pooled accumulation);
  # tile_h=16 exercises the single-tile path.
  for th in (8, 16):
    out = jax.block_until_ready(
        ir_bottleneck_pallas(x, params, tile_h=th)).astype(jnp.float32)
    assert out.shape == (N, H, W, C4), out.shape
    max_err = float(jnp.max(jnp.abs(out - ref)))
    if not bool(jnp.allclose(out, ref, atol=2e-2, rtol=2e-2)):
      raise AssertionError(
          f"Pallas kernel mismatch vs reference (tile_h={th}), max abs err = {max_err}")
  print("KERNEL_OK")
</pallas_src>

<mosaic_0001>
module attributes {stable_mosaic.version = 11 : i64} {
  func.func @_ir_phase1_kernel(%arg0: i32, %arg1: i32, %arg2: memref<1x8x16x16xbf16, #tpu.memory_space<vmem>>, %arg3: memref<1x1x16x16xbf16, #tpu.memory_space<vmem>>, %arg4: memref<1x1x16x16xbf16, #tpu.memory_space<vmem>>, %arg5: memref<16x4xbf16, #tpu.memory_space<vmem>>, %arg6: memref<9x4x4xbf16, #tpu.memory_space<vmem>>, %arg7: memref<4x16xbf16, #tpu.memory_space<vmem>>, %arg8: memref<1x16xf32, #tpu.memory_space<vmem>>, %arg9: memref<1x16xf32, #tpu.memory_space<vmem>>, %arg10: memref<1x4xf32, #tpu.memory_space<vmem>>, %arg11: memref<1x4xf32, #tpu.memory_space<vmem>>, %arg12: memref<1x4xf32, #tpu.memory_space<vmem>>, %arg13: memref<1x4xf32, #tpu.memory_space<vmem>>, %arg14: memref<1x16xf32, #tpu.memory_space<vmem>>, %arg15: memref<1x16xf32, #tpu.memory_space<vmem>>, %arg16: memref<160x1xf32, #tpu.memory_space<vmem>>, %arg17: memref<160x1xf32, #tpu.memory_space<vmem>>, %arg18: memref<4xf32, #tpu.memory_space<smem>>, %arg19: memref<1x8x16x16xf32, #tpu.memory_space<vmem>>, %arg20: memref<1x1x16xf32, #tpu.memory_space<vmem>>) attributes {dimension_semantics = [#tpu.dimension_semantics<parallel>, #tpu.dimension_semantics<arbitrary>], iteration_bounds = array<i64: 2, 2>, scalar_prefetch = 0 : i64, scratch_operands = 0 : i64, tpu.core_type = #tpu.core_type<tc>, window_params = [{transform_indices = @transform_0, window_bounds = array<i64: 1, 8, 16, 16>}, {transform_indices = @transform_1, window_bounds = array<i64: 1, 1, 16, 16>}, {transform_indices = @transform_2, window_bounds = array<i64: 1, 1, 16, 16>}, {pipeline_mode = #tpu.pipeline_mode<synchronous>, transform_indices = @transform_3, window_bounds = array<i64: 16, 4>}, {pipeline_mode = #tpu.pipeline_mode<synchronous>, transform_indices = @transform_4, window_bounds = array<i64: 9, 4, 4>}, {pipeline_mode = #tpu.pipeline_mode<synchronous>, transform_indices = @transform_5, window_bounds = array<i64: 4, 16>}, {pipeline_mode = #tpu.pipeline_mode<synchronous>, transform_indices = @transform_6, window_bounds = array<i64: 1, 16>}, {pipeline_mode = #tpu.pipeline_mode<synchronous>, transform_indices = @transform_7, window_bounds = array<i64: 1, 16>}, {pipeline_mode = #tpu.pipeline_mode<synchronous>, transform_indices = @transform_8, window_bounds = array<i64: 1, 4>}, {pipeline_mode = #tpu.pipeline_mode<synchronous>, transform_indices = @transform_9, window_bounds = array<i64: 1, 4>}, {pipeline_mode = #tpu.pipeline_mode<synchronous>, transform_indices = @transform_10, window_bounds = array<i64: 1, 4>}, {pipeline_mode = #tpu.pipeline_mode<synchronous>, transform_indices = @transform_11, window_bounds = array<i64: 1, 4>}, {pipeline_mode = #tpu.pipeline_mode<synchronous>, transform_indices = @transform_12, window_bounds = array<i64: 1, 16>}, {pipeline_mode = #tpu.pipeline_mode<synchronous>, transform_indices = @transform_13, window_bounds = array<i64: 1, 16>}, {pipeline_mode = #tpu.pipeline_mode<synchronous>, transform_indices = @transform_14, window_bounds = array<i64: 160, 1>}, {pipeline_mode = #tpu.pipeline_mode<synchronous>, transform_indices = @transform_15, window_bounds = array<i64: 160, 1>}, {transform_indices = @transform_16, window_bounds = array<i64: 4>}, {transform_indices = @transform_17, window_bounds = array<i64: 1, 8, 16, 16>}, {transform_indices = @transform_18, window_bounds = array<i64: 1, 1, 16>}]} {
    %c0 = arith.constant 0 : index
    %0 = memref.load %arg18[%c0] : memref<4xf32, #tpu.memory_space<smem>>
    %c1 = arith.constant 1 : index
    %1 = memref.load %arg18[%c1] : memref<4xf32, #tpu.memory_space<smem>>
    %c0_0 = arith.constant 0 : index
    %c0_1 = arith.constant 0 : index
    %2 = vector.load %arg8[%c0_0, %c0_1] : memref<1x16xf32, #tpu.memory_space<vmem>>, vector<1x16xf32>
    %c0_2 = arith.constant 0 : index
    %c0_3 = arith.constant 0 : index
    %3 = vector.load %arg9[%c0_2, %c0_3] : memref<1x16xf32, #tpu.memory_space<vmem>>, vector<1x16xf32>
    %c0_4 = arith.constant 0 : index
    %c0_5 = arith.constant 0 : index
    %4 = vector.load %arg10[%c0_4, %c0_5] : memref<1x4xf32, #tpu.memory_space<vmem>>, vector<1x4xf32>
    %c0_6 = arith.constant 0 : index
    %c0_7 = arith.constant 0 : index
    %5 = vector.load %arg11[%c0_6, %c0_7] : memref<1x4xf32, #tpu.memory_space<vmem>>, vector<1x4xf32>
    %c0_8 = arith.constant 0 : index
    %c0_9 = arith.constant 0 : index
    %6 = vector.load %arg5[%c0_8, %c0_9] : memref<16x4xbf16, #tpu.memory_space<vmem>>, vector<16x4xbf16>
    %c0_10 = arith.constant 0 : index
    %c0_11 = arith.constant 0 : index
    %c0_12 = arith.constant 0 : index
    %c0_13 = arith.constant 0 : index
    %7 = vector.load %arg2[%c0_10, %c0_11, %c0_12, %c0_13] : memref<1x8x16x16xbf16, #tpu.memory_space<vmem>>, vector<1x8x16x16xbf16>
    %8 = vector.shape_cast %7 : vector<1x8x16x16xbf16> to vector<128x16xbf16>
    %9 = arith.extf %8 : vector<128x16xbf16> to vector<128x16xf32>
    %10 = vector.broadcast %2 : vector<1x16xf32> to vector<128x16xf32>
    %11 = arith.mulf %9, %10 : vector<128x16xf32>
    %12 = vector.broadcast %3 : vector<1x16xf32> to vector<128x16xf32>
    %13 = arith.addf %11, %12 : vector<128x16xf32>
    %14 = arith.truncf %13 : vector<128x16xf32> to vector<128x16xbf16>
    %cst = arith.constant dense<0.000000e+00> : vector<128x4xf32>
    %15 = tpu.matmul %14, %6, %cst {dimension_numbers = #tpu.dot_dimension_numbers<[1], [0], [0], [1], [0, 0, 1, 1], [], []>} : vector<128x16xbf16>, vector<16x4xbf16>, vector<128x4xf32> -> vector<128x4xf32>
    %16 = vector.broadcast %4 : vector<1x4xf32> to vector<128x4xf32>
    %17 = arith.mulf %15, %16 : vector<128x4xf32>
    %18 = vector.broadcast %5 : vector<1x4xf32> to vector<128x4xf32>
    %19 = arith.addf %17, %18 : vector<128x4xf32>
    %cst_14 = arith.constant 0.000000e+00 : f32
    %20 = vector.broadcast %cst_14 : f32 to vector<128x4xf32>
    %21 = arith.cmpf oge, %19, %20 : vector<128x4xf32>
    %22 = vector.broadcast %0 : f32 to vector<128x4xf32>
    %23 = arith.mulf %22, %19 : vector<128x4xf32>
    %24 = arith.select %21, %19, %23 : vector<128x4xi1>, vector<128x4xf32>
    %c0_15 = arith.constant 0 : index
    %c0_16 = arith.constant 0 : index
    %c0_17 = arith.constant 0 : index
    %c0_18 = arith.constant 0 : index
    %25 = vector.load %arg3[%c0_15, %c0_16, %c0_17, %c0_18] : memref<1x1x16x16xbf16, #tpu.memory_space<vmem>>, vector<1x1x16x16xbf16>
    %26 = vector.shape_cast %25 : vector<1x1x16x16xbf16> to vector<16x16xbf16>
    %27 = arith.extf %26 : vector<16x16xbf16> to vector<16x16xf32>
    %28 = vector.broadcast %2 : vector<1x16xf32> to vector<16x16xf32>
    %29 = arith.mulf %27, %28 : vector<16x16xf32>
    %30 = vector.broadcast %3 : vector<1x16xf32> to vector<16x16xf32>
    %31 = arith.addf %29, %30 : vector<16x16xf32>
    %32 = arith.truncf %31 : vector<16x16xf32> to vector<16x16xbf16>
    %cst_19 = arith.constant dense<0.000000e+00> : vector<16x4xf32>
    %33 = tpu.matmul %32, %6, %cst_19 {dimension_numbers = #tpu.dot_dimension_numbers<[1], [0], [0], [1], [0, 0, 1, 1], [], []>} : vector<16x16xbf16>, vector<16x4xbf16>, vector<16x4xf32> -> vector<16x4xf32>
    %34 = vector.broadcast %4 : vector<1x4xf32> to vector<16x4xf32>
    %35 = arith.mulf %33, %34 : vector<16x4xf32>
    %36 = vector.broadcast %5 : vector<1x4xf32> to vector<16x4xf32>
    %37 = arith.addf %35, %36 : vector<16x4xf32>
    %cst_20 = arith.constant 0.000000e+00 : f32
    %38 = vector.broadcast %cst_20 : f32 to vector<16x4xf32>
    %39 = arith.cmpf oge, %37, %38 : vector<16x4xf32>
    %40 = vector.broadcast %0 : f32 to vector<16x4xf32>
    %41 = arith.mulf %40, %37 : vector<16x4xf32>
    %42 = arith.select %39, %37, %41 : vector<16x4xi1>, vector<16x4xf32>
    %c0_21 = arith.constant 0 : index
    %c0_22 = arith.constant 0 : index
    %c0_23 = arith.constant 0 : index
    %c0_24 = arith.constant 0 : index
    %43 = vector.load %arg4[%c0_21, %c0_22, %c0_23, %c0_24] : memref<1x1x16x16xbf16, #tpu.memory_space<vmem>>, vector<1x1x16x16xbf16>
    %44 = vector.shape_cast %43 : vector<1x1x16x16xbf16> to vector<16x16xbf16>
    %45 = arith.extf %44 : vector<16x16xbf16> to vector<16x16xf32>
    %46 = vector.broadcast %2 : vector<1x16xf32> to vector<16x16xf32>
    %47 = arith.mulf %45, %46 : vector<16x16xf32>
    %48 = vector.broadcast %3 : vector<1x16xf32> to vector<16x16xf32>
    %49 = arith.addf %47, %48 : vector<16x16xf32>
    %50 = arith.truncf %49 : vector<16x16xf32> to vector<16x16xbf16>
    %cst_25 = arith.constant dense<0.000000e+00> : vector<16x4xf32>
    %51 = tpu.matmul %50, %6, %cst_25 {dimension_numbers = #tpu.dot_dimension_numbers<[1], [0], [0], [1], [0, 0, 1, 1], [], []>} : vector<16x16xbf16>, vector<16x4xbf16>, vector<16x4xf32> -> vector<16x4xf32>
    %52 = vector.broadcast %4 : vector<1x4xf32> to vector<16x4xf32>
    %53 = arith.mulf %51, %52 : vector<16x4xf32>
    %54 = vector.broadcast %5 : vector<1x4xf32> to vector<16x4xf32>
    %55 = arith.addf %53, %54 : vector<16x4xf32>
    %cst_26 = arith.constant 0.000000e+00 : f32
    %56 = vector.broadcast %cst_26 : f32 to vector<16x4xf32>
    %57 = arith.cmpf oge, %55, %56 : vector<16x4xf32>
    %58 = vector.broadcast %0 : f32 to vector<16x4xf32>
    %59 = arith.mulf %58, %55 : vector<16x4xf32>
    %60 = arith.select %57, %55, %59 : vector<16x4xi1>, vector<16x4xf32>
    %c0_i32 = arith.constant 0 : i32
    %61 = arith.cmpi sgt, %arg1, %c0_i32 : i32
    %62 = arith.extui %61 : i1 to i32
    %63 = arith.sitofp %62 : i32 to f32
    %64 = vector.broadcast %63 : f32 to vector<16x4xf32>
    %65 = arith.mulf %42, %64 : vector<16x4xf32>
    %c1_i32 = arith.constant 1 : i32
    %66 = arith.cmpi slt, %arg1, %c1_i32 : i32
    %67 = arith.extui %66 : i1 to i32
    %68 = arith.sitofp %67 : i32 to f32
    %69 = vector.broadcast %68 : f32 to vector<16x4xf32>
    %70 = arith.mulf %60, %69 : vector<16x4xf32>
    %71 = tpu.concatenate %65, %24, %70 in 0 : vector<16x4xf32>, vector<128x4xf32>, vector<16x4xf32> -> vector<160x4xf32>
    %c0_27 = arith.constant 0 : index
    %c0_28 = arith.constant 0 : index
    %72 = vector.load %arg16[%c0_27, %c0_28] : memref<160x1xf32, #tpu.memory_space<vmem>>, vector<160x1xf32>
    %c1_i32_29 = arith.constant 1 : i32
    %73 = tpu.dynamic_rotate %71 by %c1_i32_29 dim 0 : vector<160x4xf32>, i32 -> vector<160x4xf32>
    %74 = vector.broadcast %72 : vector<160x1xf32> to vector<160x4xf32>
    %75 = arith.mulf %74, %73 : vector<160x4xf32>
    %c0_30 = arith.constant 0 : index
    %c0_31 = arith.constant 0 : index
    %76 = vector.load %arg17[%c0_30, %c0_31] : memref<160x1xf32, #tpu.memory_space<vmem>>, vector<160x1xf32>
    %c159_i32 = arith.constant 159 : i32
    %77 = tpu.dynamic_rotate %71 by %c159_i32 dim 0 : vector<160x4xf32>, i32 -> vector<160x4xf32>
    %78 = vector.broadcast %76 : vector<160x1xf32> to vector<160x4xf32>
    %79 = arith.mulf %78, %77 : vector<160x4xf32>
    %c0_32 = arith.constant 0 : index
    %c0_33 = arith.constant 0 : index
    %c0_34 = arith.constant 0 : index
    %80 = vector.load %arg6[%c0_32, %c0_33, %c0_34] : memref<9x4x4xbf16, #tpu.memory_space<vmem>>, vector<9x4x4xbf16>
    %cst_35 = arith.constant 0.000000e+00 : f32
    %81 = vector.broadcast %cst_35 : f32 to vector<128x4xf32>
    %82 = vector.extract_strided_slice %75 {offsets = [0, 0], sizes = [128, 4], strides = [1, 1]} : vector<160x4xf32> to vector<128x4xf32>
    %83 = arith.truncf %82 : vector<128x4xf32> to vector<128x4xbf16>
    %84 = vector.extract_strided_slice %80 {offsets = [0, 0, 0], sizes = [1, 4, 4], strides = [1, 1, 1]} : vector<9x4x4xbf16> to vector<1x4x4xbf16>
    %85 = vector.shape_cast %84 : vector<1x4x4xbf16> to vector<4x4xbf16>
    %cst_36 = arith.constant dense<0.000000e+00> : vector<128x4xf32>
    %86 = tpu.matmul %83, %85, %cst_36 {dimension_numbers = #tpu.dot_dimension_numbers<[1], [0], [0], [1], [0, 0, 1, 1], [], []>} : vector<128x4xbf16>, vector<4x4xbf16>, vector<128x4xf32> -> vector<128x4xf32>
    %87 = arith.addf %81, %86 : vector<128x4xf32>
    %88 = vector.extract_strided_slice %71 {offsets = [0, 0], sizes = [128, 4], strides = [1, 1]} : vector<160x4xf32> to vector<128x4xf32>
    %89 = arith.truncf %88 : vector<128x4xf32> to vector<128x4xbf16>
    %90 = vector.extract_strided_slice %80 {offsets = [1, 0, 0], sizes = [1, 4, 4], strides = [1, 1, 1]} : vector<9x4x4xbf16> to vector<1x4x4xbf16>
    %91 = vector.shape_cast %90 : vector<1x4x4xbf16> to vector<4x4xbf16>
    %cst_37 = arith.constant dense<0.000000e+00> : vector<128x4xf32>
    %92 = tpu.matmul %89, %91, %cst_37 {dimension_numbers = #tpu.dot_dimension_numbers<[1], [0], [0], [1], [0, 0, 1, 1], [], []>} : vector<128x4xbf16>, vector<4x4xbf16>, vector<128x4xf32> -> vector<128x4xf32>
    %93 = arith.addf %87, %92 : vector<128x4xf32>
    %94 = vector.extract_strided_slice %79 {offsets = [0, 0], sizes = [128, 4], strides = [1, 1]} : vector<160x4xf32> to vector<128x4xf32>
    %95 = arith.truncf %94 : vector<128x4xf32> to vector<128x4xbf16>
    %96 = vector.extract_strided_slice %80 {offsets = [2, 0, 0], sizes = [1, 4, 4], strides = [1, 1, 1]} : vector<9x4x4xbf16> to vector<1x4x4xbf16>
    %97 = vector.shape_cast %96 : vector<1x4x4xbf16> to vector<4x4xbf16>
    %cst_38 = arith.constant dense<0.000000e+00> : vector<128x4xf32>
    %98 = tpu.matmul %95, %97, %cst_38 {dimension_numbers = #tpu.dot_dimension_numbers<[1], [0], [0], [1], [0, 0, 1, 1], [], []>} : vector<128x4xbf16>, vector<4x4xbf16>, vector<128x4xf32> -> vector<128x4xf32>
    %99 = arith.addf %93, %98 : vector<128x4xf32>
    %100 = vector.extract_strided_slice %75 {offsets = [16, 0], sizes = [128, 4], strides = [1, 1]} : vector<160x4xf32> to vector<128x4xf32>
    %101 = arith.truncf %100 : vector<128x4xf32> to vector<128x4xbf16>
    %102 = vector.extract_strided_slice %80 {offsets = [3, 0, 0], sizes = [1, 4, 4], strides = [1, 1, 1]} : vector<9x4x4xbf16> to vector<1x4x4xbf16>
    %103 = vector.shape_cast %102 : vector<1x4x4xbf16> to vector<4x4xbf16>
    %cst_39 = arith.constant dense<0.000000e+00> : vector<128x4xf32>
    %104 = tpu.matmul %101, %103, %cst_39 {dimension_numbers = #tpu.dot_dimension_numbers<[1], [0], [0], [1], [0, 0, 1, 1], [], []>} : vector<128x4xbf16>, vector<4x4xbf16>, vector<128x4xf32> -> vector<128x4xf32>
    %105 = arith.addf %99, %104 : vector<128x4xf32>
    %106 = vector.extract_strided_slice %71 {offsets = [16, 0], sizes = [128, 4], strides = [1, 1]} : vector<160x4xf32> to vector<128x4xf32>
    %107 = arith.truncf %106 : vector<128x4xf32> to vector<128x4xbf16>
    %108 = vector.extract_strided_slice %80 {offsets = [4, 0, 0], sizes = [1, 4, 4], strides = [1, 1, 1]} : vector<9x4x4xbf16> to vector<1x4x4xbf16>
    %109 = vector.shape_cast %108 : vector<1x4x4xbf16> to vector<4x4xbf16>
    %cst_40 = arith.constant dense<0.000000e+00> : vector<128x4xf32>
    %110 = tpu.matmul %107, %109, %cst_40 {dimension_numbers = #tpu.dot_dimension_numbers<[1], [0], [0], [1], [0, 0, 1, 1], [], []>} : vector<128x4xbf16>, vector<4x4xbf16>, vector<128x4xf32> -> vector<128x4xf32>
    %111 = arith.addf %105, %110 : vector<128x4xf32>
    %112 = vector.extract_strided_slice %79 {offsets = [16, 0], sizes = [128, 4], strides = [1, 1]} : vector<160x4xf32> to vector<128x4xf32>
    %113 = arith.truncf %112 : vector<128x4xf32> to vector<128x4xbf16>
    %114 = vector.extract_strided_slice %80 {offsets = [5, 0, 0], sizes = [1, 4, 4], strides = [1, 1, 1]} : vector<9x4x4xbf16> to vector<1x4x4xbf16>
    %115 = vector.shape_cast %114 : vector<1x4x4xbf16> to vector<4x4xbf16>
    %cst_41 = arith.constant dense<0.000000e+00> : vector<128x4xf32>
    %116 = tpu.matmul %113, %115, %cst_41 {dimension_numbers = #tpu.dot_dimension_numbers<[1], [0], [0], [1], [0, 0, 1, 1], [], []>} : vector<128x4xbf16>, vector<4x4xbf16>, vector<128x4xf32> -> vector<128x4xf32>
    %117 = arith.addf %111, %116 : vector<128x4xf32>
    %118 = vector.extract_strided_slice %75 {offsets = [32, 0], sizes = [128, 4], strides = [1, 1]} : vector<160x4xf32> to vector<128x4xf32>
    %119 = arith.truncf %118 : vector<128x4xf32> to vector<128x4xbf16>
    %120 = vector.extract_strided_slice %80 {offsets = [6, 0, 0], sizes = [1, 4, 4], strides = [1, 1, 1]} : vector<9x4x4xbf16> to vector<1x4x4xbf16>
    %121 = vector.shape_cast %120 : vector<1x4x4xbf16> to vector<4x4xbf16>
    %cst_42 = arith.constant dense<0.000000e+00> : vector<128x4xf32>
    %122 = tpu.matmul %119, %121, %cst_42 {dimension_numbers = #tpu.dot_dimension_numbers<[1], [0], [0], [1], [0, 0, 1, 1], [], []>} : vector<128x4xbf16>, vector<4x4xbf16>, vector<128x4xf32> -> vector<128x4xf32>
    %123 = arith.addf %117, %122 : vector<128x4xf32>
    %124 = vector.extract_strided_slice %71 {offsets = [32, 0], sizes = [128, 4], strides = [1, 1]} : vector<160x4xf32> to vector<128x4xf32>
    %125 = arith.truncf %124 : vector<128x4xf32> to vector<128x4xbf16>
    %126 = vector.extract_strided_slice %80 {offsets = [7, 0, 0], sizes = [1, 4, 4], strides = [1, 1, 1]} : vector<9x4x4xbf16> to vector<1x4x4xbf16>
    %127 = vector.shape_cast %126 : vector<1x4x4xbf16> to vector<4x4xbf16>
    %cst_43 = arith.constant dense<0.000000e+00> : vector<128x4xf32>
    %128 = tpu.matmul %125, %127, %cst_43 {dimension_numbers = #tpu.dot_dimension_numbers<[1], [0], [0], [1], [0, 0, 1, 1], [], []>} : vector<128x4xbf16>, vector<4x4xbf16>, vector<128x4xf32> -> vector<128x4xf32>
    %129 = arith.addf %123, %128 : vector<128x4xf32>
    %130 = vector.extract_strided_slice %79 {offsets = [32, 0], sizes = [128, 4], strides = [1, 1]} : vector<160x4xf32> to vector<128x4xf32>
    %131 = arith.truncf %130 : vector<128x4xf32> to vector<128x4xbf16>
    %132 = vector.extract_strided_slice %80 {offsets = [8, 0, 0], sizes = [1, 4, 4], strides = [1, 1, 1]} : vector<9x4x4xbf16> to vector<1x4x4xbf16>
    %133 = vector.shape_cast %132 : vector<1x4x4xbf16> to vector<4x4xbf16>
    %cst_44 = arith.constant dense<0.000000e+00> : vector<128x4xf32>
    %134 = tpu.matmul %131, %133, %cst_44 {dimension_numbers = #tpu.dot_dimension_numbers<[1], [0], [0], [1], [0, 0, 1, 1], [], []>} : vector<128x4xbf16>, vector<4x4xbf16>, vector<128x4xf32> -> vector<128x4xf32>
    %135 = arith.addf %129, %134 : vector<128x4xf32>
    %c0_45 = arith.constant 0 : index
    %c0_46 = arith.constant 0 : index
    %136 = vector.load %arg12[%c0_45, %c0_46] : memref<1x4xf32, #tpu.memory_space<vmem>>, vector<1x4xf32>
    %137 = vector.broadcast %136 : vector<1x4xf32> to vector<128x4xf32>
    %138 = arith.mulf %135, %137 : vector<128x4xf32>
    %c0_47 = arith.constant 0 : index
    %c0_48 = arith.constant 0 : index
    %139 = vector.load %arg13[%c0_47, %c0_48] : memref<1x4xf32, #tpu.memory_space<vmem>>, vector<1x4xf32>
    %140 = vector.broadcast %139 : vector<1x4xf32> to vector<128x4xf32>
    %141 = arith.addf %138, %140 : vector<128x4xf32>
    %cst_49 = arith.constant 0.000000e+00 : f32
    %142 = vector.broadcast %cst_49 : f32 to vector<128x4xf32>
    %143 = arith.cmpf oge, %141, %142 : vector<128x4xf32>
    %144 = vector.broadcast %1 : f32 to vector<128x4xf32>
    %145 = arith.mulf %144, %141 : vector<128x4xf32>
    %146 = arith.select %143, %141, %145 : vector<128x4xi1>, vector<128x4xf32>
    %147 = arith.truncf %146 : vector<128x4xf32> to vector<128x4xbf16>
    %c0_50 = arith.constant 0 : index
    %c0_51 = arith.constant 0 : index
    %148 = vector.load %arg7[%c0_50, %c0_51] : memref<4x16xbf16, #tpu.memory_space<vmem>>, vector<4x16xbf16>
    %cst_52 = arith.constant dense<0.000000e+00> : vector<128x16xf32>
    %149 = tpu.matmul %147, %148, %cst_52 {dimension_numbers = #tpu.dot_dimension_numbers<[1], [0], [0], [1], [0, 0, 1, 1], [], []>} : vector<128x4xbf16>, vector<4x16xbf16>, vector<128x16xf32> -> vector<128x16xf32>
    %c0_53 = arith.constant 0 : index
    %c0_54 = arith.constant 0 : index
    %150 = vector.load %arg14[%c0_53, %c0_54] : memref<1x16xf32, #tpu.memory_space<vmem>>, vector<1x16xf32>
    %151 = vector.broadcast %150 : vector<1x16xf32> to vector<128x16xf32>
    %152 = arith.mulf %149, %151 : vector<128x16xf32>
    %c0_55 = arith.constant 0 : index
    %c0_56 = arith.constant 0 : index
    %153 = vector.load %arg15[%c0_55, %c0_56] : memref<1x16xf32, #tpu.memory_space<vmem>>, vector<1x16xf32>
    %154 = vector.broadcast %153 : vector<1x16xf32> to vector<128x16xf32>
    %155 = arith.addf %152, %154 : vector<128x16xf32>
    %156 = vector.shape_cast %155 : vector<128x16xf32> to vector<1x8x16x16xf32>
    %c0_57 = arith.constant 0 : index
    %c0_58 = arith.constant 0 : index
    %c0_59 = arith.constant 0 : index
    %c0_60 = arith.constant 0 : index
    %157 = vector.load %arg19[%c0_57, %c0_58, %c0_59, %c0_60] : memref<1x8x16x16xf32, #tpu.memory_space<vmem>>, vector<1x8x16x16xf32>
    tpu.vector_store %arg19[%c0_57, %c0_58, %c0_59, %c0_60], %156 {strides = array<i32>} : memref<1x8x16x16xf32, #tpu.memory_space<vmem>>, vector<1x8x16x16xf32>,
    %c0_i32_61 = arith.constant 0 : i32
    %158 = arith.cmpi eq, %arg1, %c0_i32_61 : i32
    %159 = arith.extui %158 : i1 to i32
    %c0_i32_62 = arith.constant 0 : i32
    %160 = arith.cmpi ne, %159, %c0_i32_62 : i32
    scf.if %160 {
      %cst_71 = arith.constant 0.000000e+00 : f32
      %168 = vector.broadcast %cst_71 : f32 to vector<1x1x16xf32>
      %c0_72 = arith.constant 0 : index
      %c0_73 = arith.constant 0 : index
      %c0_74 = arith.constant 0 : index
      %169 = vector.load %arg20[%c0_72, %c0_73, %c0_74] : memref<1x1x16xf32, #tpu.memory_space<vmem>>, vector<1x1x16xf32>
      tpu.vector_store %arg20[%c0_72, %c0_73, %c0_74], %168 {strides = array<i32>} : memref<1x1x16xf32, #tpu.memory_space<vmem>>, vector<1x1x16xf32>,
    } else {
    }
    %c0_63 = arith.constant 0 : index
    %c0_64 = arith.constant 0 : index
    %c0_65 = arith.constant 0 : index
    %161 = vector.load %arg20[%c0_63, %c0_64, %c0_65] : memref<1x1x16xf32, #tpu.memory_space<vmem>>, vector<1x1x16xf32>
    %cst_66 = arith.constant dense<0.000000e+00> : vector<16xf32>
    %162 = vector.multi_reduction <add>, %155, %cst_66 [0] : vector<128x16xf32> to vector<16xf32>
    %cst_67 = arith.constant 3.906250e-03 : f32
    %163 = vector.broadcast %cst_67 : f32 to vector<16xf32>
    %164 = arith.mulf %162, %163 : vector<16xf32>
    %165 = vector.shape_cast %164 : vector<16xf32> to vector<1x1x16xf32>
    %166 = arith.addf %161, %165 : vector<1x1x16xf32>
    %c0_68 = arith.constant 0 : index
    %c0_69 = arith.constant 0 : index
    %c0_70 = arith.constant 0 : index
    %167 = vector.load %arg20[%c0_68, %c0_69, %c0_70] : memref<1x1x16xf32, #tpu.memory_space<vmem>>, vector<1x1x16xf32>
    tpu.vector_store %arg20[%c0_68, %c0_69, %c0_70], %166 {strides = array<i32>} : memref<1x1x16xf32, #tpu.memory_space<vmem>>, vector<1x1x16xf32>,
    return
  }
  func.func @transform_0(%arg0: i32, %arg1: i32) -> (i32, i32, i32, i32) {
    %c0_i32 = arith.constant 0 : i32
    %c0_i32_0 = arith.constant 0 : i32
    %c0_i32_1 = arith.constant 0 : i32
    return %arg0, %arg1, %c0_i32, %c0_i32_0 : i32, i32, i32, i32
  }
  func.func @transform_1(%arg0: i32, %arg1: i32) -> (i32, i32, i32, i32) {
    %c8_i32 = arith.constant 8 : i32
    %0 = arith.muli %arg1, %c8_i32 : i32
    %c1_i32 = arith.constant 1 : i32
    %1 = arith.subi %0, %c1_i32 : i32
    %c0_i32 = arith.constant 0 : i32
    %2 = arith.maxsi %1, %c0_i32 : i32
    %c0_i32_0 = arith.constant 0 : i32
    %c0_i32_1 = arith.constant 0 : i32
    %c0_i32_2 = arith.constant 0 : i32
    return %arg0, %2, %c0_i32_0, %c0_i32_1 : i32, i32, i32, i32
  }
  func.func @transform_2(%arg0: i32, %arg1: i32) -> (i32, i32, i32, i32) {
    %c1_i32 = arith.constant 1 : i32
    %0 = arith.addi %arg1, %c1_i32 : i32
    %c8_i32 = arith.constant 8 : i32
    %1 = arith.muli %0, %c8_i32 : i32
    %c15_i32 = arith.constant 15 : i32
    %2 = arith.minsi %1, %c15_i32 : i32
    %c0_i32 = arith.constant 0 : i32
    %c0_i32_0 = arith.constant 0 : i32
    %c0_i32_1 = arith.constant 0 : i32
    return %arg0, %2, %c0_i32, %c0_i32_0 : i32, i32, i32, i32
  }
  func.func @transform_3(%arg0: i32, %arg1: i32) -> (i32, i32) {
    %c0_i32 = arith.constant 0 : i32
    %c0_i32_0 = arith.constant 0 : i32
    %c0_i32_1 = arith.constant 0 : i32
    return %c0_i32, %c0_i32_0 : i32, i32
  }
  func.func @transform_4(%arg0: i32, %arg1: i32) -> (i32, i32, i32) {
    %c0_i32 = arith.constant 0 : i32
    %c0_i32_0 = arith.constant 0 : i32
    %c0_i32_1 = arith.constant 0 : i32
    %c0_i32_2 = arith.constant 0 : i32
    return %c0_i32, %c0_i32_0, %c0_i32_1 : i32, i32, i32
  }
  func.func @transform_5(%arg0: i32, %arg1: i32) -> (i32, i32) {
    %c0_i32 = arith.constant 0 : i32
    %c0_i32_0 = arith.constant 0 : i32
    %c0_i32_1 = arith.constant 0 : i32
    return %c0_i32, %c0_i32_0 : i32, i32
  }
  func.func @transform_6(%arg0: i32, %arg1: i32) -> (i32, i32) {
    %c0_i32 = arith.constant 0 : i32
    %c0_i32_0 = arith.constant 0 : i32
    %c0_i32_1 = arith.constant 0 : i32
    return %c0_i32, %c0_i32_0 : i32, i32
  }
  func.func @transform_7(%arg0: i32, %arg1: i32) -> (i32, i32) {
    %c0_i32 = arith.constant 0 : i32
    %c0_i32_0 = arith.constant 0 : i32
    %c0_i32_1 = arith.constant 0 : i32
    return %c0_i32, %c0_i32_0 : i32, i32
  }
  func.func @transform_8(%arg0: i32, %arg1: i32) -> (i32, i32) {
    %c0_i32 = arith.constant 0 : i32
    %c0_i32_0 = arith.constant 0 : i32
    %c0_i32_1 = arith.constant 0 : i32
    return %c0_i32, %c0_i32_0 : i32, i32
  }
  func.func @transform_9(%arg0: i32, %arg1: i32) -> (i32, i32) {
    %c0_i32 = arith.constant 0 : i32
    %c0_i32_0 = arith.constant 0 : i32
    %c0_i32_1 = arith.constant 0 : i32
    return %c0_i32, %c0_i32_0 : i32, i32
  }
  func.func @transform_10(%arg0: i32, %arg1: i32) -> (i32, i32) {
    %c0_i32 = arith.constant 0 : i32
    %c0_i32_0 = arith.constant 0 : i32
    %c0_i32_1 = arith.constant 0 : i32
    return %c0_i32, %c0_i32_0 : i32, i32
  }
  func.func @transform_11(%arg0: i32, %arg1: i32) -> (i32, i32) {
    %c0_i32 = arith.constant 0 : i32
    %c0_i32_0 = arith.constant 0 : i32
    %c0_i32_1 = arith.constant 0 : i32
    return %c0_i32, %c0_i32_0 : i32, i32
  }
  func.func @transform_12(%arg0: i32, %arg1: i32) -> (i32, i32) {
    %c0_i32 = arith.constant 0 : i32
    %c0_i32_0 = arith.constant 0 : i32
    %c0_i32_1 = arith.constant 0 : i32
    return %c0_i32, %c0_i32_0 : i32, i32
  }
  func.func @transform_13(%arg0: i32, %arg1: i32) -> (i32, i32) {
    %c0_i32 = arith.constant 0 : i32
    %c0_i32_0 = arith.constant 0 : i32
    %c0_i32_1 = arith.constant 0 : i32
    return %c0_i32, %c0_i32_0 : i32, i32
  }
  func.func @transform_14(%arg0: i32, %arg1: i32) -> (i32, i32) {
    %c0_i32 = arith.constant 0 : i32
    %c0_i32_0 = arith.constant 0 : i32
    %c0_i32_1 = arith.constant 0 : i32
    return %c0_i32, %c0_i32_0 : i32, i32
  }
  func.func @transform_15(%arg0: i32, %arg1: i32) -> (i32, i32) {
    %c0_i32 = arith.constant 0 : i32
    %c0_i32_0 = arith.constant 0 : i32
    %c0_i32_1 = arith.constant 0 : i32
    return %c0_i32, %c0_i32_0 : i32, i32
  }
  func.func @transform_16(%arg0: i32, %arg1: i32) -> i32 {
    %c0_i32 = arith.constant 0 : i32
    %c0_i32_0 = arith.constant 0 : i32
    return %c0_i32 : i32
  }
  func.func @transform_17(%arg0: i32, %arg1: i32) -> (i32, i32, i32, i32) {
    %c0_i32 = arith.constant 0 : i32
    %c0_i32_0 = arith.constant 0 : i32
    %c0_i32_1 = arith.constant 0 : i32
    return %arg0, %arg1, %c0_i32, %c0_i32_0 : i32, i32, i32, i32
  }
  func.func @transform_18(%arg0: i32, %arg1: i32) -> (i32, i32, i32) {
    %c0_i32 = arith.constant 0 : i32
    %c0_i32_0 = arith.constant 0 : i32
    %c0_i32_1 = arith.constant 0 : i32
    return %arg0, %c0_i32, %c0_i32_0 : i32, i32, i32
  }
}

</mosaic_0001>

<llo_original>
// kernel: tpu_custom_call.1
$region0: #{tpu_custom_call.1}
  #allocation0 [shape = 'u32[]', space=smem, size = 0x4, offset = 0x4, fixed_abs, tag = 'smem constant byte address 0x4 - core index']
  #allocation1 [shape = 'u32[144,128]{1,0:T(1,128)}', space=vmem, size = 0x12000, scoped, tag = 'internal scratch']
  %s0 = inlined_call_operand.vmem [shape: bf16[2,16,16,16], index: 0, kind: input, shape index: {}]
  %s1 = inlined_call_operand.hbm [shape: bf16[2,16,16,16], index: 1, kind: input, shape index: {}]
  %s2 = inlined_call_operand.hbm [shape: bf16[2,16,16,16], index: 2, kind: input, shape index: {}]
  %s3 = inlined_call_operand.vmem [shape: bf16[16,4], index: 3, kind: input, shape index: {}]
  %s4 = inlined_call_operand.vmem [shape: bf16[9,4,4], index: 4, kind: input, shape index: {}]
  %s5 = inlined_call_operand.vmem [shape: bf16[4,16], index: 5, kind: input, shape index: {}]
  %s6 = inlined_call_operand.vmem [shape: f32[1,16], index: 6, kind: input, shape index: {}]
  %s7 = inlined_call_operand.vmem [shape: f32[1,16], index: 7, kind: input, shape index: {}]
  %s8 = inlined_call_operand.vmem [shape: f32[1,4], index: 8, kind: input, shape index: {}]
  %s9 = inlined_call_operand.vmem [shape: f32[1,4], index: 9, kind: input, shape index: {}]
  %s10 = inlined_call_operand.vmem [shape: f32[1,4], index: 10, kind: input, shape index: {}]
  %s11 = inlined_call_operand.vmem [shape: f32[1,4], index: 11, kind: input, shape index: {}]
  %s12 = inlined_call_operand.vmem [shape: f32[1,16], index: 12, kind: input, shape index: {}]
  %s13 = inlined_call_operand.vmem [shape: f32[1,16], index: 13, kind: input, shape index: {}]
  %s14 = inlined_call_operand.vmem [shape: f32[160,1], index: 14, kind: input, shape index: {}]
  %s15 = inlined_call_operand.vmem [shape: f32[160,1], index: 15, kind: input, shape index: {}]
  %s16 = inlined_call_operand.vmem [shape: f32[4], index: 16, kind: input, shape index: {}]
  %s17 = inlined_call_operand.hbm [shape: f32[2,16,16,16], index: 17, kind: output, shape index: {0}]
  %s18 = inlined_call_operand.hbm [shape: f32[2,1,16], index: 18, kind: output, shape index: {1}]
  %19 = xla_tuple %s17, %s18
  %s20 = sld [smem:[#allocation0]]
  $region125: #{tpu_custom_call.1} parent=0
    _
  %s22 = ssub.s32 1, %s20
  %s23 = scalar_select 0, %s22, %s20
  $region1: #{tpu_custom_call.1} parent=0
    #allocation2 [shape = 'u8[8192]{0}', space=vmem, size = 0x2000, scoped, tag = 'input window, operand 1']
    #allocation3 [shape = 's32[2]{0}', space=sflag, size = 0x8, scoped, tag = 'scoped memory for tpu_custom_call.1']
    #allocation4 [shape = 's32[2]{0}', space=sflag, size = 0x8, scoped, tag = 'scoped memory for tpu_custom_call.1']
    #allocation5 [shape = 's32[2]{0}', space=sflag, size = 0x8, scoped, tag = 'scoped memory for tpu_custom_call.1']
    #allocation6 [shape = 'u8[8192]{0}', space=vmem, size = 0x2000, scoped, tag = 'input window, operand 2']
    #allocation7 [shape = 's32[2]{0}', space=sflag, size = 0x8, scoped, tag = 'scoped memory for tpu_custom_call.1']
    #allocation8 [shape = 'u8[512]{0}', space=smem, size = 0x200, scoped, tag = 'input window, operand 16, single buffered']
    #allocation9 [shape = 'u8[131072]{0}', space=vmem, size = 0x20000, scoped, tag = 'output window, operand 0']
    #allocation10 [shape = 'u8[1024]{0}', space=vmem, size = 0x400, scoped, tag = 'output window, operand 1']
    #allocation11 [shape = 's32[2]{0}', space=sflag, size = 0x8, scoped, tag = 'scoped memory for tpu_custom_call.1']
    %24 = vsyncpa [#allocation3], 0
    %s25 = scalar_lea.sflag [#allocation3], 1
    %26 = vsyncpa %s25, 0
    %27 = vsyncpa [#allocation7], 0
    %s28 = scalar_lea.sflag [#allocation7], 1
    %29 = vsyncpa %s28, 0
    %30 = vsyncpa [#allocation5], 0
    %31 = vsyncpa [#allocation4], 0
    %s32 = scalar_lea.sflag [#allocation4], 1
    %33 = vsyncpa %s32, 0
    %34 = vsyncpa [#allocation11], 0
    %s35 = scalar_lea.sflag [#allocation11], 1
    %36 = vsyncpa %s35, 0
    loop: start=0, step=1, limit=6
    $region2: #{tpu_custom_call.1} parent=1 // loop_pre_header
      _
    $region3: #{tpu_custom_call.1} parent=1 // loop_header
      %s38 = sphi 0, %s42
      %p39 = scmp.ge.s32.totalorder %s38, 6
      %s45 = sphi 0, %s57
      %s46 = sphi 0, %s53
      %s47 = sphi 0, %s45
      %s48 = sphi 0, %s46
      %s49 = sphi 0, %s47
      %s50 = sphi 0, %s48
      %s62 = sphi 0, %s64
      %s65 = sphi 0, %s62
      %s66 = sphi 0, %s65
      %s82 = sphi 0, %s66
      %s98 = sphi 0, %s100
      %s101 = sphi 0, %s98
      %s102 = sphi 0, %s101
      %s118 = sphi 0, %s102
      %s134 = sphi 0, %s136
      %s137 = sphi 0, %s134
      %s138 = sphi 0, %s137
      %s154 = sphi 0, %s138
      %s158 = sphi 0, %s158
      %s160 = sphi 0, %s158
      %s161 = sphi 0, %s160
      %s175 = sphi 0, %s161
      %s179 = sphi 0, %s179
      %s181 = sphi 0, %s179
      %s182 = sphi 0, %s181
      %s196 = sphi 0, %s182
      %s200 = sphi 0, %s200
      %s202 = sphi 0, %s200
      %s203 = sphi 0, %s202
      %s217 = sphi 0, %s203
      %s221 = sphi 0, %s221
      %s223 = sphi 0, %s221
      %s224 = sphi 0, %s223
      %s238 = sphi 0, %s224
      %s242 = sphi 0, %s242
      %s244 = sphi 0, %s242
      %s245 = sphi 0, %s244
      %s259 = sphi 0, %s245
      %s263 = sphi 0, %s263
      %s265 = sphi 0, %s263
      %s266 = sphi 0, %s265
      %s280 = sphi 0, %s266
      %s284 = sphi 0, %s284
      %s286 = sphi 0, %s284
      %s287 = sphi 0, %s286
      %s301 = sphi 0, %s287
      %s305 = sphi 0, %s305
      %s307 = sphi 0, %s305
      %s308 = sphi 0, %s307
      %s322 = sphi 0, %s308
      %s326 = sphi 0, %s326
      %s328 = sphi 0, %s326
      %s329 = sphi 0, %s328
      %s343 = sphi 0, %s329
      %s347 = sphi 0, %s347
      %s349 = sphi 0, %s347
      %s350 = sphi 0, %s349
      %s364 = sphi 0, %s350
      %s368 = sphi 0, %s368
      %s370 = sphi 0, %s368
      %s371 = sphi 0, %s370
      %s385 = sphi 0, %s371
      %s389 = sphi 0, %s389
      %s391 = sphi 0, %s389
      %s392 = sphi 0, %s391
      %s406 = sphi 0, %s392
      %s410 = sphi 0, %s410
      %s412 = sphi 0, %s410
      %s413 = sphi 0, %s412
      %s427 = sphi 0, %s413
      %s431 = sphi 0, %s431
      %s433 = sphi 0, %s431
      %s434 = sphi 0, %s433
      %s448 = sphi 0, %s434
      %s456 = sphi 0, %s458
      %s459 = sphi 0, %s456
      %s460 = sphi 0, %s459
      %s476 = sphi 0, %s460
      %s482 = sphi 0, %s484
      %s485 = sphi 0, %s482
      %s486 = sphi 0, %s485
      %s502 = sphi 0, %s486
    $region4: #{tpu_custom_call.1} parent=1 // loop_header_branch
      %41 = sbr.rel (%p39) target = $region8
    $region5: #{tpu_custom_call.1} parent=1 // loop_body
      %s43 = ssub.s32 %s38, 1
      %s44 = ssub.s32 %s38, 2
      %s51 = sadd.s32 1, %s46
      %p52 = scmp.ge.s32.totalorder %s51, 2
      %s53 = scalar_select %p52, 0, %s51
      %s54 = sadd.s32 1, %s45
      %s55 = scalar_select %p52, %s54, %s45
      %p56 = scmp.ge.s32.totalorder %s55, 2
      %s57 = scalar_select %p56, 0, %s55
      %s58 = ssub.s32 %s45, %s57
      %s59 = ssub.s32 %s46, %s53
      %s60 = sor.u32 %s58, %s59
      %p61 = scmp.eq.s32.totalorder %s60, 0
      %s63 = sadd.s32 %s62, 1
      %s64 = scalar_select %p61, %s62, %s63
      %p67 = pneg %p61
      %p68 = scmp.eq.s32.totalorder %s38, 3
      %p69 = por %p67, %p68
      %p70 = scmp.ne.s32.totalorder %s62, %s65
      %p71 = scmp.eq.s32.totalorder %s38, 0
      %p72 = por %p70, %p71
      %p73 = scmp.ne.s32.totalorder %s62, %s65
      %p74 = scmp.eq.s32.totalorder %s43, 3
      %p75 = por %p73, %p74
      %p76 = scmp.ne.s32.totalorder %s65, %s66
      %p77 = scmp.eq.s32.totalorder %s43, 0
      %p78 = por %p76, %p77
      %p79 = scmp.ne.s32.totalorder %s65, %s66
      %p80 = scmp.eq.s32.totalorder %s44, 3
      %p81 = por %p79, %p80
      %p83 = scmp.ne.s32.totalorder %s66, %s82
      %p84 = scmp.eq.s32.totalorder %s44, 0
      %p85 = por %p83, %p84
      %s86 = smul.u32 %s46, 8
      %s87 = ssub.s32 %s86, 1
      %p88 = scmp.gt.s32.totalorder %s87, 0
      %s89 = scalar_select %p88, %s87, 0
      %s90 = smul.u32 %s53, 8
      %s91 = ssub.s32 %s90, 1
      %p92 = scmp.gt.s32.totalorder %s91, 0
      %s93 = scalar_select %p92, %s91, 0
      %s94 = ssub.s32 %s45, %s57
      %s95 = ssub.s32 %s89, %s93
      %s96 = sor.u32 %s94, %s95
      %p97 = scmp.eq.s32.totalorder %s96, 0
      %s99 = sadd.s32 %s98, 1
      %s100 = scalar_select %p97, %s98, %s99
      %p103 = pneg %p97
      %p104 = scmp.eq.s32.totalorder %s38, 3
      %p105 = por %p103, %p104
      %p106 = scmp.ne.s32.totalorder %s98, %s101
      %p107 = scmp.eq.s32.totalorder %s38, 0
      %p108 = por %p106, %p107
      %p109 = scmp.ne.s32.totalorder %s98, %s101
      %p110 = scmp.eq.s32.totalorder %s43, 3
      %p111 = por %p109, %p110
      %p112 = scmp.ne.s32.totalorder %s101, %s102
      %p113 = scmp.eq.s32.totalorder %s43, 0
      %p114 = por %p112, %p113
      %p115 = scmp.ne.s32.totalorder %s101, %s102
      %p116 = scmp.eq.s32.totalorder %s44, 3
      %p117 = por %p115, %p116
      %p119 = scmp.ne.s32.totalorder %s102, %s118
      %p120 = scmp.eq.s32.totalorder %s44, 0
      %p121 = por %p119, %p120
      %s122 = sadd.s32 %s46, 1
      %s123 = smul.u32 %s122, 8
      %p124 = scmp.lt.s32.totalorder %s123, 15
      %s125 = scalar_select %p124, %s123, 15
      %s126 = sadd.s32 %s53, 1
      %s127 = smul.u32 %s126, 8
      %p128 = scmp.lt.s32.totalorder %s127, 15
      %s129 = scalar_select %p128, %s127, 15
      %s130 = ssub.s32 %s45, %s57
      %s131 = ssub.s32 %s125, %s129
      %s132 = sor.u32 %s130, %s131
      %p133 = scmp.eq.s32.totalorder %s132, 0
      %s135 = sadd.s32 %s134, 1
      %s136 = scalar_select %p133, %s134, %s135
      %p139 = pneg %p133
      %p140 = scmp.eq.s32.totalorder %s38, 3
      %p141 = por %p139, %p140
      %p142 = scmp.ne.s32.totalorder %s134, %s137
      %p143 = scmp.eq.s32.totalorder %s38, 0
      %p144 = por %p142, %p143
      %p145 = scmp.ne.s32.totalorder %s134, %s137
      %p146 = scmp.eq.s32.totalorder %s43, 3
      %p147 = por %p145, %p146
      %p148 = scmp.ne.s32.totalorder %s137, %s138
      %p149 = scmp.eq.s32.totalorder %s43, 0
      %p150 = por %p148, %p149
      %p151 = scmp.ne.s32.totalorder %s137, %s138
      %p152 = scmp.eq.s32.totalorder %s44, 3
      %p153 = por %p151, %p152
      %p155 = scmp.ne.s32.totalorder %s138, %s154
      %p156 = scmp.eq.s32.totalorder %s44, 0
      %p157 = por %p155, %p156
      %s159 = sadd.s32 %s158, 1
      %p162 = scmp.eq.s32.totalorder %s38, 3
      %p163 = scmp.ne.s32.totalorder %s158, %s160
      %p164 = scmp.eq.s32.totalorder %s38, 0
      %p165 = por %p163, %p164
      %p166 = scmp.ne.s32.totalorder %s158, %s160
      %p167 = scmp.eq.s32.totalorder %s43, 3
      %p168 = por %p166, %p167
      %p169 = scmp.ne.s32.totalorder %s160, %s161
      %p170 = scmp.eq.s32.totalorder %s43, 0
      %p171 = por %p169, %p170
      %p172 = scmp.ne.s32.totalorder %s160, %s161
      %p173 = scmp.eq.s32.totalorder %s44, 3
      %p174 = por %p172, %p173
      %p176 = scmp.ne.s32.totalorder %s161, %s175
      %p177 = scmp.eq.s32.totalorder %s44, 0
      %p178 = por %p176, %p177
      %s180 = sadd.s32 %s179, 1
      %p183 = scmp.eq.s32.totalorder %s38, 3
      %p184 = scmp.ne.s32.totalorder %s179, %s181
      %p185 = scmp.eq.s32.totalorder %s38, 0
      %p186 = por %p184, %p185
      %p187 = scmp.ne.s32.totalorder %s179, %s181
      %p188 = scmp.eq.s32.totalorder %s43, 3
      %p189 = por %p187, %p188
      %p190 = scmp.ne.s32.totalorder %s181, %s182
      %p191 = scmp.eq.s32.totalorder %s43, 0
      %p192 = por %p190, %p191
      %p193 = scmp.ne.s32.totalorder %s181, %s182
      %p194 = scmp.eq.s32.totalorder %s44, 3
      %p195 = por %p193, %p194
      %p197 = scmp.ne.s32.totalorder %s182, %s196
      %p198 = scmp.eq.s32.totalorder %s44, 0
      %p199 = por %p197, %p198
      %s201 = sadd.s32 %s200, 1
      %p204 = scmp.eq.s32.totalorder %s38, 3
      %p205 = scmp.ne.s32.totalorder %s200, %s202
      %p206 = scmp.eq.s32.totalorder %s38, 0
      %p207 = por %p205, %p206
      %p208 = scmp.ne.s32.totalorder %s200, %s202
      %p209 = scmp.eq.s32.totalorder %s43, 3
      %p210 = por %p208, %p209
      %p211 = scmp.ne.s32.totalorder %s202, %s203
      %p212 = scmp.eq.s32.totalorder %s43, 0
      %p213 = por %p211, %p212
      %p214 = scmp.ne.s32.totalorder %s202, %s203
      %p215 = scmp.eq.s32.totalorder %s44, 3
      %p216 = por %p214, %p215
      %p218 = scmp.ne.s32.totalorder %s203, %s217
      %p219 = scmp.eq.s32.totalorder %s44, 0
      %p220 = por %p218, %p219
      %s222 = sadd.s32 %s221, 1
      %p225 = scmp.eq.s32.totalorder %s38, 3
      %p226 = scmp.ne.s32.totalorder %s221, %s223
      %p227 = scmp.eq.s32.totalorder %s38, 0
      %p228 = por %p226, %p227
      %p229 = scmp.ne.s32.totalorder %s221, %s223
      %p230 = scmp.eq.s32.totalorder %s43, 3
      %p231 = por %p229, %p230
      %p232 = scmp.ne.s32.totalorder %s223, %s224
      %p233 = scmp.eq.s32.totalorder %s43, 0
      %p234 = por %p232, %p233
      %p235 = scmp.ne.s32.totalorder %s223, %s224
      %p236 = scmp.eq.s32.totalorder %s44, 3
      %p237 = por %p235, %p236
      %p239 = scmp.ne.s32.totalorder %s224, %s238
      %p240 = scmp.eq.s32.totalorder %s44, 0
      %p241 = por %p239, %p240
      %s243 = sadd.s32 %s242, 1
      %p246 = scmp.eq.s32.totalorder %s38, 3
      %p247 = scmp.ne.s32.totalorder %s242, %s244
      %p248 = scmp.eq.s32.totalorder %s38, 0
      %p249 = por %p247, %p248
      %p250 = scmp.ne.s32.totalorder %s242, %s244
      %p251 = scmp.eq.s32.totalorder %s43, 3
      %p252 = por %p250, %p251
      %p253 = scmp.ne.s32.totalorder %s244, %s245
      %p254 = scmp.eq.s32.totalorder %s43, 0
      %p255 = por %p253, %p254
      %p256 = scmp.ne.s32.totalorder %s244, %s245
      %p257 = scmp.eq.s32.totalorder %s44, 3
      %p258 = por %p256, %p257
      %p260 = scmp.ne.s32.totalorder %s245, %s259
      %p261 = scmp.eq.s32.totalorder %s44, 0
      %p262 = por %p260, %p261
      %s264 = sadd.s32 %s263, 1
      %p267 = scmp.eq.s32.totalorder %s38, 3
      %p268 = scmp.ne.s32.totalorder %s263, %s265
      %p269 = scmp.eq.s32.totalorder %s38, 0
      %p270 = por %p268, %p269
      %p271 = scmp.ne.s32.totalorder %s263, %s265
      %p272 = scmp.eq.s32.totalorder %s43, 3
      %p273 = por %p271, %p272
      %p274 = scmp.ne.s32.totalorder %s265, %s266
      %p275 = scmp.eq.s32.totalorder %s43, 0
      %p276 = por %p274, %p275
      %p277 = scmp.ne.s32.totalorder %s265, %s266
      %p278 = scmp.eq.s32.totalorder %s44, 3
      %p279 = por %p277, %p278
      %p281 = scmp.ne.s32.totalorder %s266, %s280
      %p282 = scmp.eq.s32.totalorder %s44, 0
      %p283 = por %p281, %p282
      %s285 = sadd.s32 %s284, 1
      %p288 = scmp.eq.s32.totalorder %s38, 3
      %p289 = scmp.ne.s32.totalorder %s284, %s286
      %p290 = scmp.eq.s32.totalorder %s38, 0
      %p291 = por %p289, %p290
      %p292 = scmp.ne.s32.totalorder %s284, %s286
      %p293 = scmp.eq.s32.totalorder %s43, 3
      %p294 = por %p292, %p293
      %p295 = scmp.ne.s32.totalorder %s286, %s287
      %p296 = scmp.eq.s32.totalorder %s43, 0
      %p297 = por %p295, %p296
      %p298 = scmp.ne.s32.totalorder %s286, %s287
      %p299 = scmp.eq.s32.totalorder %s44, 3
      %p300 = por %p298, %p299
      %p302 = scmp.ne.s32.totalorder %s287, %s301
      %p303 = scmp.eq.s32.totalorder %s44, 0
      %p304 = por %p302, %p303
      %s306 = sadd.s32 %s305, 1
      %p309 = scmp.eq.s32.totalorder %s38, 3
      %p310 = scmp.ne.s32.totalorder %s305, %s307
      %p311 = scmp.eq.s32.totalorder %s38, 0
      %p312 = por %p310, %p311
      %p313 = scmp.ne.s32.totalorder %s305, %s307
      %p314 = scmp.eq.s32.totalorder %s43, 3
      %p315 = por %p313, %p314
      %p316 = scmp.ne.s32.totalorder %s307, %s308
      %p317 = scmp.eq.s32.totalorder %s43, 0
      %p318 = por %p316, %p317
      %p319 = scmp.ne.s32.totalorder %s307, %s308
      %p320 = scmp.eq.s32.totalorder %s44, 3
      %p321 = por %p319, %p320
      %p323 = scmp.ne.s32.totalorder %s308, %s322
      %p324 = scmp.eq.s32.totalorder %s44, 0
      %p325 = por %p323, %p324
      %s327 = sadd.s32 %s326, 1
      %p330 = scmp.eq.s32.totalorder %s38, 3
      %p331 = scmp.ne.s32.totalorder %s326, %s328
      %p332 = scmp.eq.s32.totalorder %s38, 0
      %p333 = por %p331, %p332
      %p334 = scmp.ne.s32.totalorder %s326, %s328
      %p335 = scmp.eq.s32.totalorder %s43, 3
      %p336 = por %p334, %p335
      %p337 = scmp.ne.s32.totalorder %s328, %s329
      %p338 = scmp.eq.s32.totalorder %s43, 0
      %p339 = por %p337, %p338
      %p340 = scmp.ne.s32.totalorder %s328, %s329
      %p341 = scmp.eq.s32.totalorder %s44, 3
      %p342 = por %p340, %p341
      %p344 = scmp.ne.s32.totalorder %s329, %s343
      %p345 = scmp.eq.s32.totalorder %s44, 0
      %p346 = por %p344, %p345
      %s348 = sadd.s32 %s347, 1
      %p351 = scmp.eq.s32.totalorder %s38, 3
      %p352 = scmp.ne.s32.totalorder %s347, %s349
      %p353 = scmp.eq.s32.totalorder %s38, 0
      %p354 = por %p352, %p353
      %p355 = scmp.ne.s32.totalorder %s347, %s349
      %p356 = scmp.eq.s32.totalorder %s43, 3
      %p357 = por %p355, %p356
      %p358 = scmp.ne.s32.totalorder %s349, %s350
      %p359 = scmp.eq.s32.totalorder %s43, 0
      %p360 = por %p358, %p359
      %p361 = scmp.ne.s32.totalorder %s349, %s350
      %p362 = scmp.eq.s32.totalorder %s44, 3
      %p363 = por %p361, %p362
      %p365 = scmp.ne.s32.totalorder %s350, %s364
      %p366 = scmp.eq.s32.totalorder %s44, 0
      %p367 = por %p365, %p366
      %s369 = sadd.s32 %s368, 1
      %p372 = scmp.eq.s32.totalorder %s38, 3
      %p373 = scmp.ne.s32.totalorder %s368, %s370
      %p374 = scmp.eq.s32.totalorder %s38, 0
      %p375 = por %p373, %p374
      %p376 = scmp.ne.s32.totalorder %s368, %s370
      %p377 = scmp.eq.s32.totalorder %s43, 3
      %p378 = por %p376, %p377
      %p379 = scmp.ne.s32.totalorder %s370, %s371
      %p380 = scmp.eq.s32.totalorder %s43, 0
      %p381 = por %p379, %p380
      %p382 = scmp.ne.s32.totalorder %s370, %s371
      %p383 = scmp.eq.s32.totalorder %s44, 3
      %p384 = por %p382, %p383
      %p386 = scmp.ne.s32.totalorder %s371, %s385
      %p387 = scmp.eq.s32.totalorder %s44, 0
      %p388 = por %p386, %p387
      %s390 = sadd.s32 %s389, 1
      %p393 = scmp.eq.s32.totalorder %s38, 3
      %p394 = scmp.ne.s32.totalorder %s389, %s391
      %p395 = scmp.eq.s32.totalorder %s38, 0
      %p396 = por %p394, %p395
      %p397 = scmp.ne.s32.totalorder %s389, %s391
      %p398 = scmp.eq.s32.totalorder %s43, 3
      %p399 = por %p397, %p398
      %p400 = scmp.ne.s32.totalorder %s391, %s392
      %p401 = scmp.eq.s32.totalorder %s43, 0
      %p402 = por %p400, %p401
      %p403 = scmp.ne.s32.totalorder %s391, %s392
      %p404 = scmp.eq.s32.totalorder %s44, 3
      %p405 = por %p403, %p404
      %p407 = scmp.ne.s32.totalorder %s392, %s406
      %p408 = scmp.eq.s32.totalorder %s44, 0
      %p409 = por %p407, %p408
      %s411 = sadd.s32 %s410, 1
      %p414 = scmp.eq.s32.totalorder %s38, 3
      %p415 = scmp.ne.s32.totalorder %s410, %s412
      %p416 = scmp.eq.s32.totalorder %s38, 0
      %p417 = por %p415, %p416
      %p418 = scmp.ne.s32.totalorder %s410, %s412
      %p419 = scmp.eq.s32.totalorder %s43, 3
      %p420 = por %p418, %p419
      %p421 = scmp.ne.s32.totalorder %s412, %s413
      %p422 = scmp.eq.s32.totalorder %s43, 0
      %p423 = por %p421, %p422
      %p424 = scmp.ne.s32.totalorder %s412, %s413
      %p425 = scmp.eq.s32.totalorder %s44, 3
      %p426 = por %p424, %p425
      %p428 = scmp.ne.s32.totalorder %s413, %s427
      %p429 = scmp.eq.s32.totalorder %s44, 0
      %p430 = por %p428, %p429
      %s432 = sadd.s32 %s431, 1
      %p435 = scmp.eq.s32.totalorder %s38, 3
      %p436 = scmp.ne.s32.totalorder %s431, %s433
      %p437 = scmp.eq.s32.totalorder %s38, 0
      %p438 = por %p436, %p437
      %p439 = scmp.ne.s32.totalorder %s431, %s433
      %p440 = scmp.eq.s32.totalorder %s43, 3
      %p441 = por %p439, %p440
      %p442 = scmp.ne.s32.totalorder %s433, %s434
      %p443 = scmp.eq.s32.totalorder %s43, 0
      %p444 = por %p442, %p443
      %p445 = scmp.ne.s32.totalorder %s433, %s434
      %p446 = scmp.eq.s32.totalorder %s44, 3
      %p447 = por %p445, %p446
      %p449 = scmp.ne.s32.totalorder %s434, %s448
      %p450 = scmp.eq.s32.totalorder %s44, 0
      %p451 = por %p449, %p450
      %s452 = ssub.s32 %s45, %s57
      %s453 = ssub.s32 %s46, %s53
      %s454 = sor.u32 %s452, %s453
      %p455 = scmp.eq.s32.totalorder %s454, 0
      %s457 = sadd.s32 %s456, 1
      %s458 = scalar_select %p455, %s456, %s457
      %p461 = pneg %p455
      %p462 = scmp.eq.s32.totalorder %s38, 3
      %p463 = por %p461, %p462
      %p464 = scmp.ne.s32.totalorder %s456, %s459
      %p465 = scmp.eq.s32.totalorder %s38, 0
      %p466 = por %p464, %p465
      %p467 = scmp.ne.s32.totalorder %s456, %s459
      %p468 = scmp.eq.s32.totalorder %s43, 3
      %p469 = por %p467, %p468
      %p470 = scmp.ne.s32.totalorder %s459, %s460
      %p471 = scmp.eq.s32.totalorder %s43, 0
      %p472 = por %p470, %p471
      %p473 = scmp.ne.s32.totalorder %s459, %s460
      %p474 = scmp.eq.s32.totalorder %s44, 3
      %p475 = por %p473, %p474
      %p477 = scmp.ne.s32.totalorder %s460, %s476
      %p478 = scmp.eq.s32.totalorder %s44, 0
      %p479 = por %p477, %p478
      %s480 = ssub.s32 %s45, %s57
      %p481 = scmp.eq.s32.totalorder %s480, 0
      %s483 = sadd.s32 %s482, 1
      %s484 = scalar_select %p481, %s482, %s483
      %p487 = pneg %p481
      %p488 = scmp.eq.s32.totalorder %s38, 3
      %p489 = por %p487, %p488
      %p490 = scmp.ne.s32.totalorder %s482, %s485
      %p491 = scmp.eq.s32.totalorder %s38, 0
      %p492 = por %p490, %p491
      %p493 = scmp.ne.s32.totalorder %s482, %s485
      %p494 = scmp.eq.s32.totalorder %s43, 3
      %p495 = por %p493, %p494
      %p496 = scmp.ne.s32.totalorder %s485, %s486
      %p497 = scmp.eq.s32.totalorder %s43, 0
      %p498 = por %p496, %p497
      %p499 = scmp.ne.s32.totalorder %s485, %s486
      %p500 = scmp.eq.s32.totalorder %s44, 3
      %p501 = por %p499, %p500
      %p503 = scmp.ne.s32.totalorder %s486, %s502
      %p504 = scmp.eq.s32.totalorder %s44, 0
      %p505 = por %p503, %p504
      %p506 = scmp.le.s32.totalorder 1, %s38
      %p507 = scmp.lt.s32.totalorder %s38, 5
      %p508 = pnand %p506, %p507
      %p509 = pneg %p508
      // Predicated region
      $region9: #{tpu_custom_call.1} parent=5 // pred_check
        _
      $region10: #{tpu_custom_call.1} parent=5 // pred_check_branch
        %511 = sbr.rel (%p508) target = $region12
      $region11: #{tpu_custom_call.1} parent=5 // pred_region
        %s512 = ssub.s32 %s38, 1
        // Predicated region
        $region13: #{tpu_custom_call.1} parent=11 // pred_check
          %p513 = pneg %p171
        $region14: #{tpu_custom_call.1} parent=11 // pred_check_branch
          %515 = sbr.rel (%p513) target = $region16
        $region15: #{tpu_custom_call.1} parent=11 // pred_region
          _
        $region16: #{tpu_custom_call.1} parent=11 // pred_fallthru
          _
        // Predicated region
        $region17: #{tpu_custom_call.1} parent=11 // pred_check
          %p516 = pneg %p192
        $region18: #{tpu_custom_call.1} parent=11 // pred_check_branch
          %518 = sbr.rel (%p516) target = $region20
        $region19: #{tpu_custom_call.1} parent=11 // pred_region
          _
        $region20: #{tpu_custom_call.1} parent=11 // pred_fallthru
          _
        // Predicated region
        $region21: #{tpu_custom_call.1} parent=11 // pred_check
          %p519 = pneg %p213
        $region22: #{tpu_custom_call.1} parent=11 // pred_check_branch
          %521 = sbr.rel (%p519) target = $region24
        $region23: #{tpu_custom_call.1} parent=11 // pred_region
          _
        $region24: #{tpu_custom_call.1} parent=11 // pred_fallthru
          _
        // Predicated region
        $region25: #{tpu_custom_call.1} parent=11 // pred_check
          %p522 = pneg %p234
        $region26: #{tpu_custom_call.1} parent=11 // pred_check_branch
          %524 = sbr.rel (%p522) target = $region28
        $region27: #{tpu_custom_call.1} parent=11 // pred_region
          _
        $region28: #{tpu_custom_call.1} parent=11 // pred_fallthru
          _
        // Predicated region
        $region29: #{tpu_custom_call.1} parent=11 // pred_check
          %p525 = pneg %p255
        $region30: #{tpu_custom_call.1} parent=11 // pred_check_branch
          %527 = sbr.rel (%p525) target = $region32
        $region31: #{tpu_custom_call.1} parent=11 // pred_region
          _
        $region32: #{tpu_custom_call.1} parent=11 // pred_fallthru
          _
        // Predicated region
        $region33: #{tpu_custom_call.1} parent=11 // pred_check
          %p528 = pneg %p276
        $region34: #{tpu_custom_call.1} parent=11 // pred_check_branch
          %530 = sbr.rel (%p528) target = $region36
        $region35: #{tpu_custom_call.1} parent=11 // pred_region
          _
        $region36: #{tpu_custom_call.1} parent=11 // pred_fallthru
          _
        // Predicated region
        $region37: #{tpu_custom_call.1} parent=11 // pred_check
          %p531 = pneg %p297
        $region38: #{tpu_custom_call.1} parent=11 // pred_check_branch
          %533 = sbr.rel (%p531) target = $region40
        $region39: #{tpu_custom_call.1} parent=11 // pred_region
          _
        $region40: #{tpu_custom_call.1} parent=11 // pred_fallthru
          _
        // Predicated region
        $region41: #{tpu_custom_call.1} parent=11 // pred_check
          %p534 = pneg %p318
        $region42: #{tpu_custom_call.1} parent=11 // pred_check_branch
          %536 = sbr.rel (%p534) target = $region44
        $region43: #{tpu_custom_call.1} parent=11 // pred_region
          _
        $region44: #{tpu_custom_call.1} parent=11 // pred_fallthru
          _
        // Predicated region
        $region45: #{tpu_custom_call.1} parent=11 // pred_check
          %p537 = pneg %p339
        $region46: #{tpu_custom_call.1} parent=11 // pred_check_branch
          %539 = sbr.rel (%p537) target = $region48
        $region47: #{tpu_custom_call.1} parent=11 // pred_region
          _
        $region48: #{tpu_custom_call.1} parent=11 // pred_fallthru
          _
        // Predicated region
        $region49: #{tpu_custom_call.1} parent=11 // pred_check
          %p540 = pneg %p360
        $region50: #{tpu_custom_call.1} parent=11 // pred_check_branch
          %542 = sbr.rel (%p540) target = $region52
        $region51: #{tpu_custom_call.1} parent=11 // pred_region
          _
        $region52: #{tpu_custom_call.1} parent=11 // pred_fallthru
          _
        // Predicated region
        $region53: #{tpu_custom_call.1} parent=11 // pred_check
          %p543 = pneg %p381
        $region54: #{tpu_custom_call.1} parent=11 // pred_check_branch
          %545 = sbr.rel (%p543) target = $region56
        $region55: #{tpu_custom_call.1} parent=11 // pred_region
          _
        $region56: #{tpu_custom_call.1} parent=11 // pred_fallthru
          _
        // Predicated region
        $region57: #{tpu_custom_call.1} parent=11 // pred_check
          %p546 = pneg %p402
        $region58: #{tpu_custom_call.1} parent=11 // pred_check_branch
          %548 = sbr.rel (%p546) target = $region60
        $region59: #{tpu_custom_call.1} parent=11 // pred_region
          _
        $region60: #{tpu_custom_call.1} parent=11 // pred_fallthru
          _
        // Predicated region
        $region61: #{tpu_custom_call.1} parent=11 // pred_check
          %p549 = pneg %p423
        $region62: #{tpu_custom_call.1} parent=11 // pred_check_branch
          %551 = sbr.rel (%p549) target = $region64
        $region63: #{tpu_custom_call.1} parent=11 // pred_region
          _
        $region64: #{tpu_custom_call.1} parent=11 // pred_fallthru
          _
        // Predicated region
        $region65: #{tpu_custom_call.1} parent=11 // pred_check
          %p552 = pneg %p444
        $region66: #{tpu_custom_call.1} parent=11 // pred_check_branch
          %554 = sbr.rel (%p552) target = $region68
        $region67: #{tpu_custom_call.1} parent=11 // pred_region
          %s556 = ssub.s32 16, 16
          %557 = vsyncadd [#allocation5], %s556
          %s559 = sshll.u32 %s16, 4
          %s560 = int_to_ptr.vmem [resolvable:$true] %s559
          %562 = dma.vmem_to_smem %s560, 16, [#allocation8], [#allocation5]
        $region68: #{tpu_custom_call.1} parent=11 // pred_fallthru
          _
      $region12: #{tpu_custom_call.1} parent=5 // pred_fallthru
        _
      %p563 = scmp.lt.s32.totalorder %s38, 4
      // Predicated region
      $region69: #{tpu_custom_call.1} parent=5 // pred_check
        %p564 = pneg %p563
      $region70: #{tpu_custom_call.1} parent=5 // pred_check_branch
        %566 = sbr.rel (%p564) target = $region72
      $region71: #{tpu_custom_call.1} parent=5 // pred_region
        // Predicated region
        $region73: #{tpu_custom_call.1} parent=71 // pred_check
          %p567 = pneg %p72
        $region74: #{tpu_custom_call.1} parent=71 // pred_check_branch
          %569 = sbr.rel (%p567) target = $region76
        $region75: #{tpu_custom_call.1} parent=71 // pred_region
          %s570 = smul.u32 8, %s46
          %p571 = scmp.lt.s32.totalorder %s45, 1
          %s572 = scalar_select %p571, %s45, 1
          %p573 = scmp.lt.s32.totalorder %s570, 15
          %s574 = scalar_select %p573, %s570, 15
          %s575 = smul.addr %s574, 2
          %s576 = smul.addr %s572, 32
          %s577 = sadd.s32 %s575, %s576
          %s578 = smul.addr %s577, 4
          %s579 = scalar_lea.vmem %s0, %s578
          %s580 = smul.u32 8, %s46
        $region76: #{tpu_custom_call.1} parent=71 // pred_fallthru
          _
        // Predicated region
        $region77: #{tpu_custom_call.1} parent=71 // pred_check
          %p581 = pneg %p108
        $region78: #{tpu_custom_call.1} parent=71 // pred_check_branch
          %583 = sbr.rel (%p581) target = $region80
        $region79: #{tpu_custom_call.1} parent=71 // pred_region
          %s584 = sand.u32 %s98, 1
          %s585 = scalar_lea.sflag [#allocation3], %s584
          %s586 = sand.u32 %s98, 1
          %s587 = smul.addr %s586, 8
          %s588 = scalar_lea.vmem [#allocation2], %s587
          %s589 = smul.u32 %s46, 8
          %s590 = ssub.s32 %s589, 1
          %p591 = scmp.gt.s32.totalorder %s590, 0
          %s592 = scalar_select %p591, %s590, 0
          %s594 = ssub.s32 128, 128
          %595 = vsyncadd %s585, %s594
          %s596 = smul.addr %s592, 2
          %s597 = smul.addr %s45, 32
          %s598 = sadd.s32 %s596, %s597
          %s599 = smul.addr %s598, 64
          %s600 = scalar_lea.hbm %s1, %s599
          %s601 = sshll.u32 %s588, 4
          %s602 = int_to_ptr.vmem [resolvable:$true] %s601
          %607 = dma.hbm_to_vmem [thread:$0]  %s600, 128, %s602, %s585, 64, 64, 4
        $region80: #{tpu_custom_call.1} parent=71 // pred_fallthru
          _
        // Predicated region
        $region81: #{tpu_custom_call.1} parent=71 // pred_check
          %p608 = pneg %p144
        $region82: #{tpu_custom_call.1} parent=71 // pred_check_branch
          %610 = sbr.rel (%p608) target = $region84
        $region83: #{tpu_custom_call.1} parent=71 // pred_region
          %s611 = sand.u32 %s134, 1
          %s612 = scalar_lea.sflag [#allocation7], %s611
          %s613 = sand.u32 %s134, 1
          %s614 = smul.addr %s613, 8
          %s615 = scalar_lea.vmem [#allocation6], %s614
          %s616 = sadd.s32 %s46, 1
          %s617 = smul.u32 %s616, 8
          %p618 = scmp.lt.s32.totalorder %s617, 15
          %s619 = scalar_select %p618, %s617, 15
          %s621 = ssub.s32 128, 128
          %622 = vsyncadd %s612, %s621
          %s623 = smul.addr %s619, 2
          %s624 = smul.addr %s45, 32
          %s625 = sadd.s32 %s623, %s624
          %s626 = smul.addr %s625, 64
          %s627 = scalar_lea.hbm %s2, %s626
          %s628 = sshll.u32 %s615, 4
          %s629 = int_to_ptr.vmem [resolvable:$true] %s628
          %634 = dma.hbm_to_vmem [thread:$0]  %s627, 128, %s629, %s612, 64, 64, 4
        $region84: #{tpu_custom_call.1} parent=71 // pred_fallthru
          _
      $region72: #{tpu_custom_call.1} parent=5 // pred_fallthru
        _
      %p635 = scmp.le.s32.totalorder 1, %s38
      %p636 = scmp.lt.s32.totalorder %s38, 5
      %p637 = pnand %p635, %p636
      %p638 = pneg %p637
      // Predicated region
      $region85: #{tpu_custom_call.1} parent=5 // pred_check
        _
      $region86: #{tpu_custom_call.1} parent=5 // pred_check_branch
        %640 = sbr.rel (%p637) target = $region88
      $region87: #{tpu_custom_call.1} parent=5 // pred_region
        %s641 = ssub.s32 %s38, 1
        %s642 = sand.u32 %s101, 1
        %s643 = scalar_lea.sflag [#allocation3], %s642
        %s644 = sand.u32 %s101, 1
        %s645 = smul.addr %s644, 8
        %s646 = scalar_lea.vmem [#allocation2], %s645
        // Predicated region
        $region89: #{tpu_custom_call.1} parent=87 // pred_check
          %p647 = pneg %p114
        $region90: #{tpu_custom_call.1} parent=87 // pred_check_branch
          %649 = sbr.rel (%p647) target = $region92
        $region91: #{tpu_custom_call.1} parent=87 // pred_region
          %650 = dma.done %s643, 128
        $region92: #{tpu_custom_call.1} parent=87 // pred_fallthru
          _
        %s651 = sand.u32 %s137, 1
        %s652 = scalar_lea.sflag [#allocation7], %s651
        %s653 = sand.u32 %s137, 1
        %s654 = smul.addr %s653, 8
        %s655 = scalar_lea.vmem [#allocation6], %s654
        // Predicated region
        $region93: #{tpu_custom_call.1} parent=87 // pred_check
          %p656 = pneg %p150
        $region94: #{tpu_custom_call.1} parent=87 // pred_check_branch
          %658 = sbr.rel (%p656) target = $region96
        $region95: #{tpu_custom_call.1} parent=87 // pred_region
          %659 = dma.done %s652, 128
        $region96: #{tpu_custom_call.1} parent=87 // pred_fallthru
          _
        // Predicated region
        $region97: #{tpu_custom_call.1} parent=87 // pred_check
          %p660 = pneg %p444
        $region98: #{tpu_custom_call.1} parent=87 // pred_check_branch
          %662 = sbr.rel (%p660) target = $region100
        $region99: #{tpu_custom_call.1} parent=87 // pred_region
          %663 = dma.done [#allocation5], 16
        $region100: #{tpu_custom_call.1} parent=87 // pred_fallthru
          _
        %664 = sfence
        %s665 = smul.u32 8, %s48
        %p666 = scmp.lt.s32.totalorder %s47, 1
        %s667 = scalar_select %p666, %s47, 1
        %p668 = scmp.lt.s32.totalorder %s665, 15
        %s669 = scalar_select %p668, %s665, 15
        %s670 = smul.addr %s669, 2
        %s671 = smul.addr %s667, 32
        %s672 = sadd.s32 %s670, %s671
        %s673 = smul.addr %s672, 4
        %s674 = scalar_lea.vmem %s0, %s673
        %p675 = pneg %p78
        %p676 = pneg %p75
        %s677 = sand.u32 %s101, 1
        %s678 = scalar_lea.sflag [#allocation3], %s677
        %s679 = sand.u32 %s101, 1
        %s680 = smul.addr %s679, 8
        %s681 = scalar_lea.vmem [#allocation2], %s680
        %p682 = pneg %p114
        %p683 = pneg %p111
        %s684 = sand.u32 %s137, 1
        %s685 = scalar_lea.sflag [#allocation7], %s684
        %s686 = sand.u32 %s137, 1
        %s687 = smul.addr %s686, 8
        %s688 = scalar_lea.vmem [#allocation6], %s687
        %p689 = pneg %p150
        %p690 = pneg %p147
        %p691 = pneg %p171
        %p692 = pneg %p168
        %p693 = pneg %p192
        %p694 = pneg %p189
        %p695 = pneg %p213
        %p696 = pneg %p210
        %p697 = pneg %p234
        %p698 = pneg %p231
        %p699 = pneg %p255
        %p700 = pneg %p252
        %p701 = pneg %p276
        %p702 = pneg %p273
        %p703 = pneg %p297
        %p704 = pneg %p294
        %p705 = pneg %p318
        %p706 = pneg %p315
        %p707 = pneg %p339
        %p708 = pneg %p336
        %p709 = pneg %p360
        %p710 = pneg %p357
        %p711 = pneg %p381
        %p712 = pneg %p378
        %p713 = pneg %p402
        %p714 = pneg %p399
        %p715 = pneg %p423
        %p716 = pneg %p420
        %p717 = pneg %p444
        %p718 = pneg %p441
        %p719 = pneg %p472
        %p720 = pneg %p469
        %s721 = sand.u32 %s459, 1
        %s722 = scalar_lea.sflag [#allocation4], %s721
        %s723 = sand.u32 %s459, 1
        %s724 = smul.addr %s723, 128
        %s725 = scalar_lea.vmem [#allocation9], %s724
        %p726 = pneg %p498
        %p727 = pneg %p495
        %s728 = sand.u32 %s485, 1
        %s729 = scalar_lea.sflag [#allocation11], %s728
        %s730 = sand.u32 %s485, 1
        %s731 = scalar_lea.vmem [#allocation10], %s730
        %s732 = smul.u32 8, %s48
        %p733 = scmp.lt.s32.totalorder %s47, 1
        %s734 = scalar_select %p733, %s47, 1
        %p735 = scmp.lt.s32.totalorder %s732, 15
        %s736 = scalar_select %p735, %s732, 15
        %s737 = smul.addr %s736, 2
        %s738 = smul.addr %s734, 32
        %s739 = sadd.s32 %s737, %s738
        %s740 = smul.addr %s739, 4
        %s741 = scalar_lea.vmem %s0, %s740
        %s742 = smul.u32 8, %s48
        %s743 = smul.u32 %s48, 8
        %s744 = ssub.s32 %s743, 1
        %p745 = scmp.gt.s32.totalorder %s744, 0
        %s746 = scalar_select %p745, %s744, 0
        %s747 = sadd.s32 %s48, 1
        %s748 = smul.u32 %s747, 8
        %p749 = scmp.lt.s32.totalorder %s748, 15
        %s750 = scalar_select %p749, %s748, 15
        %s751 = smul.u32 8, %s48
        %s753 = sld [smem:[#allocation8]]
        %s754 = sld [smem:[#allocation8 + $0x1]]
        %v755 = vld [vmem:[%s6] sm:$0x1]
        %v756 = vld [vmem:[%s7] sm:$0x1]
        %v757 = vld [vmem:[%s8] sm:$0x1]
        %v758 = vld [vmem:[%s9] sm:$0x1]
        %v759 = vld [vmem:[%s3] sm:$0xf]
        %v760 = vld [vmem:[%s3 + $0x4] sm:$0xf]
        %v761 = vld [vmem:[%s741] sm:$0xf]
        %v762 = vld [vmem:[%s741 + $0x4] sm:$0xf]
        %v763 = vld [vmem:[%s741 + $0x8] sm:$0xf]
        %v764 = vld [vmem:[%s741 + $0xc] sm:$0xf]
        %v765 = vld [vmem:[%s741 + $0x10] sm:$0xf]
        %v766 = vld [vmem:[%s741 + $0x14] sm:$0xf]
        %v767 = vld [vmem:[%s741 + $0x18] sm:$0xf]
        %v768 = vld [vmem:[%s741 + $0x1c] sm:$0xf]
        %v769 = vld [vmem:[%s741 + $0x20] sm:$0xf]
        %v770 = vld [vmem:[%s741 + $0x24] sm:$0xf]
        %v771 = vld [vmem:[%s741 + $0x28] sm:$0xf]
        %v772 = vld [vmem:[%s741 + $0x2c] sm:$0xf]
        %v773 = vld [vmem:[%s741 + $0x30] sm:$0xf]
        %v774 = vld [vmem:[%s741 + $0x34] sm:$0xf]
        %v775 = vld [vmem:[%s741 + $0x38] sm:$0xf]
        %v776 = vld [vmem:[%s741 + $0x3c] sm:$0xf]
        %v777 = vunpack.c.l.bf16 %v761
        %v778 = vunpack.c.l.bf16 %v762
        %v779 = vunpack.c.l.bf16 %v763
        %v780 = vunpack.c.l.bf16 %v764
        %v781 = vunpack.c.l.bf16 %v765
        %v782 = vunpack.c.l.bf16 %v766
        %v783 = vunpack.c.l.bf16 %v767
        %v784 = vunpack.c.l.bf16 %v768
        %v785 = vunpack.c.l.bf16 %v769
        %v786 = vunpack.c.l.bf16 %v770
        %v787 = vunpack.c.l.bf16 %v771
        %v788 = vunpack.c.l.bf16 %v772
        %v789 = vunpack.c.l.bf16 %v773
        %v790 = vunpack.c.l.bf16 %v774
        %v791 = vunpack.c.l.bf16 %v775
        %v792 = vunpack.c.l.bf16 %v776
        %v794 = vlaneseq
        %v795 = vshrl.u32 %v794, 7
        %v796 = vsub.s32 0, %v795
        %v797 = vrot.slane %v755, %v796
        %v799 = vmul.f32 %v777, %v797
        %v800 = vmul.f32 %v778, %v797
        %v801 = vmul.f32 %v779, %v797
        %v802 = vmul.f32 %v780, %v797
        %v803 = vmul.f32 %v781, %v797
        %v804 = vmul.f32 %v782, %v797
        %v805 = vmul.f32 %v783, %v797
        %v806 = vmul.f32 %v784, %v797
        %v807 = vmul.f32 %v785, %v797
        %v808 = vmul.f32 %v786, %v797
        %v809 = vmul.f32 %v787, %v797
        %v810 = vmul.f32 %v788, %v797
        %v811 = vmul.f32 %v789, %v797
        %v812 = vmul.f32 %v790, %v797
        %v813 = vmul.f32 %v791, %v797
        %v814 = vmul.f32 %v792, %v797
        %v816 = vlaneseq
        %v817 = vshrl.u32 %v816, 7
        %v818 = vsub.s32 0, %v817
        %v819 = vrot.slane %v756, %v818
        %v821 = vadd.f32 %v799, %v819
        %v822 = vadd.f32 %v800, %v819
        %v823 = vadd.f32 %v801, %v819
        %v824 = vadd.f32 %v802, %v819
        %v825 = vadd.f32 %v803, %v819
        %v826 = vadd.f32 %v804, %v819
        %v827 = vadd.f32 %v805, %v819
        %v828 = vadd.f32 %v806, %v819
        %v829 = vadd.f32 %v807, %v819
        %v830 = vadd.f32 %v808, %v819
        %v831 = vadd.f32 %v809, %v819
        %v832 = vadd.f32 %v810, %v819
        %v833 = vadd.f32 %v811, %v819
        %v834 = vadd.f32 %v812, %v819
        %v835 = vadd.f32 %v813, %v819
        %v836 = vadd.f32 %v814, %v819
        %v837 = vpack.c.bf16 %v822, %v821
        %v838 = vpack.c.bf16 %v824, %v823
        %v839 = vpack.c.bf16 %v826, %v825
        %v840 = vpack.c.bf16 %v828, %v827
        %v841 = vpack.c.bf16 %v830, %v829
        %v842 = vpack.c.bf16 %v832, %v831
        %v843 = vpack.c.bf16 %v834, %v833
        %v844 = vpack.c.bf16 %v836, %v835
        %v847 = vunpack.c.l.b16 %v759
        %v848 = vunpack.c.l.b16 %v760
        %v849 = vpack.c.b16 %v848, %v847
        %vm851 = vcmask 130048
        %v853 = vsel %vm851, %v837, 0
        %v856 = vsel %vm851, %v838, 0
        %v859 = vsel %vm851, %v839, 0
        %v862 = vsel %vm851, %v840, 0
        %v865 = vsel %vm851, %v841, 0
        %v868 = vsel %vm851, %v842, 0
        %v871 = vsel %vm851, %v843, 0
        %v874 = vsel %vm851, %v844, 0
        %876 = vmatprep.subr.bf16.mxu0 0
        %877 = vmatpush1.bf16.msra.mxu0 0
        %878 = vmatprep.subr.bf16.mxu0 0
        %879 = vmatpush1.bf16.msra.mxu0 0
        %880 = vmatprep.subr.bf16.mxu0 0
        %881 = vmatpush1.bf16.msra.mxu0 0
        %882 = vmatprep.subr.bf16.mxu0 0
        %883 = vmatpush1.bf16.msra.mxu0 0
        %884 = vmatprep.subr.bf16.mxu0 0
        %885 = vmatpush1.bf16.msra.mxu0 0
        %886 = vmatprep.subr.bf16.mxu0 0
        %887 = vmatpush1.bf16.msra.mxu0 0
        %888 = vmatprep.subr.bf16.mxu0 0
        %889 = vmatpush1.bf16.msra.mxu0 0
        %890 = vmatprep.subr.bf16.mxu0 0
        %891 = vmatpush1.bf16.msra.mxu0 %v849
        %892 = vmatprep.subr.bf16.mxu0 0
        %893 = vmatpush2.bf16.msra.mxu0 0
        %894 = vmatprep.subr.bf16.mxu0 0
        %895 = vmatpush2.bf16.msra.mxu0 0
        %896 = vmatprep.subr.bf16.mxu0 0
        %897 = vmatpush2.bf16.msra.mxu0 0
        %898 = vmatprep.subr.bf16.mxu0 0
        %899 = vmatpush2.bf16.msra.mxu0 0
        %900 = vmatprep.subr.bf16.mxu0 0
        %901 = vmatpush2.bf16.msra.mxu0 0
        %902 = vmatprep.subr.bf16.mxu0 0
        %903 = vmatpush2.bf16.msra.mxu0 0
        %904 = vmatprep.subr.bf16.mxu0 0
        %905 = vmatpush2.bf16.msra.mxu0 0
        %906 = vmatprep.subr.bf16.mxu0 0
        %907 = vmatpush2.bf16.msra.mxu0 0
        %908 = vmatprep.mubr.bf16.mxu0 0
        %909 = vmatmul.mubr.bf16.gmra.mxu0 %v853
        %v910 = vpop.f32.mrf.mxu0
        %v911 = vadd.f32 0.0, %v910
        %v912 = vpop.f32.mrf.mxu0
        %v913 = vpop.f32.mrf.mxu0
        %v914 = vadd.f32 0.0, %v913
        %v915 = vpop.f32.mrf.mxu0
        %916 = vmatprep.mubr.bf16.mxu0 0
        %917 = vmatmul.mubr.bf16.gmra.mxu0 %v856
        %v918 = vpop.f32.mrf.mxu0
        %v919 = vadd.f32 0.0, %v918
        %v920 = vpop.f32.mrf.mxu0
        %v921 = vpop.f32.mrf.mxu0
        %v922 = vadd.f32 0.0, %v921
        %v923 = vpop.f32.mrf.mxu0
        %924 = vmatprep.mubr.bf16.mxu0 0
        %925 = vmatmul.mubr.bf16.gmra.mxu0 %v859
        %v926 = vpop.f32.mrf.mxu0
        %v927 = vadd.f32 0.0, %v926
        %v928 = vpop.f32.mrf.mxu0
        %v929 = vpop.f32.mrf.mxu0
        %v930 = vadd.f32 0.0, %v929
        %v931 = vpop.f32.mrf.mxu0
        %932 = vmatprep.mubr.bf16.mxu0 0
        %933 = vmatmul.mubr.bf16.gmra.mxu0 %v862
        %v934 = vpop.f32.mrf.mxu0
        %v935 = vadd.f32 0.0, %v934
        %v936 = vpop.f32.mrf.mxu0
        %v937 = vpop.f32.mrf.mxu0
        %v938 = vadd.f32 0.0, %v937
        %v939 = vpop.f32.mrf.mxu0
        %940 = vmatprep.mubr.bf16.mxu0 0
        %941 = vmatmul.mubr.bf16.gmra.mxu0 %v865
        %v942 = vpop.f32.mrf.mxu0
        %v943 = vadd.f32 0.0, %v942
        %v944 = vpop.f32.mrf.mxu0
        %v945 = vpop.f32.mrf.mxu0
        %v946 = vadd.f32 0.0, %v945
        %v947 = vpop.f32.mrf.mxu0
        %948 = vmatprep.mubr.bf16.mxu0 0
        %949 = vmatmul.mubr.bf16.gmra.mxu0 %v868
        %v950 = vpop.f32.mrf.mxu0
        %v951 = vadd.f32 0.0, %v950
        %v952 = vpop.f32.mrf.mxu0
        %v953 = vpop.f32.mrf.mxu0
        %v954 = vadd.f32 0.0, %v953
        %v955 = vpop.f32.mrf.mxu0
        %956 = vmatprep.mubr.bf16.mxu0 0
        %957 = vmatmul.mubr.bf16.gmra.mxu0 %v871
        %v958 = vpop.f32.mrf.mxu0
        %v959 = vadd.f32 0.0, %v958
        %v960 = vpop.f32.mrf.mxu0
        %v961 = vpop.f32.mrf.mxu0
        %v962 = vadd.f32 0.0, %v961
        %v963 = vpop.f32.mrf.mxu0
        %964 = vmatprep.mubr.bf16.mxu0 0
        %965 = vmatmul.mubr.bf16.gmra.mxu0 %v874
        %v966 = vpop.f32.mrf.mxu0
        %v967 = vadd.f32 0.0, %v966
        %v968 = vpop.f32.mrf.mxu0
        %v969 = vpop.f32.mrf.mxu0
        %v970 = vadd.f32 0.0, %v969
        %v971 = vpop.f32.mrf.mxu0
        %972 = vdwg.mxu0
        %v974 = vlaneseq
        %v975 = vshrl.u32 %v974, 7
        %v976 = vsub.s32 0, %v975
        %v977 = vrot.slane %v757, %v976
        %v979 = vmul.f32 %v911, %v977
        %v980 = vmul.f32 %v914, %v977
        %v981 = vmul.f32 %v919, %v977
        %v982 = vmul.f32 %v922, %v977
        %v983 = vmul.f32 %v927, %v977
        %v984 = vmul.f32 %v930, %v977
        %v985 = vmul.f32 %v935, %v977
        %v986 = vmul.f32 %v938, %v977
        %v987 = vmul.f32 %v943, %v977
        %v988 = vmul.f32 %v946, %v977
        %v989 = vmul.f32 %v951, %v977
        %v990 = vmul.f32 %v954, %v977
        %v991 = vmul.f32 %v959, %v977
        %v992 = vmul.f32 %v962, %v977
        %v993 = vmul.f32 %v967, %v977
        %v994 = vmul.f32 %v970, %v977
        %v996 = vlaneseq
        %v997 = vshrl.u32 %v996, 7
        %v998 = vsub.s32 0, %v997
        %v999 = vrot.slane %v758, %v998
        %v1001 = vadd.f32 %v979, %v999
        %v1002 = vadd.f32 %v980, %v999
        %v1003 = vadd.f32 %v981, %v999
        %v1004 = vadd.f32 %v982, %v999
        %v1005 = vadd.f32 %v983, %v999
        %v1006 = vadd.f32 %v984, %v999
        %v1007 = vadd.f32 %v985, %v999
        %v1008 = vadd.f32 %v986, %v999
        %v1009 = vadd.f32 %v987, %v999
        %v1010 = vadd.f32 %v988, %v999
        %v1011 = vadd.f32 %v989, %v999
        %v1012 = vadd.f32 %v990, %v999
        %v1013 = vadd.f32 %v991, %v999
        %v1014 = vadd.f32 %v992, %v999
        %v1015 = vadd.f32 %v993, %v999
        %v1016 = vadd.f32 %v994, %v999
        %vm1017 = vcmp.ge.f32.partialorder %v1001, 0.0
        %vm1018 = vcmp.ge.f32.partialorder %v1002, 0.0
        %vm1019 = vcmp.ge.f32.partialorder %v1003, 0.0
        %vm1020 = vcmp.ge.f32.partialorder %v1004, 0.0
        %vm1021 = vcmp.ge.f32.partialorder %v1005, 0.0
        %vm1022 = vcmp.ge.f32.partialorder %v1006, 0.0
        %vm1023 = vcmp.ge.f32.partialorder %v1007, 0.0
        %vm1024 = vcmp.ge.f32.partialorder %v1008, 0.0
        %vm1025 = vcmp.ge.f32.partialorder %v1009, 0.0
        %vm1026 = vcmp.ge.f32.partialorder %v1010, 0.0
        %vm1027 = vcmp.ge.f32.partialorder %v1011, 0.0
        %vm1028 = vcmp.ge.f32.partialorder %v1012, 0.0
        %vm1029 = vcmp.ge.f32.partialorder %v1013, 0.0
        %vm1030 = vcmp.ge.f32.partialorder %v1014, 0.0
        %vm1031 = vcmp.ge.f32.partialorder %v1015, 0.0
        %vm1032 = vcmp.ge.f32.partialorder %v1016, 0.0
        %v1033 = vstv %s753
        %v1034 = vmul.f32 %v1033, %v1001
        %v1035 = vmul.f32 %v1033, %v1002
        %v1036 = vmul.f32 %v1033, %v1003
        %v1037 = vmul.f32 %v1033, %v1004
        %v1038 = vmul.f32 %v1033, %v1005
        %v1039 = vmul.f32 %v1033, %v1006
        %v1040 = vmul.f32 %v1033, %v1007
        %v1041 = vmul.f32 %v1033, %v1008
        %v1042 = vmul.f32 %v1033, %v1009
        %v1043 = vmul.f32 %v1033, %v1010
        %v1044 = vmul.f32 %v1033, %v1011
        %v1045 = vmul.f32 %v1033, %v1012
        %v1046 = vmul.f32 %v1033, %v1013
        %v1047 = vmul.f32 %v1033, %v1014
        %v1048 = vmul.f32 %v1033, %v1015
        %v1049 = vmul.f32 %v1033, %v1016
        %v1050 = vsel %vm1017, %v1001, %v1034
        %v1051 = vsel %vm1018, %v1002, %v1035
        %v1052 = vsel %vm1019, %v1003, %v1036
        %v1053 = vsel %vm1020, %v1004, %v1037
        %v1054 = vsel %vm1021, %v1005, %v1038
        %v1055 = vsel %vm1022, %v1006, %v1039
        %v1056 = vsel %vm1023, %v1007, %v1040
        %v1057 = vsel %vm1024, %v1008, %v1041
        %v1058 = vsel %vm1025, %v1009, %v1042
        %v1059 = vsel %vm1026, %v1010, %v1043
        %v1060 = vsel %vm1027, %v1011, %v1044
        %v1061 = vsel %vm1028, %v1012, %v1045
        %v1062 = vsel %vm1029, %v1013, %v1046
        %v1063 = vsel %vm1030, %v1014, %v1047
        %v1064 = vsel %vm1031, %v1015, %v1048
        %v1065 = vsel %vm1032, %v1016, %v1049
        %v1066 = vld [vmem:[%s646] sm:$0xf]
        %v1067 = vld [vmem:[%s646 + $0x4] sm:$0xf]
        %v1068 = vunpack.c.l.bf16 %v1066
        %v1069 = vunpack.c.l.bf16 %v1067
        %v1070 = vmul.f32 %v1068, %v797
        %v1071 = vmul.f32 %v1069, %v797
        %v1072 = vadd.f32 %v1070, %v819
        %v1073 = vadd.f32 %v1071, %v819
        %v1074 = vpack.c.bf16 %v1073, %v1072
        %v1076 = vsel %vm851, %v1074, 0
        %1078 = vmatprep.subr.bf16.mxu0 0
        %1079 = vmatpush1.bf16.msra.mxu0 0
        %1080 = vmatprep.subr.bf16.mxu0 0
        %1081 = vmatpush1.bf16.msra.mxu0 0
        %1082 = vmatprep.subr.bf16.mxu0 0
        %1083 = vmatpush1.bf16.msra.mxu0 0
        %1084 = vmatprep.subr.bf16.mxu0 0
        %1085 = vmatpush1.bf16.msra.mxu0 0
        %1086 = vmatprep.subr.bf16.mxu0 0
        %1087 = vmatpush1.bf16.msra.mxu0 0
        %1088 = vmatprep.subr.bf16.mxu0 0
        %1089 = vmatpush1.bf16.msra.mxu0 0
        %1090 = vmatprep.subr.bf16.mxu0 0
        %1091 = vmatpush1.bf16.msra.mxu0 0
        %1092 = vmatprep.subr.bf16.mxu0 0
        %1093 = vmatpush1.bf16.msra.mxu0 %v849
        %1094 = vmatprep.subr.bf16.mxu0 0
        %1095 = vmatpush2.bf16.msra.mxu0 0
        %1096 = vmatprep.subr.bf16.mxu0 0
        %1097 = vmatpush2.bf16.msra.mxu0 0
        %1098 = vmatprep.subr.bf16.mxu0 0
        %1099 = vmatpush2.bf16.msra.mxu0 0
        %1100 = vmatprep.subr.bf16.mxu0 0
        %1101 = vmatpush2.bf16.msra.mxu0 0
        %1102 = vmatprep.subr.bf16.mxu0 0
        %1103 = vmatpush2.bf16.msra.mxu0 0
        %1104 = vmatprep.subr.bf16.mxu0 0
        %1105 = vmatpush2.bf16.msra.mxu0 0
        %1106 = vmatprep.subr.bf16.mxu0 0
        %1107 = vmatpush2.bf16.msra.mxu0 0
        %1108 = vmatprep.subr.bf16.mxu0 0
        %1109 = vmatpush2.bf16.msra.mxu0 0
        %1110 = vmatprep.mubr.bf16.mxu0 0
        %1111 = vmatmul.mubr.bf16.gmra.mxu0 %v1076
        %v1112 = vpop.f32.mrf.mxu0
        %v1113 = vadd.f32 0.0, %v1112
        %v1114 = vpop.f32.mrf.mxu0
        %v1115 = vpop.f32.mrf.mxu0
        %v1116 = vadd.f32 0.0, %v1115
        %v1117 = vpop.f32.mrf.mxu0
        %1118 = vdwg.mxu0
        %v1119 = vmul.f32 %v1113, %v977
        %v1120 = vmul.f32 %v1116, %v977
        %v1121 = vadd.f32 %v1119, %v999
        %v1122 = vadd.f32 %v1120, %v999
        %vm1123 = vcmp.ge.f32.partialorder %v1121, 0.0
        %vm1124 = vcmp.ge.f32.partialorder %v1122, 0.0
        %v1125 = vmul.f32 %v1033, %v1121
        %v1126 = vmul.f32 %v1033, %v1122
        %v1127 = vsel %vm1123, %v1121, %v1125
        %v1128 = vsel %vm1124, %v1122, %v1126
        %v1129 = vld [vmem:[%s655] sm:$0xf]
        %v1130 = vld [vmem:[%s655 + $0x4] sm:$0xf]
        %v1131 = vunpack.c.l.bf16 %v1129
        %v1132 = vunpack.c.l.bf16 %v1130
        %v1133 = vmul.f32 %v1131, %v797
        %v1134 = vmul.f32 %v1132, %v797
        %v1135 = vadd.f32 %v1133, %v819
        %v1136 = vadd.f32 %v1134, %v819
        %v1137 = vpack.c.bf16 %v1136, %v1135
        %v1139 = vsel %vm851, %v1137, 0
        %1141 = vmatprep.subr.bf16.mxu0 0
        %1142 = vmatpush1.bf16.msra.mxu0 0
        %1143 = vmatprep.subr.bf16.mxu0 0
        %1144 = vmatpush1.bf16.msra.mxu0 0
        %1145 = vmatprep.subr.bf16.mxu0 0
        %1146 = vmatpush1.bf16.msra.mxu0 0
        %1147 = vmatprep.subr.bf16.mxu0 0
        %1148 = vmatpush1.bf16.msra.mxu0 0
        %1149 = vmatprep.subr.bf16.mxu0 0
        %1150 = vmatpush1.bf16.msra.mxu0 0
        %1151 = vmatprep.subr.bf16.mxu0 0
        %1152 = vmatpush1.bf16.msra.mxu0 0
        %1153 = vmatprep.subr.bf16.mxu0 0
        %1154 = vmatpush1.bf16.msra.mxu0 0
        %1155 = vmatprep.subr.bf16.mxu0 0
        %1156 = vmatpush1.bf16.msra.mxu0 %v849
        %1157 = vmatprep.subr.bf16.mxu0 0
        %1158 = vmatpush2.bf16.msra.mxu0 0
        %1159 = vmatprep.subr.bf16.mxu0 0
        %1160 = vmatpush2.bf16.msra.mxu0 0
        %1161 = vmatprep.subr.bf16.mxu0 0
        %1162 = vmatpush2.bf16.msra.mxu0 0
        %1163 = vmatprep.subr.bf16.mxu0 0
        %1164 = vmatpush2.bf16.msra.mxu0 0
        %1165 = vmatprep.subr.bf16.mxu0 0
        %1166 = vmatpush2.bf16.msra.mxu0 0
        %1167 = vmatprep.subr.bf16.mxu0 0
        %1168 = vmatpush2.bf16.msra.mxu0 0
        %1169 = vmatprep.subr.bf16.mxu0 0
        %1170 = vmatpush2.bf16.msra.mxu0 0
        %1171 = vmatprep.subr.bf16.mxu0 0
        %1172 = vmatpush2.bf16.msra.mxu0 0
        %1173 = vmatprep.mubr.bf16.mxu0 0
        %1174 = vmatmul.mubr.bf16.gmra.mxu0 %v1139
        %v1175 = vpop.f32.mrf.mxu0
        %v1176 = vadd.f32 0.0, %v1175
        %v1177 = vpop.f32.mrf.mxu0
        %v1178 = vpop.f32.mrf.mxu0
        %v1179 = vadd.f32 0.0, %v1178
        %v1180 = vpop.f32.mrf.mxu0
        %1181 = vdwg.mxu0
        %v1182 = vmul.f32 %v1176, %v977
        %v1183 = vmul.f32 %v1179, %v977
        %v1184 = vadd.f32 %v1182, %v999
        %v1185 = vadd.f32 %v1183, %v999
        %vm1186 = vcmp.ge.f32.partialorder %v1184, 0.0
        %vm1187 = vcmp.ge.f32.partialorder %v1185, 0.0
        %v1188 = vmul.f32 %v1033, %v1184
        %v1189 = vmul.f32 %v1033, %v1185
        %v1190 = vsel %vm1186, %v1184, %v1188
        %v1191 = vsel %vm1187, %v1185, %v1189
        %p1192 = scmp.gt.s32.totalorder %s48, 0
        %s1193 = scalar_select %p1192, 1, 0
        %s1194 = scvt.s32.f32 %s1193
        %v1195 = vstv %s1194
        %v1196 = vmul.f32 %v1127, %v1195
        %v1197 = vmul.f32 %v1128, %v1195
        %p1198 = scmp.lt.s32.totalorder %s48, 1
        %s1199 = scalar_select %p1198, 1, 0
        %s1200 = scvt.s32.f32 %s1199
        %v1201 = vstv %s1200
        %v1202 = vmul.f32 %v1190, %v1201
        %v1203 = vmul.f32 %v1191, %v1201
        %v1204 = vld [vmem:[%s14] sm:$0xff]
        %v1205 = vld [vmem:[%s14 + $0x8] sm:$0xff]
        %v1206 = vld [vmem:[%s14 + $0x10] sm:$0xff]
        %v1207 = vld [vmem:[%s14 + $0x18] sm:$0xff]
        %v1208 = vld [vmem:[%s14 + $0x20] sm:$0xff]
        %v1209 = vld [vmem:[%s14 + $0x28] sm:$0xff]
        %v1210 = vld [vmem:[%s14 + $0x30] sm:$0xff]
        %v1211 = vld [vmem:[%s14 + $0x38] sm:$0xff]
        %v1212 = vld [vmem:[%s14 + $0x40] sm:$0xff]
        %v1213 = vld [vmem:[%s14 + $0x48] sm:$0xff]
        %v1214 = vld [vmem:[%s14 + $0x50] sm:$0xff]
        %v1215 = vld [vmem:[%s14 + $0x58] sm:$0xff]
        %v1216 = vld [vmem:[%s14 + $0x60] sm:$0xff]
        %v1217 = vld [vmem:[%s14 + $0x68] sm:$0xff]
        %v1218 = vld [vmem:[%s14 + $0x70] sm:$0xff]
        %v1219 = vld [vmem:[%s14 + $0x78] sm:$0xff]
        %v1220 = vld [vmem:[%s14 + $0x80] sm:$0xff]
        %v1221 = vld [vmem:[%s14 + $0x88] sm:$0xff]
        %v1222 = vld [vmem:[%s14 + $0x90] sm:$0xff]
        %v1223 = vld [vmem:[%s14 + $0x98] sm:$0xff]
        %v1224 = vrot.slane %v1196, 7
        %v1225 = vrot.slane %v1197, 7
        %v1226 = vrot.slane %v1050, 7
        %v1227 = vrot.slane %v1051, 7
        %v1228 = vrot.slane %v1052, 7
        %v1229 = vrot.slane %v1053, 7
        %v1230 = vrot.slane %v1054, 7
        %v1231 = vrot.slane %v1055, 7
        %v1232 = vrot.slane %v1056, 7
        %v1233 = vrot.slane %v1057, 7
        %v1234 = vrot.slane %v1058, 7
        %v1235 = vrot.slane %v1059, 7
        %v1236 = vrot.slane %v1060, 7
        %v1237 = vrot.slane %v1061, 7
        %v1238 = vrot.slane %v1062, 7
        %v1239 = vrot.slane %v1063, 7
        %v1240 = vrot.slane %v1064, 7
        %v1241 = vrot.slane %v1065, 7
        %v1242 = vrot.slane %v1202, 7
        %v1243 = vrot.slane %v1203, 7
        %v1244 = vlaneseq
        %v1245 = vshrl.u32 %v1244, 7
        %vm1246 = vcmp.lt.s32.totalorder %v1245, 1
        %v1247 = vsel %vm1246, %v1242, %v1243
        %v1248 = vsel %vm1246, %v1241, %v1242
        %v1249 = vsel %vm1246, %v1240, %v1241
        %v1250 = vsel %vm1246, %v1239, %v1240
        %v1251 = vsel %vm1246, %v1238, %v1239
        %v1252 = vsel %vm1246, %v1237, %v1238
        %v1253 = vsel %vm1246, %v1236, %v1237
        %v1254 = vsel %vm1246, %v1235, %v1236
        %v1255 = vsel %vm1246, %v1234, %v1235
        %v1256 = vsel %vm1246, %v1233, %v1234
        %v1257 = vsel %vm1246, %v1232, %v1233
        %v1258 = vsel %vm1246, %v1231, %v1232
        %v1259 = vsel %vm1246, %v1230, %v1231
        %v1260 = vsel %vm1246, %v1229, %v1230
        %v1261 = vsel %vm1246, %v1228, %v1229
        %v1262 = vsel %vm1246, %v1227, %v1228
        %v1263 = vsel %vm1246, %v1226, %v1227
        %v1264 = vsel %vm1246, %v1225, %v1226
        %v1265 = vsel %vm1246, %v1224, %v1225
        %v1266 = vsel %vm1246, %v1243, %v1224
        %1268 = vset.pattern.permute.xlu0 0
        %1269 = vperm.xlu0 %1268, %v1204
        %v1270 = vpop.permute.xlu0 %1269
        %1273 = vset.pattern.permute.xlu0 0
        %1274 = vperm.xlu0 %1273, %v1205
        %v1275 = vpop.permute.xlu0 %1274
        %1278 = vset.pattern.permute.xlu0 0
        %1279 = vperm.xlu0 %1278, %v1206
        %v1280 = vpop.permute.xlu0 %1279
        %1283 = vset.pattern.permute.xlu0 0
        %1284 = vperm.xlu0 %1283, %v1207
        %v1285 = vpop.permute.xlu0 %1284
        %1288 = vset.pattern.permute.xlu0 0
        %1289 = vperm.xlu0 %1288, %v1208
        %v1290 = vpop.permute.xlu0 %1289
        %1293 = vset.pattern.permute.xlu0 0
        %1294 = vperm.xlu0 %1293, %v1209
        %v1295 = vpop.permute.xlu0 %1294
        %1298 = vset.pattern.permute.xlu0 0
        %1299 = vperm.xlu0 %1298, %v1210
        %v1300 = vpop.permute.xlu0 %1299
        %1303 = vset.pattern.permute.xlu0 0
        %1304 = vperm.xlu0 %1303, %v1211
        %v1305 = vpop.permute.xlu0 %1304
        %1308 = vset.pattern.permute.xlu0 0
        %1309 = vperm.xlu0 %1308, %v1212
        %v1310 = vpop.permute.xlu0 %1309
        %1313 = vset.pattern.permute.xlu0 0
        %1314 = vperm.xlu0 %1313, %v1213
        %v1315 = vpop.permute.xlu0 %1314
        %1318 = vset.pattern.permute.xlu0 0
        %1319 = vperm.xlu0 %1318, %v1214
        %v1320 = vpop.permute.xlu0 %1319
        %1323 = vset.pattern.permute.xlu0 0
        %1324 = vperm.xlu0 %1323, %v1215
        %v1325 = vpop.permute.xlu0 %1324
        %1328 = vset.pattern.permute.xlu0 0
        %1329 = vperm.xlu0 %1328, %v1216
        %v1330 = vpop.permute.xlu0 %1329
        %1333 = vset.pattern.permute.xlu0 0
        %1334 = vperm.xlu0 %1333, %v1217
        %v1335 = vpop.permute.xlu0 %1334
        %1338 = vset.pattern.permute.xlu0 0
        %1339 = vperm.xlu0 %1338, %v1218
        %v1340 = vpop.permute.xlu0 %1339
        %1343 = vset.pattern.permute.xlu0 0
        %1344 = vperm.xlu0 %1343, %v1219
        %v1345 = vpop.permute.xlu0 %1344
        %1348 = vset.pattern.permute.xlu0 0
        %1349 = vperm.xlu0 %1348, %v1220
        %v1350 = vpop.permute.xlu0 %1349
        %1353 = vset.pattern.permute.xlu0 0
        %1354 = vperm.xlu0 %1353, %v1221
        %v1355 = vpop.permute.xlu0 %1354
        %1358 = vset.pattern.permute.xlu0 0
        %1359 = vperm.xlu0 %1358, %v1222
        %v1360 = vpop.permute.xlu0 %1359
        %1363 = vset.pattern.permute.xlu0 0
        %1364 = vperm.xlu0 %1363, %v1223
        %v1365 = vpop.permute.xlu0 %1364
        %v1367 = vmul.f32 %v1270, %v1266
        %v1368 = vmul.f32 %v1275, %v1265
        %v1369 = vmul.f32 %v1280, %v1264
        %v1370 = vmul.f32 %v1285, %v1263
        %v1371 = vmul.f32 %v1290, %v1262
        %v1372 = vmul.f32 %v1295, %v1261
        %v1373 = vmul.f32 %v1300, %v1260
        %v1374 = vmul.f32 %v1305, %v1259
        %v1375 = vmul.f32 %v1310, %v1258
        %v1376 = vmul.f32 %v1315, %v1257
        %v1377 = vmul.f32 %v1320, %v1256
        %v1378 = vmul.f32 %v1325, %v1255
        %v1379 = vmul.f32 %v1330, %v1254
        %v1380 = vmul.f32 %v1335, %v1253
        %v1381 = vmul.f32 %v1340, %v1252
        %v1382 = vmul.f32 %v1345, %v1251
        %v1383 = vmul.f32 %v1350, %v1250
        %v1384 = vmul.f32 %v1355, %v1249
        %v1385 = vmul.f32 %v1360, %v1248
        %v1386 = vmul.f32 %v1365, %v1247
        %v1387 = vld [vmem:[%s15] sm:$0xff]
        %v1388 = vld [vmem:[%s15 + $0x8] sm:$0xff]
        %v1389 = vld [vmem:[%s15 + $0x10] sm:$0xff]
        %v1390 = vld [vmem:[%s15 + $0x18] sm:$0xff]
        %v1391 = vld [vmem:[%s15 + $0x20] sm:$0xff]
        %v1392 = vld [vmem:[%s15 + $0x28] sm:$0xff]
        %v1393 = vld [vmem:[%s15 + $0x30] sm:$0xff]
        %v1394 = vld [vmem:[%s15 + $0x38] sm:$0xff]
        %v1395 = vld [vmem:[%s15 + $0x40] sm:$0xff]
        %v1396 = vld [vmem:[%s15 + $0x48] sm:$0xff]
        %v1397 = vld [vmem:[%s15 + $0x50] sm:$0xff]
        %v1398 = vld [vmem:[%s15 + $0x58] sm:$0xff]
        %v1399 = vld [vmem:[%s15 + $0x60] sm:$0xff]
        %v1400 = vld [vmem:[%s15 + $0x68] sm:$0xff]
        %v1401 = vld [vmem:[%s15 + $0x70] sm:$0xff]
        %v1402 = vld [vmem:[%s15 + $0x78] sm:$0xff]
        %v1403 = vld [vmem:[%s15 + $0x80] sm:$0xff]
        %v1404 = vld [vmem:[%s15 + $0x88] sm:$0xff]
        %v1405 = vld [vmem:[%s15 + $0x90] sm:$0xff]
        %v1406 = vld [vmem:[%s15 + $0x98] sm:$0xff]
        %v1407 = vrot.slane %v1196, 1
        %v1408 = vrot.slane %v1197, 1
        %v1409 = vrot.slane %v1050, 1
        %v1410 = vrot.slane %v1051, 1
        %v1411 = vrot.slane %v1052, 1
        %v1412 = vrot.slane %v1053, 1
        %v1413 = vrot.slane %v1054, 1
        %v1414 = vrot.slane %v1055, 1
        %v1415 = vrot.slane %v1056, 1
        %v1416 = vrot.slane %v1057, 1
        %v1417 = vrot.slane %v1058, 1
        %v1418 = vrot.slane %v1059, 1
        %v1419 = vrot.slane %v1060, 1
        %v1420 = vrot.slane %v1061, 1
        %v1421 = vrot.slane %v1062, 1
        %v1422 = vrot.slane %v1063, 1
        %v1423 = vrot.slane %v1064, 1
        %v1424 = vrot.slane %v1065, 1
        %v1425 = vrot.slane %v1202, 1
        %v1426 = vrot.slane %v1203, 1
        %vm1427 = vcmp.lt.s32.totalorder %v1245, 7
        %v1428 = vsel %vm1427, %v1425, %v1426
        %v1429 = vsel %vm1427, %v1424, %v1425
        %v1430 = vsel %vm1427, %v1423, %v1424
        %v1431 = vsel %vm1427, %v1422, %v1423
        %v1432 = vsel %vm1427, %v1421, %v1422
        %v1433 = vsel %vm1427, %v1420, %v1421
        %v1434 = vsel %vm1427, %v1419, %v1420
        %v1435 = vsel %vm1427, %v1418, %v1419
        %v1436 = vsel %vm1427, %v1417, %v1418
        %v1437 = vsel %vm1427, %v1416, %v1417
        %v1438 = vsel %vm1427, %v1415, %v1416
        %v1439 = vsel %vm1427, %v1414, %v1415
        %v1440 = vsel %vm1427, %v1413, %v1414
        %v1441 = vsel %vm1427, %v1412, %v1413
        %v1442 = vsel %vm1427, %v1411, %v1412
        %v1443 = vsel %vm1427, %v1410, %v1411
        %v1444 = vsel %vm1427, %v1409, %v1410
        %v1445 = vsel %vm1427, %v1408, %v1409
        %v1446 = vsel %vm1427, %v1407, %v1408
        %v1447 = vsel %vm1427, %v1426, %v1407
        %1449 = vset.pattern.permute.xlu0 0
        %1450 = vperm.xlu0 %1449, %v1387
        %v1451 = vpop.permute.xlu0 %1450
        %1454 = vset.pattern.permute.xlu0 0
        %1455 = vperm.xlu0 %1454, %v1388
        %v1456 = vpop.permute.xlu0 %1455
        %1459 = vset.pattern.permute.xlu0 0
        %1460 = vperm.xlu0 %1459, %v1389
        %v1461 = vpop.permute.xlu0 %1460
        %1464 = vset.pattern.permute.xlu0 0
        %1465 = vperm.xlu0 %1464, %v1390
        %v1466 = vpop.permute.xlu0 %1465
        %1469 = vset.pattern.permute.xlu0 0
        %1470 = vperm.xlu0 %1469, %v1391
        %v1471 = vpop.permute.xlu0 %1470
        %1474 = vset.pattern.permute.xlu0 0
        %1475 = vperm.xlu0 %1474, %v1392
        %v1476 = vpop.permute.xlu0 %1475
        %1479 = vset.pattern.permute.xlu0 0
        %1480 = vperm.xlu0 %1479, %v1393
        %v1481 = vpop.permute.xlu0 %1480
        %1484 = vset.pattern.permute.xlu0 0
        %1485 = vperm.xlu0 %1484, %v1394
        %v1486 = vpop.permute.xlu0 %1485
        %1489 = vset.pattern.permute.xlu0 0
        %1490 = vperm.xlu0 %1489, %v1395
        %v1491 = vpop.permute.xlu0 %1490
        %1494 = vset.pattern.permute.xlu0 0
        %1495 = vperm.xlu0 %1494, %v1396
        %v1496 = vpop.permute.xlu0 %1495
        %1499 = vset.pattern.permute.xlu0 0
        %1500 = vperm.xlu0 %1499, %v1397
        %v1501 = vpop.permute.xlu0 %1500
        %1504 = vset.pattern.permute.xlu0 0
        %1505 = vperm.xlu0 %1504, %v1398
        %v1506 = vpop.permute.xlu0 %1505
        %1509 = vset.pattern.permute.xlu0 0
        %1510 = vperm.xlu0 %1509, %v1399
        %v1511 = vpop.permute.xlu0 %1510
        %1514 = vset.pattern.permute.xlu0 0
        %1515 = vperm.xlu0 %1514, %v1400
        %v1516 = vpop.permute.xlu0 %1515
        %1519 = vset.pattern.permute.xlu0 0
        %1520 = vperm.xlu0 %1519, %v1401
        %v1521 = vpop.permute.xlu0 %1520
        %1524 = vset.pattern.permute.xlu0 0
        %1525 = vperm.xlu0 %1524, %v1402
        %v1526 = vpop.permute.xlu0 %1525
        %1529 = vset.pattern.permute.xlu0 0
        %1530 = vperm.xlu0 %1529, %v1403
        %v1531 = vpop.permute.xlu0 %1530
        %1534 = vset.pattern.permute.xlu0 0
        %1535 = vperm.xlu0 %1534, %v1404
        %v1536 = vpop.permute.xlu0 %1535
        %1539 = vset.pattern.permute.xlu0 0
        %1540 = vperm.xlu0 %1539, %v1405
        %v1541 = vpop.permute.xlu0 %1540
        %1544 = vset.pattern.permute.xlu0 0
        %1545 = vperm.xlu0 %1544, %v1406
        %v1546 = vpop.permute.xlu0 %1545
        %v1548 = vmul.f32 %v1451, %v1446
        %v1549 = vmul.f32 %v1456, %v1445
        %v1550 = vmul.f32 %v1461, %v1444
        %v1551 = vmul.f32 %v1466, %v1443
        %v1552 = vmul.f32 %v1471, %v1442
        %v1553 = vmul.f32 %v1476, %v1441
        %v1554 = vmul.f32 %v1481, %v1440
        %v1555 = vmul.f32 %v1486, %v1439
        %v1556 = vmul.f32 %v1491, %v1438
        %v1557 = vmul.f32 %v1496, %v1437
        %v1558 = vmul.f32 %v1501, %v1436
        %v1559 = vmul.f32 %v1506, %v1435
        %v1560 = vmul.f32 %v1511, %v1434
        %v1561 = vmul.f32 %v1516, %v1433
        %v1562 = vmul.f32 %v1521, %v1432
        %v1563 = vmul.f32 %v1526, %v1431
        %v1564 = vmul.f32 %v1531, %v1430
        %v1565 = vmul.f32 %v1536, %v1429
        %v1566 = vmul.f32 %v1541, %v1428
        %v1567 = vmul.f32 %v1546, %v1447
        %v1568 = vld [vmem:[%s4] sm:$0x3]
        %v1569 = vld [vmem:[%s4 + $0x2] sm:$0x3]
        %v1570 = vld [vmem:[%s4 + $0x4] sm:$0x3]
        %v1571 = vld [vmem:[%s4 + $0x6] sm:$0x3]
        %v1572 = vld [vmem:[%s4 + $0x8] sm:$0x3]
        %v1573 = vld [vmem:[%s4 + $0xa] sm:$0x3]
        %v1574 = vld [vmem:[%s4 + $0xc] sm:$0x3]
        %v1575 = vld [vmem:[%s4 + $0xe] sm:$0x3]
        %v1576 = vld [vmem:[%s4 + $0x10] sm:$0x3]
        %v1577 = vpack.c.bf16 %v1368, %v1367
        %v1578 = vpack.c.bf16 %v1370, %v1369
        %v1579 = vpack.c.bf16 %v1372, %v1371
        %v1580 = vpack.c.bf16 %v1374, %v1373
        %v1581 = vpack.c.bf16 %v1376, %v1375
        %v1582 = vpack.c.bf16 %v1378, %v1377
        %v1583 = vpack.c.bf16 %v1380, %v1379
        %v1584 = vpack.c.bf16 %v1382, %v1381
        %v1585 = vpack.c.bf16 %v1197, %v1196
        %v1586 = vpack.c.bf16 %v1051, %v1050
        %v1587 = vpack.c.bf16 %v1053, %v1052
        %v1588 = vpack.c.bf16 %v1055, %v1054
        %v1589 = vpack.c.bf16 %v1057, %v1056
        %v1590 = vpack.c.bf16 %v1059, %v1058
        %v1591 = vpack.c.bf16 %v1061, %v1060
        %v1592 = vpack.c.bf16 %v1063, %v1062
        %vm1593 = vcmask 31744
        %v1595 = vsel %vm1593, %v1585, 0
        %v1598 = vsel %vm1593, %v1586, 0
        %v1601 = vsel %vm1593, %v1587, 0
        %v1604 = vsel %vm1593, %v1588, 0
        %v1607 = vsel %vm1593, %v1589, 0
        %v1610 = vsel %vm1593, %v1590, 0
        %v1613 = vsel %vm1593, %v1591, 0
        %v1616 = vsel %vm1593, %v1592, 0
        %vm1618 = vcmask 1041408
        %v1620 = vsel %vm1618, %v1569, 0
        %1622 = vmatprep.subr.bf16.mxu0 0
        %1623 = vmatpush1.bf16.msra.mxu0 0
        %1624 = vmatprep.subr.bf16.mxu0 0
        %1625 = vmatpush1.bf16.msra.mxu0 0
        %1626 = vmatprep.subr.bf16.mxu0 0
        %1627 = vmatpush1.bf16.msra.mxu0 0
        %1628 = vmatprep.subr.bf16.mxu0 0
        %1629 = vmatpush1.bf16.msra.mxu0 0
        %1630 = vmatprep.subr.bf16.mxu0 0
        %1631 = vmatpush1.bf16.msra.mxu0 0
        %1632 = vmatprep.subr.bf16.mxu0 0
        %1633 = vmatpush1.bf16.msra.mxu0 0
        %1634 = vmatprep.subr.bf16.mxu0 0
        %1635 = vmatpush1.bf16.msra.mxu0 0
        %1636 = vmatprep.subr.bf16.mxu0 0
        %1637 = vmatpush1.bf16.msra.mxu0 %v1620
        %1638 = vmatprep.subr.bf16.mxu0 0
        %1639 = vmatpush2.bf16.msra.mxu0 0
        %1640 = vmatprep.subr.bf16.mxu0 0
        %1641 = vmatpush2.bf16.msra.mxu0 0
        %1642 = vmatprep.subr.bf16.mxu0 0
        %1643 = vmatpush2.bf16.msra.mxu0 0
        %1644 = vmatprep.subr.bf16.mxu0 0
        %1645 = vmatpush2.bf16.msra.mxu0 0
        %1646 = vmatprep.subr.bf16.mxu0 0
        %1647 = vmatpush2.bf16.msra.mxu0 0
        %1648 = vmatprep.subr.bf16.mxu0 0
        %1649 = vmatpush2.bf16.msra.mxu0 0
        %1650 = vmatprep.subr.bf16.mxu0 0
        %1651 = vmatpush2.bf16.msra.mxu0 0
        %1652 = vmatprep.subr.bf16.mxu0 0
        %1653 = vmatpush2.bf16.msra.mxu0 0
        %1654 = vmatprep.mubr.bf16.mxu0 0
        %1655 = vmatmul.mubr.bf16.gmra.mxu0 %v1595
        %v1656 = vpop.f32.mrf.mxu0
        %v1657 = vadd.f32 0.0, %v1656
        %v1658 = vpop.f32.mrf.mxu0
        %v1659 = vpop.f32.mrf.mxu0
        %v1660 = vadd.f32 0.0, %v1659
        %v1661 = vpop.f32.mrf.mxu0
        %1662 = vmatprep.mubr.bf16.mxu0 0
        %1663 = vmatmul.mubr.bf16.gmra.mxu0 %v1598
        %v1664 = vpop.f32.mrf.mxu0
        %v1665 = vadd.f32 0.0, %v1664
        %v1666 = vpop.f32.mrf.mxu0
        %v1667 = vpop.f32.mrf.mxu0
        %v1668 = vadd.f32 0.0, %v1667
        %v1669 = vpop.f32.mrf.mxu0
        %1670 = vmatprep.mubr.bf16.mxu0 0
        %1671 = vmatmul.mubr.bf16.gmra.mxu0 %v1601
        %v1672 = vpop.f32.mrf.mxu0
        %v1673 = vadd.f32 0.0, %v1672
        %v1674 = vpop.f32.mrf.mxu0
        %v1675 = vpop.f32.mrf.mxu0
        %v1676 = vadd.f32 0.0, %v1675
        %v1677 = vpop.f32.mrf.mxu0
        %1678 = vmatprep.mubr.bf16.mxu0 0
        %1679 = vmatmul.mubr.bf16.gmra.mxu0 %v1604
        %v1680 = vpop.f32.mrf.mxu0
        %v1681 = vadd.f32 0.0, %v1680
        %v1682 = vpop.f32.mrf.mxu0
        %v1683 = vpop.f32.mrf.mxu0
        %v1684 = vadd.f32 0.0, %v1683
        %v1685 = vpop.f32.mrf.mxu0
        %1686 = vmatprep.mubr.bf16.mxu0 0
        %1687 = vmatmul.mubr.bf16.gmra.mxu0 %v1607
        %v1688 = vpop.f32.mrf.mxu0
        %v1689 = vadd.f32 0.0, %v1688
        %v1690 = vpop.f32.mrf.mxu0
        %v1691 = vpop.f32.mrf.mxu0
        %v1692 = vadd.f32 0.0, %v1691
        %v1693 = vpop.f32.mrf.mxu0
        %1694 = vmatprep.mubr.bf16.mxu0 0
        %1695 = vmatmul.mubr.bf16.gmra.mxu0 %v1610
        %v1696 = vpop.f32.mrf.mxu0
        %v1697 = vadd.f32 0.0, %v1696
        %v1698 = vpop.f32.mrf.mxu0
        %v1699 = vpop.f32.mrf.mxu0
        %v1700 = vadd.f32 0.0, %v1699
        %v1701 = vpop.f32.mrf.mxu0
        %1702 = vmatprep.mubr.bf16.mxu0 0
        %1703 = vmatmul.mubr.bf16.gmra.mxu0 %v1613
        %v1704 = vpop.f32.mrf.mxu0
        %v1705 = vadd.f32 0.0, %v1704
        %v1706 = vpop.f32.mrf.mxu0
        %v1707 = vpop.f32.mrf.mxu0
        %v1708 = vadd.f32 0.0, %v1707
        %v1709 = vpop.f32.mrf.mxu0
        %1710 = vmatprep.mubr.bf16.mxu0 0
        %1711 = vmatmul.mubr.bf16.gmra.mxu0 %v1616
        %v1712 = vpop.f32.mrf.mxu0
        %v1713 = vadd.f32 0.0, %v1712
        %v1714 = vpop.f32.mrf.mxu0
        %v1715 = vpop.f32.mrf.mxu0
        %v1716 = vadd.f32 0.0, %v1715
        %v1717 = vpop.f32.mrf.mxu0
        %1718 = vdwg.mxu0
        %v1720 = vsel %vm1593, %v1577, 0
        %v1723 = vsel %vm1593, %v1578, 0
        %v1726 = vsel %vm1593, %v1579, 0
        %v1729 = vsel %vm1593, %v1580, 0
        %v1732 = vsel %vm1593, %v1581, 0
        %v1735 = vsel %vm1593, %v1582, 0
        %v1738 = vsel %vm1593, %v1583, 0
        %v1741 = vsel %vm1593, %v1584, 0
        %v1744 = vsel %vm1618, %v1568, 0
        %1746 = vmatprep.subr.bf16.mxu0 0
        %1747 = vmatpush1.bf16.msra.mxu0 0
        %1748 = vmatprep.subr.bf16.mxu0 0
        %1749 = vmatpush1.bf16.msra.mxu0 0
        %1750 = vmatprep.subr.bf16.mxu0 0
        %1751 = vmatpush1.bf16.msra.mxu0 0
        %1752 = vmatprep.subr.bf16.mxu0 0
        %1753 = vmatpush1.bf16.msra.mxu0 0
        %1754 = vmatprep.subr.bf16.mxu0 0
        %1755 = vmatpush1.bf16.msra.mxu0 0
        %1756 = vmatprep.subr.bf16.mxu0 0
        %1757 = vmatpush1.bf16.msra.mxu0 0
        %1758 = vmatprep.subr.bf16.mxu0 0
        %1759 = vmatpush1.bf16.msra.mxu0 0
        %1760 = vmatprep.subr.bf16.mxu0 0
        %1761 = vmatpush1.bf16.msra.mxu0 %v1744
        %1762 = vmatprep.subr.bf16.mxu0 0
        %1763 = vmatpush2.bf16.msra.mxu0 0
        %1764 = vmatprep.subr.bf16.mxu0 0
        %1765 = vmatpush2.bf16.msra.mxu0 0
        %1766 = vmatprep.subr.bf16.mxu0 0
        %1767 = vmatpush2.bf16.msra.mxu0 0
        %1768 = vmatprep.subr.bf16.mxu0 0
        %1769 = vmatpush2.bf16.msra.mxu0 0
        %1770 = vmatprep.subr.bf16.mxu0 0
        %1771 = vmatpush2.bf16.msra.mxu0 0
        %1772 = vmatprep.subr.bf16.mxu0 0
        %1773 = vmatpush2.bf16.msra.mxu0 0
        %1774 = vmatprep.subr.bf16.mxu0 0
        %1775 = vmatpush2.bf16.msra.mxu0 0
        %1776 = vmatprep.subr.bf16.mxu0 0
        %1777 = vmatpush2.bf16.msra.mxu0 0
        %1778 = vmatprep.mubr.bf16.mxu0 0
        %1779 = vmatmul.mubr.bf16.gmra.mxu0 %v1720
        %v1780 = vpop.f32.mrf.mxu0
        %v1781 = vadd.f32 %v1657, %v1780
        %v1782 = vpop.f32.mrf.mxu0
        %v1783 = vpop.f32.mrf.mxu0
        %v1784 = vadd.f32 %v1660, %v1783
        %v1785 = vpop.f32.mrf.mxu0
        %1786 = vmatprep.mubr.bf16.mxu0 0
        %1787 = vmatmul.mubr.bf16.gmra.mxu0 %v1723
        %v1788 = vpop.f32.mrf.mxu0
        %v1789 = vadd.f32 %v1665, %v1788
        %v1790 = vpop.f32.mrf.mxu0
        %v1791 = vpop.f32.mrf.mxu0
        %v1792 = vadd.f32 %v1668, %v1791
        %v1793 = vpop.f32.mrf.mxu0
        %1794 = vmatprep.mubr.bf16.mxu0 0
        %1795 = vmatmul.mubr.bf16.gmra.mxu0 %v1726
        %v1796 = vpop.f32.mrf.mxu0
        %v1797 = vadd.f32 %v1673, %v1796
        %v1798 = vpop.f32.mrf.mxu0
        %v1799 = vpop.f32.mrf.mxu0
        %v1800 = vadd.f32 %v1676, %v1799
        %v1801 = vpop.f32.mrf.mxu0
        %1802 = vmatprep.mubr.bf16.mxu0 0
        %1803 = vmatmul.mubr.bf16.gmra.mxu0 %v1729
        %v1804 = vpop.f32.mrf.mxu0
        %v1805 = vadd.f32 %v1681, %v1804
        %v1806 = vpop.f32.mrf.mxu0
        %v1807 = vpop.f32.mrf.mxu0
        %v1808 = vadd.f32 %v1684, %v1807
        %v1809 = vpop.f32.mrf.mxu0
        %1810 = vmatprep.mubr.bf16.mxu0 0
        %1811 = vmatmul.mubr.bf16.gmra.mxu0 %v1732
        %v1812 = vpop.f32.mrf.mxu0
        %v1813 = vadd.f32 %v1689, %v1812
        %v1814 = vpop.f32.mrf.mxu0
        %v1815 = vpop.f32.mrf.mxu0
        %v1816 = vadd.f32 %v1692, %v1815
        %v1817 = vpop.f32.mrf.mxu0
        %1818 = vmatprep.mubr.bf16.mxu0 0
        %1819 = vmatmul.mubr.bf16.gmra.mxu0 %v1735
        %v1820 = vpop.f32.mrf.mxu0
        %v1821 = vadd.f32 %v1697, %v1820
        %v1822 = vpop.f32.mrf.mxu0
        %v1823 = vpop.f32.mrf.mxu0
        %v1824 = vadd.f32 %v1700, %v1823
        %v1825 = vpop.f32.mrf.mxu0
        %1826 = vmatprep.mubr.bf16.mxu0 0
        %1827 = vmatmul.mubr.bf16.gmra.mxu0 %v1738
        %v1828 = vpop.f32.mrf.mxu0
        %v1829 = vadd.f32 %v1705, %v1828
        %v1830 = vpop.f32.mrf.mxu0
        %v1831 = vpop.f32.mrf.mxu0
        %v1832 = vadd.f32 %v1708, %v1831
        %v1833 = vpop.f32.mrf.mxu0
        %1834 = vmatprep.mubr.bf16.mxu0 0
        %1835 = vmatmul.mubr.bf16.gmra.mxu0 %v1741
        %v1836 = vpop.f32.mrf.mxu0
        %v1837 = vadd.f32 %v1713, %v1836
        %v1838 = vpop.f32.mrf.mxu0
        %v1839 = vpop.f32.mrf.mxu0
        %v1840 = vadd.f32 %v1716, %v1839
        %v1841 = vpop.f32.mrf.mxu0
        %1842 = vdwg.mxu0
        %v1843 = vpack.c.bf16 %v1549, %v1548
        %v1844 = vpack.c.bf16 %v1551, %v1550
        %v1845 = vpack.c.bf16 %v1553, %v1552
        %v1846 = vpack.c.bf16 %v1555, %v1554
        %v1847 = vpack.c.bf16 %v1557, %v1556
        %v1848 = vpack.c.bf16 %v1559, %v1558
        %v1849 = vpack.c.bf16 %v1561, %v1560
        %v1850 = vpack.c.bf16 %v1563, %v1562
        %v1852 = vsel %vm1593, %v1843, 0
        %v1855 = vsel %vm1593, %v1844, 0
        %v1858 = vsel %vm1593, %v1845, 0
        %v1861 = vsel %vm1593, %v1846, 0
        %v1864 = vsel %vm1593, %v1847, 0
        %v1867 = vsel %vm1593, %v1848, 0
        %v1870 = vsel %vm1593, %v1849, 0
        %v1873 = vsel %vm1593, %v1850, 0
        %v1876 = vsel %vm1618, %v1570, 0
        %1878 = vmatprep.subr.bf16.mxu0 0
        %1879 = vmatpush1.bf16.msra.mxu0 0
        %1880 = vmatprep.subr.bf16.mxu0 0
        %1881 = vmatpush1.bf16.msra.mxu0 0
        %1882 = vmatprep.subr.bf16.mxu0 0
        %1883 = vmatpush1.bf16.msra.mxu0 0
        %1884 = vmatprep.subr.bf16.mxu0 0
        %1885 = vmatpush1.bf16.msra.mxu0 0
        %1886 = vmatprep.subr.bf16.mxu0 0
        %1887 = vmatpush1.bf16.msra.mxu0 0
        %1888 = vmatprep.subr.bf16.mxu0 0
        %1889 = vmatpush1.bf16.msra.mxu0 0
        %1890 = vmatprep.subr.bf16.mxu0 0
        %1891 = vmatpush1.bf16.msra.mxu0 0
        %1892 = vmatprep.subr.bf16.mxu0 0
        %1893 = vmatpush1.bf16.msra.mxu0 %v1876
        %1894 = vmatprep.subr.bf16.mxu0 0
        %1895 = vmatpush2.bf16.msra.mxu0 0
        %1896 = vmatprep.subr.bf16.mxu0 0
        %1897 = vmatpush2.bf16.msra.mxu0 0
        %1898 = vmatprep.subr.bf16.mxu0 0
        %1899 = vmatpush2.bf16.msra.mxu0 0
        %1900 = vmatprep.subr.bf16.mxu0 0
        %1901 = vmatpush2.bf16.msra.mxu0 0
        %1902 = vmatprep.subr.bf16.mxu0 0
        %1903 = vmatpush2.bf16.msra.mxu0 0
        %1904 = vmatprep.subr.bf16.mxu0 0
        %1905 = vmatpush2.bf16.msra.mxu0 0
        %1906 = vmatprep.subr.bf16.mxu0 0
        %1907 = vmatpush2.bf16.msra.mxu0 0
        %1908 = vmatprep.subr.bf16.mxu0 0
        %1909 = vmatpush2.bf16.msra.mxu0 0
        %1910 = vmatprep.mubr.bf16.mxu0 0
        %1911 = vmatmul.mubr.bf16.gmra.mxu0 %v1852
        %v1912 = vpop.f32.mrf.mxu0
        %v1913 = vadd.f32 0.0, %v1912
        %v1914 = vpop.f32.mrf.mxu0
        %v1915 = vpop.f32.mrf.mxu0
        %v1916 = vadd.f32 0.0, %v1915
        %v1917 = vpop.f32.mrf.mxu0
        %1918 = vmatprep.mubr.bf16.mxu0 0
        %1919 = vmatmul.mubr.bf16.gmra.mxu0 %v1855
        %v1920 = vpop.f32.mrf.mxu0
        %v1921 = vadd.f32 0.0, %v1920
        %v1922 = vpop.f32.mrf.mxu0
        %v1923 = vpop.f32.mrf.mxu0
        %v1924 = vadd.f32 0.0, %v1923
        %v1925 = vpop.f32.mrf.mxu0
        %1926 = vmatprep.mubr.bf16.mxu0 0
        %1927 = vmatmul.mubr.bf16.gmra.mxu0 %v1858
        %v1928 = vpop.f32.mrf.mxu0
        %v1929 = vadd.f32 0.0, %v1928
        %v1930 = vpop.f32.mrf.mxu0
        %v1931 = vpop.f32.mrf.mxu0
        %v1932 = vadd.f32 0.0, %v1931
        %v1933 = vpop.f32.mrf.mxu0
        %1934 = vmatprep.mubr.bf16.mxu0 0
        %1935 = vmatmul.mubr.bf16.gmra.mxu0 %v1861
        %v1936 = vpop.f32.mrf.mxu0
        %v1937 = vadd.f32 0.0, %v1936
        %v1938 = vpop.f32.mrf.mxu0
        %v1939 = vpop.f32.mrf.mxu0
        %v1940 = vadd.f32 0.0, %v1939
        %v1941 = vpop.f32.mrf.mxu0
        %1942 = vmatprep.mubr.bf16.mxu0 0
        %1943 = vmatmul.mubr.bf16.gmra.mxu0 %v1864
        %v1944 = vpop.f32.mrf.mxu0
        %v1945 = vadd.f32 0.0, %v1944
        %v1946 = vpop.f32.mrf.mxu0
        %v1947 = vpop.f32.mrf.mxu0
        %v1948 = vadd.f32 0.0, %v1947
        %v1949 = vpop.f32.mrf.mxu0
        %1950 = vmatprep.mubr.bf16.mxu0 0
        %1951 = vmatmul.mubr.bf16.gmra.mxu0 %v1867
        %v1952 = vpop.f32.mrf.mxu0
        %v1953 = vadd.f32 0.0, %v1952
        %v1954 = vpop.f32.mrf.mxu0
        %v1955 = vpop.f32.mrf.mxu0
        %v1956 = vadd.f32 0.0, %v1955
        %v1957 = vpop.f32.mrf.mxu0
        %1958 = vmatprep.mubr.bf16.mxu0 0
        %1959 = vmatmul.mubr.bf16.gmra.mxu0 %v1870
        %v1960 = vpop.f32.mrf.mxu0
        %v1961 = vadd.f32 0.0, %v1960
        %v1962 = vpop.f32.mrf.mxu0
        %v1963 = vpop.f32.mrf.mxu0
        %v1964 = vadd.f32 0.0, %v1963
        %v1965 = vpop.f32.mrf.mxu0
        %1966 = vmatprep.mubr.bf16.mxu0 0
        %1967 = vmatmul.mubr.bf16.gmra.mxu0 %v1873
        %v1968 = vpop.f32.mrf.mxu0
        %v1969 = vadd.f32 0.0, %v1968
        %v1970 = vpop.f32.mrf.mxu0
        %v1971 = vpop.f32.mrf.mxu0
        %v1972 = vadd.f32 0.0, %v1971
        %v1973 = vpop.f32.mrf.mxu0
        %1974 = vdwg.mxu0
        %v1975 = vadd.f32 %v1781, %v1913
        %v1976 = vadd.f32 %v1784, %v1916
        %v1977 = vadd.f32 %v1789, %v1921
        %v1978 = vadd.f32 %v1792, %v1924
        %v1979 = vadd.f32 %v1797, %v1929
        %v1980 = vadd.f32 %v1800, %v1932
        %v1981 = vadd.f32 %v1805, %v1937
        %v1982 = vadd.f32 %v1808, %v1940
        %v1983 = vadd.f32 %v1813, %v1945
        %v1984 = vadd.f32 %v1816, %v1948
        %v1985 = vadd.f32 %v1821, %v1953
        %v1986 = vadd.f32 %v1824, %v1956
        %v1987 = vadd.f32 %v1829, %v1961
        %v1988 = vadd.f32 %v1832, %v1964
        %v1989 = vadd.f32 %v1837, %v1969
        %v1990 = vadd.f32 %v1840, %v1972
        %v1991 = vpack.c.bf16 %v1384, %v1383
        %v1993 = vsel %vm1593, %v1991, 0
        %v1996 = vsel %vm1618, %v1571, 0
        %1998 = vmatprep.subr.bf16.mxu0 0
        %1999 = vmatpush1.bf16.msra.mxu0 0
        %2000 = vmatprep.subr.bf16.mxu0 0
        %2001 = vmatpush1.bf16.msra.mxu0 0
        %2002 = vmatprep.subr.bf16.mxu0 0
        %2003 = vmatpush1.bf16.msra.mxu0 0
        %2004 = vmatprep.subr.bf16.mxu0 0
        %2005 = vmatpush1.bf16.msra.mxu0 0
        %2006 = vmatprep.subr.bf16.mxu0 0
        %2007 = vmatpush1.bf16.msra.mxu0 0
        %2008 = vmatprep.subr.bf16.mxu0 0
        %2009 = vmatpush1.bf16.msra.mxu0 0
        %2010 = vmatprep.subr.bf16.mxu0 0
        %2011 = vmatpush1.bf16.msra.mxu0 0
        %2012 = vmatprep.subr.bf16.mxu0 0
        %2013 = vmatpush1.bf16.msra.mxu0 %v1996
        %2014 = vmatprep.subr.bf16.mxu0 0
        %2015 = vmatpush2.bf16.msra.mxu0 0
        %2016 = vmatprep.subr.bf16.mxu0 0
        %2017 = vmatpush2.bf16.msra.mxu0 0
        %2018 = vmatprep.subr.bf16.mxu0 0
        %2019 = vmatpush2.bf16.msra.mxu0 0
        %2020 = vmatprep.subr.bf16.mxu0 0
        %2021 = vmatpush2.bf16.msra.mxu0 0
        %2022 = vmatprep.subr.bf16.mxu0 0
        %2023 = vmatpush2.bf16.msra.mxu0 0
        %2024 = vmatprep.subr.bf16.mxu0 0
        %2025 = vmatpush2.bf16.msra.mxu0 0
        %2026 = vmatprep.subr.bf16.mxu0 0
        %2027 = vmatpush2.bf16.msra.mxu0 0
        %2028 = vmatprep.subr.bf16.mxu0 0
        %2029 = vmatpush2.bf16.msra.mxu0 0
        %2030 = vmatprep.mubr.bf16.mxu0 0
        %2031 = vmatmul.mubr.bf16.gmra.mxu0 %v1723
        %v2032 = vpop.f32.mrf.mxu0
        %v2033 = vadd.f32 0.0, %v2032
        %v2034 = vpop.f32.mrf.mxu0
        %v2035 = vpop.f32.mrf.mxu0
        %v2036 = vadd.f32 0.0, %v2035
        %v2037 = vpop.f32.mrf.mxu0
        %2038 = vmatprep.mubr.bf16.mxu0 0
        %2039 = vmatmul.mubr.bf16.gmra.mxu0 %v1726
        %v2040 = vpop.f32.mrf.mxu0
        %v2041 = vadd.f32 0.0, %v2040
        %v2042 = vpop.f32.mrf.mxu0
        %v2043 = vpop.f32.mrf.mxu0
        %v2044 = vadd.f32 0.0, %v2043
        %v2045 = vpop.f32.mrf.mxu0
        %2046 = vmatprep.mubr.bf16.mxu0 0
        %2047 = vmatmul.mubr.bf16.gmra.mxu0 %v1729
        %v2048 = vpop.f32.mrf.mxu0
        %v2049 = vadd.f32 0.0, %v2048
        %v2050 = vpop.f32.mrf.mxu0
        %v2051 = vpop.f32.mrf.mxu0
        %v2052 = vadd.f32 0.0, %v2051
        %v2053 = vpop.f32.mrf.mxu0
        %2054 = vmatprep.mubr.bf16.mxu0 0
        %2055 = vmatmul.mubr.bf16.gmra.mxu0 %v1732
        %v2056 = vpop.f32.mrf.mxu0
        %v2057 = vadd.f32 0.0, %v2056
        %v2058 = vpop.f32.mrf.mxu0
        %v2059 = vpop.f32.mrf.mxu0
        %v2060 = vadd.f32 0.0, %v2059
        %v2061 = vpop.f32.mrf.mxu0
        %2062 = vmatprep.mubr.bf16.mxu0 0
        %2063 = vmatmul.mubr.bf16.gmra.mxu0 %v1735
        %v2064 = vpop.f32.mrf.mxu0
        %v2065 = vadd.f32 0.0, %v2064
        %v2066 = vpop.f32.mrf.mxu0
        %v2067 = vpop.f32.mrf.mxu0
        %v2068 = vadd.f32 0.0, %v2067
        %v2069 = vpop.f32.mrf.mxu0
        %2070 = vmatprep.mubr.bf16.mxu0 0
        %2071 = vmatmul.mubr.bf16.gmra.mxu0 %v1738
        %v2072 = vpop.f32.mrf.mxu0
        %v2073 = vadd.f32 0.0, %v2072
        %v2074 = vpop.f32.mrf.mxu0
        %v2075 = vpop.f32.mrf.mxu0
        %v2076 = vadd.f32 0.0, %v2075
        %v2077 = vpop.f32.mrf.mxu0
        %2078 = vmatprep.mubr.bf16.mxu0 0
        %2079 = vmatmul.mubr.bf16.gmra.mxu0 %v1741
        %v2080 = vpop.f32.mrf.mxu0
        %v2081 = vadd.f32 0.0, %v2080
        %v2082 = vpop.f32.mrf.mxu0
        %v2083 = vpop.f32.mrf.mxu0
        %v2084 = vadd.f32 0.0, %v2083
        %v2085 = vpop.f32.mrf.mxu0
        %2086 = vmatprep.mubr.bf16.mxu0 0
        %2087 = vmatmul.mubr.bf16.gmra.mxu0 %v1993
        %v2088 = vpop.f32.mrf.mxu0
        %v2089 = vadd.f32 0.0, %v2088
        %v2090 = vpop.f32.mrf.mxu0
        %v2091 = vpop.f32.mrf.mxu0
        %v2092 = vadd.f32 0.0, %v2091
        %v2093 = vpop.f32.mrf.mxu0
        %2094 = vdwg.mxu0
        %v2095 = vadd.f32 %v1975, %v2033
        %v2096 = vadd.f32 %v1976, %v2036
        %v2097 = vadd.f32 %v1977, %v2041
        %v2098 = vadd.f32 %v1978, %v2044
        %v2099 = vadd.f32 %v1979, %v2049
        %v2100 = vadd.f32 %v1980, %v2052
        %v2101 = vadd.f32 %v1981, %v2057
        %v2102 = vadd.f32 %v1982, %v2060
        %v2103 = vadd.f32 %v1983, %v2065
        %v2104 = vadd.f32 %v1984, %v2068
        %v2105 = vadd.f32 %v1985, %v2073
        %v2106 = vadd.f32 %v1986, %v2076
        %v2107 = vadd.f32 %v1987, %v2081
        %v2108 = vadd.f32 %v1988, %v2084
        %v2109 = vadd.f32 %v1989, %v2089
        %v2110 = vadd.f32 %v1990, %v2092
        %v2111 = vpack.c.bf16 %v1065, %v1064
        %v2113 = vsel %vm1593, %v2111, 0
        %v2116 = vsel %vm1618, %v1572, 0
        %2118 = vmatprep.subr.bf16.mxu0 0
        %2119 = vmatpush1.bf16.msra.mxu0 0
        %2120 = vmatprep.subr.bf16.mxu0 0
        %2121 = vmatpush1.bf16.msra.mxu0 0
        %2122 = vmatprep.subr.bf16.mxu0 0
        %2123 = vmatpush1.bf16.msra.mxu0 0
        %2124 = vmatprep.subr.bf16.mxu0 0
        %2125 = vmatpush1.bf16.msra.mxu0 0
        %2126 = vmatprep.subr.bf16.mxu0 0
        %2127 = vmatpush1.bf16.msra.mxu0 0
        %2128 = vmatprep.subr.bf16.mxu0 0
        %2129 = vmatpush1.bf16.msra.mxu0 0
        %2130 = vmatprep.subr.bf16.mxu0 0
        %2131 = vmatpush1.bf16.msra.mxu0 0
        %2132 = vmatprep.subr.bf16.mxu0 0
        %2133 = vmatpush1.bf16.msra.mxu0 %v2116
        %2134 = vmatprep.subr.bf16.mxu0 0
        %2135 = vmatpush2.bf16.msra.mxu0 0
        %2136 = vmatprep.subr.bf16.mxu0 0
        %2137 = vmatpush2.bf16.msra.mxu0 0
        %2138 = vmatprep.subr.bf16.mxu0 0
        %2139 = vmatpush2.bf16.msra.mxu0 0
        %2140 = vmatprep.subr.bf16.mxu0 0
        %2141 = vmatpush2.bf16.msra.mxu0 0
        %2142 = vmatprep.subr.bf16.mxu0 0
        %2143 = vmatpush2.bf16.msra.mxu0 0
        %2144 = vmatprep.subr.bf16.mxu0 0
        %2145 = vmatpush2.bf16.msra.mxu0 0
        %2146 = vmatprep.subr.bf16.mxu0 0
        %2147 = vmatpush2.bf16.msra.mxu0 0
        %2148 = vmatprep.subr.bf16.mxu0 0
        %2149 = vmatpush2.bf16.msra.mxu0 0
        %2150 = vmatprep.mubr.bf16.mxu0 0
        %2151 = vmatmul.mubr.bf16.gmra.mxu0 %v1598
        %v2152 = vpop.f32.mrf.mxu0
        %v2153 = vadd.f32 0.0, %v2152
        %v2154 = vpop.f32.mrf.mxu0
        %v2155 = vpop.f32.mrf.mxu0
        %v2156 = vadd.f32 0.0, %v2155
        %v2157 = vpop.f32.mrf.mxu0
        %2158 = vmatprep.mubr.bf16.mxu0 0
        %2159 = vmatmul.mubr.bf16.gmra.mxu0 %v1601
        %v2160 = vpop.f32.mrf.mxu0
        %v2161 = vadd.f32 0.0, %v2160
        %v2162 = vpop.f32.mrf.mxu0
        %v2163 = vpop.f32.mrf.mxu0
        %v2164 = vadd.f32 0.0, %v2163
        %v2165 = vpop.f32.mrf.mxu0
        %2166 = vmatprep.mubr.bf16.mxu0 0
        %2167 = vmatmul.mubr.bf16.gmra.mxu0 %v1604
        %v2168 = vpop.f32.mrf.mxu0
        %v2169 = vadd.f32 0.0, %v2168
        %v2170 = vpop.f32.mrf.mxu0
        %v2171 = vpop.f32.mrf.mxu0
        %v2172 = vadd.f32 0.0, %v2171
        %v2173 = vpop.f32.mrf.mxu0
        %2174 = vmatprep.mubr.bf16.mxu0 0
        %2175 = vmatmul.mubr.bf16.gmra.mxu0 %v1607
        %v2176 = vpop.f32.mrf.mxu0
        %v2177 = vadd.f32 0.0, %v2176
        %v2178 = vpop.f32.mrf.mxu0
        %v2179 = vpop.f32.mrf.mxu0
        %v2180 = vadd.f32 0.0, %v2179
        %v2181 = vpop.f32.mrf.mxu0
        %2182 = vmatprep.mubr.bf16.mxu0 0
        %2183 = vmatmul.mubr.bf16.gmra.mxu0 %v1610
        %v2184 = vpop.f32.mrf.mxu0
        %v2185 = vadd.f32 0.0, %v2184
        %v2186 = vpop.f32.mrf.mxu0
        %v2187 = vpop.f32.mrf.mxu0
        %v2188 = vadd.f32 0.0, %v2187
        %v2189 = vpop.f32.mrf.mxu0
        %2190 = vmatprep.mubr.bf16.mxu0 0
        %2191 = vmatmul.mubr.bf16.gmra.mxu0 %v1613
        %v2192 = vpop.f32.mrf.mxu0
        %v2193 = vadd.f32 0.0, %v2192
        %v2194 = vpop.f32.mrf.mxu0
        %v2195 = vpop.f32.mrf.mxu0
        %v2196 = vadd.f32 0.0, %v2195
        %v2197 = vpop.f32.mrf.mxu0
        %2198 = vmatprep.mubr.bf16.mxu0 0
        %2199 = vmatmul.mubr.bf16.gmra.mxu0 %v1616
        %v2200 = vpop.f32.mrf.mxu0
        %v2201 = vadd.f32 0.0, %v2200
        %v2202 = vpop.f32.mrf.mxu0
        %v2203 = vpop.f32.mrf.mxu0
        %v2204 = vadd.f32 0.0, %v2203
        %v2205 = vpop.f32.mrf.mxu0
        %2206 = vmatprep.mubr.bf16.mxu0 0
        %2207 = vmatmul.mubr.bf16.gmra.mxu0 %v2113
        %v2208 = vpop.f32.mrf.mxu0
        %v2209 = vadd.f32 0.0, %v2208
        %v2210 = vpop.f32.mrf.mxu0
        %v2211 = vpop.f32.mrf.mxu0
        %v2212 = vadd.f32 0.0, %v2211
        %v2213 = vpop.f32.mrf.mxu0
        %2214 = vdwg.mxu0
        %v2215 = vadd.f32 %v2095, %v2153
        %v2216 = vadd.f32 %v2096, %v2156
        %v2217 = vadd.f32 %v2097, %v2161
        %v2218 = vadd.f32 %v2098, %v2164
        %v2219 = vadd.f32 %v2099, %v2169
        %v2220 = vadd.f32 %v2100, %v2172
        %v2221 = vadd.f32 %v2101, %v2177
        %v2222 = vadd.f32 %v2102, %v2180
        %v2223 = vadd.f32 %v2103, %v2185
        %v2224 = vadd.f32 %v2104, %v2188
        %v2225 = vadd.f32 %v2105, %v2193
        %v2226 = vadd.f32 %v2106, %v2196
        %v2227 = vadd.f32 %v2107, %v2201
        %v2228 = vadd.f32 %v2108, %v2204
        %v2229 = vadd.f32 %v2109, %v2209
        %v2230 = vadd.f32 %v2110, %v2212
        %v2231 = vpack.c.bf16 %v1565, %v1564
        %v2233 = vsel %vm1593, %v2231, 0
        %v2236 = vsel %vm1618, %v1573, 0
        %2238 = vmatprep.subr.bf16.mxu0 0
        %2239 = vmatpush1.bf16.msra.mxu0 0
        %2240 = vmatprep.subr.bf16.mxu0 0
        %2241 = vmatpush1.bf16.msra.mxu0 0
        %2242 = vmatprep.subr.bf16.mxu0 0
        %2243 = vmatpush1.bf16.msra.mxu0 0
        %2244 = vmatprep.subr.bf16.mxu0 0
        %2245 = vmatpush1.bf16.msra.mxu0 0
        %2246 = vmatprep.subr.bf16.mxu0 0
        %2247 = vmatpush1.bf16.msra.mxu0 0
        %2248 = vmatprep.subr.bf16.mxu0 0
        %2249 = vmatpush1.bf16.msra.mxu0 0
        %2250 = vmatprep.subr.bf16.mxu0 0
        %2251 = vmatpush1.bf16.msra.mxu0 0
        %2252 = vmatprep.subr.bf16.mxu0 0
        %2253 = vmatpush1.bf16.msra.mxu0 %v2236
        %2254 = vmatprep.subr.bf16.mxu0 0
        %2255 = vmatpush2.bf16.msra.mxu0 0
        %2256 = vmatprep.subr.bf16.mxu0 0
        %2257 = vmatpush2.bf16.msra.mxu0 0
        %2258 = vmatprep.subr.bf16.mxu0 0
        %2259 = vmatpush2.bf16.msra.mxu0 0
        %2260 = vmatprep.subr.bf16.mxu0 0
        %2261 = vmatpush2.bf16.msra.mxu0 0
        %2262 = vmatprep.subr.bf16.mxu0 0
        %2263 = vmatpush2.bf16.msra.mxu0 0
        %2264 = vmatprep.subr.bf16.mxu0 0
        %2265 = vmatpush2.bf16.msra.mxu0 0
        %2266 = vmatprep.subr.bf16.mxu0 0
        %2267 = vmatpush2.bf16.msra.mxu0 0
        %2268 = vmatprep.subr.bf16.mxu0 0
        %2269 = vmatpush2.bf16.msra.mxu0 0
        %2270 = vmatprep.mubr.bf16.mxu0 0
        %2271 = vmatmul.mubr.bf16.gmra.mxu0 %v1855
        %v2272 = vpop.f32.mrf.mxu0
        %v2273 = vadd.f32 0.0, %v2272
        %v2274 = vpop.f32.mrf.mxu0
        %v2275 = vpop.f32.mrf.mxu0
        %v2276 = vadd.f32 0.0, %v2275
        %v2277 = vpop.f32.mrf.mxu0
        %2278 = vmatprep.mubr.bf16.mxu0 0
        %2279 = vmatmul.mubr.bf16.gmra.mxu0 %v1858
        %v2280 = vpop.f32.mrf.mxu0
        %v2281 = vadd.f32 0.0, %v2280
        %v2282 = vpop.f32.mrf.mxu0
        %v2283 = vpop.f32.mrf.mxu0
        %v2284 = vadd.f32 0.0, %v2283
        %v2285 = vpop.f32.mrf.mxu0
        %2286 = vmatprep.mubr.bf16.mxu0 0
        %2287 = vmatmul.mubr.bf16.gmra.mxu0 %v1861
        %v2288 = vpop.f32.mrf.mxu0
        %v2289 = vadd.f32 0.0, %v2288
        %v2290 = vpop.f32.mrf.mxu0
        %v2291 = vpop.f32.mrf.mxu0
        %v2292 = vadd.f32 0.0, %v2291
        %v2293 = vpop.f32.mrf.mxu0
        %2294 = vmatprep.mubr.bf16.mxu0 0
        %2295 = vmatmul.mubr.bf16.gmra.mxu0 %v1864
        %v2296 = vpop.f32.mrf.mxu0
        %v2297 = vadd.f32 0.0, %v2296
        %v2298 = vpop.f32.mrf.mxu0
        %v2299 = vpop.f32.mrf.mxu0
        %v2300 = vadd.f32 0.0, %v2299
        %v2301 = vpop.f32.mrf.mxu0
        %2302 = vmatprep.mubr.bf16.mxu0 0
        %2303 = vmatmul.mubr.bf16.gmra.mxu0 %v1867
        %v2304 = vpop.f32.mrf.mxu0
        %v2305 = vadd.f32 0.0, %v2304
        %v2306 = vpop.f32.mrf.mxu0
        %v2307 = vpop.f32.mrf.mxu0
        %v2308 = vadd.f32 0.0, %v2307
        %v2309 = vpop.f32.mrf.mxu0
        %2310 = vmatprep.mubr.bf16.mxu0 0
        %2311 = vmatmul.mubr.bf16.gmra.mxu0 %v1870
        %v2312 = vpop.f32.mrf.mxu0
        %v2313 = vadd.f32 0.0, %v2312
        %v2314 = vpop.f32.mrf.mxu0
        %v2315 = vpop.f32.mrf.mxu0
        %v2316 = vadd.f32 0.0, %v2315
        %v2317 = vpop.f32.mrf.mxu0
        %2318 = vmatprep.mubr.bf16.mxu0 0
        %2319 = vmatmul.mubr.bf16.gmra.mxu0 %v1873
        %v2320 = vpop.f32.mrf.mxu0
        %v2321 = vadd.f32 0.0, %v2320
        %v2322 = vpop.f32.mrf.mxu0
        %v2323 = vpop.f32.mrf.mxu0
        %v2324 = vadd.f32 0.0, %v2323
        %v2325 = vpop.f32.mrf.mxu0
        %2326 = vmatprep.mubr.bf16.mxu0 0
        %2327 = vmatmul.mubr.bf16.gmra.mxu0 %v2233
        %v2328 = vpop.f32.mrf.mxu0
        %v2329 = vadd.f32 0.0, %v2328
        %v2330 = vpop.f32.mrf.mxu0
        %v2331 = vpop.f32.mrf.mxu0
        %v2332 = vadd.f32 0.0, %v2331
        %v2333 = vpop.f32.mrf.mxu0
        %2334 = vdwg.mxu0
        %v2335 = vadd.f32 %v2215, %v2273
        %v2336 = vadd.f32 %v2216, %v2276
        %v2337 = vadd.f32 %v2217, %v2281
        %v2338 = vadd.f32 %v2218, %v2284
        %v2339 = vadd.f32 %v2219, %v2289
        %v2340 = vadd.f32 %v2220, %v2292
        %v2341 = vadd.f32 %v2221, %v2297
        %v2342 = vadd.f32 %v2222, %v2300
        %v2343 = vadd.f32 %v2223, %v2305
        %v2344 = vadd.f32 %v2224, %v2308
        %v2345 = vadd.f32 %v2225, %v2313
        %v2346 = vadd.f32 %v2226, %v2316
        %v2347 = vadd.f32 %v2227, %v2321
        %v2348 = vadd.f32 %v2228, %v2324
        %v2349 = vadd.f32 %v2229, %v2329
        %v2350 = vadd.f32 %v2230, %v2332
        %v2351 = vpack.c.bf16 %v1386, %v1385
        %v2353 = vsel %vm1593, %v2351, 0
        %v2356 = vsel %vm1618, %v1574, 0
        %2358 = vmatprep.subr.bf16.mxu0 0
        %2359 = vmatpush1.bf16.msra.mxu0 0
        %2360 = vmatprep.subr.bf16.mxu0 0
        %2361 = vmatpush1.bf16.msra.mxu0 0
        %2362 = vmatprep.subr.bf16.mxu0 0
        %2363 = vmatpush1.bf16.msra.mxu0 0
        %2364 = vmatprep.subr.bf16.mxu0 0
        %2365 = vmatpush1.bf16.msra.mxu0 0
        %2366 = vmatprep.subr.bf16.mxu0 0
        %2367 = vmatpush1.bf16.msra.mxu0 0
        %2368 = vmatprep.subr.bf16.mxu0 0
        %2369 = vmatpush1.bf16.msra.mxu0 0
        %2370 = vmatprep.subr.bf16.mxu0 0
        %2371 = vmatpush1.bf16.msra.mxu0 0
        %2372 = vmatprep.subr.bf16.mxu0 0
        %2373 = vmatpush1.bf16.msra.mxu0 %v2356
        %2374 = vmatprep.subr.bf16.mxu0 0
        %2375 = vmatpush2.bf16.msra.mxu0 0
        %2376 = vmatprep.subr.bf16.mxu0 0
        %2377 = vmatpush2.bf16.msra.mxu0 0
        %2378 = vmatprep.subr.bf16.mxu0 0
        %2379 = vmatpush2.bf16.msra.mxu0 0
        %2380 = vmatprep.subr.bf16.mxu0 0
        %2381 = vmatpush2.bf16.msra.mxu0 0
        %2382 = vmatprep.subr.bf16.mxu0 0
        %2383 = vmatpush2.bf16.msra.mxu0 0
        %2384 = vmatprep.subr.bf16.mxu0 0
        %2385 = vmatpush2.bf16.msra.mxu0 0
        %2386 = vmatprep.subr.bf16.mxu0 0
        %2387 = vmatpush2.bf16.msra.mxu0 0
        %2388 = vmatprep.subr.bf16.mxu0 0
        %2389 = vmatpush2.bf16.msra.mxu0 0
        %2390 = vmatprep.mubr.bf16.mxu0 0
        %2391 = vmatmul.mubr.bf16.gmra.mxu0 %v1726
        %v2392 = vpop.f32.mrf.mxu0
        %v2393 = vadd.f32 0.0, %v2392
        %v2394 = vpop.f32.mrf.mxu0
        %v2395 = vpop.f32.mrf.mxu0
        %v2396 = vadd.f32 0.0, %v2395
        %v2397 = vpop.f32.mrf.mxu0
        %2398 = vmatprep.mubr.bf16.mxu0 0
        %2399 = vmatmul.mubr.bf16.gmra.mxu0 %v1729
        %v2400 = vpop.f32.mrf.mxu0
        %v2401 = vadd.f32 0.0, %v2400
        %v2402 = vpop.f32.mrf.mxu0
        %v2403 = vpop.f32.mrf.mxu0
        %v2404 = vadd.f32 0.0, %v2403
        %v2405 = vpop.f32.mrf.mxu0
        %2406 = vmatprep.mubr.bf16.mxu0 0
        %2407 = vmatmul.mubr.bf16.gmra.mxu0 %v1732
        %v2408 = vpop.f32.mrf.mxu0
        %v2409 = vadd.f32 0.0, %v2408
        %v2410 = vpop.f32.mrf.mxu0
        %v2411 = vpop.f32.mrf.mxu0
        %v2412 = vadd.f32 0.0, %v2411
        %v2413 = vpop.f32.mrf.mxu0
        %2414 = vmatprep.mubr.bf16.mxu0 0
        %2415 = vmatmul.mubr.bf16.gmra.mxu0 %v1735
        %v2416 = vpop.f32.mrf.mxu0
        %v2417 = vadd.f32 0.0, %v2416
        %v2418 = vpop.f32.mrf.mxu0
        %v2419 = vpop.f32.mrf.mxu0
        %v2420 = vadd.f32 0.0, %v2419
        %v2421 = vpop.f32.mrf.mxu0
        %2422 = vmatprep.mubr.bf16.mxu0 0
        %2423 = vmatmul.mubr.bf16.gmra.mxu0 %v1738
        %v2424 = vpop.f32.mrf.mxu0
        %v2425 = vadd.f32 0.0, %v2424
        %v2426 = vpop.f32.mrf.mxu0
        %v2427 = vpop.f32.mrf.mxu0
        %v2428 = vadd.f32 0.0, %v2427
        %v2429 = vpop.f32.mrf.mxu0
        %2430 = vmatprep.mubr.bf16.mxu0 0
        %2431 = vmatmul.mubr.bf16.gmra.mxu0 %v1741
        %v2432 = vpop.f32.mrf.mxu0
        %v2433 = vadd.f32 0.0, %v2432
        %v2434 = vpop.f32.mrf.mxu0
        %v2435 = vpop.f32.mrf.mxu0
        %v2436 = vadd.f32 0.0, %v2435
        %v2437 = vpop.f32.mrf.mxu0
        %2438 = vmatprep.mubr.bf16.mxu0 0
        %2439 = vmatmul.mubr.bf16.gmra.mxu0 %v1993
        %v2440 = vpop.f32.mrf.mxu0
        %v2441 = vadd.f32 0.0, %v2440
        %v2442 = vpop.f32.mrf.mxu0
        %v2443 = vpop.f32.mrf.mxu0
        %v2444 = vadd.f32 0.0, %v2443
        %v2445 = vpop.f32.mrf.mxu0
        %2446 = vmatprep.mubr.bf16.mxu0 0
        %2447 = vmatmul.mubr.bf16.gmra.mxu0 %v2353
        %v2448 = vpop.f32.mrf.mxu0
        %v2449 = vadd.f32 0.0, %v2448
        %v2450 = vpop.f32.mrf.mxu0
        %v2451 = vpop.f32.mrf.mxu0
        %v2452 = vadd.f32 0.0, %v2451
        %v2453 = vpop.f32.mrf.mxu0
        %2454 = vdwg.mxu0
        %v2455 = vadd.f32 %v2335, %v2393
        %v2456 = vadd.f32 %v2336, %v2396
        %v2457 = vadd.f32 %v2337, %v2401
        %v2458 = vadd.f32 %v2338, %v2404
        %v2459 = vadd.f32 %v2339, %v2409
        %v2460 = vadd.f32 %v2340, %v2412
        %v2461 = vadd.f32 %v2341, %v2417
        %v2462 = vadd.f32 %v2342, %v2420
        %v2463 = vadd.f32 %v2343, %v2425
        %v2464 = vadd.f32 %v2344, %v2428
        %v2465 = vadd.f32 %v2345, %v2433
        %v2466 = vadd.f32 %v2346, %v2436
        %v2467 = vadd.f32 %v2347, %v2441
        %v2468 = vadd.f32 %v2348, %v2444
        %v2469 = vadd.f32 %v2349, %v2449
        %v2470 = vadd.f32 %v2350, %v2452
        %v2471 = vpack.c.bf16 %v1203, %v1202
        %v2473 = vsel %vm1593, %v2471, 0
        %v2476 = vsel %vm1618, %v1575, 0
        %2478 = vmatprep.subr.bf16.mxu0 0
        %2479 = vmatpush1.bf16.msra.mxu0 0
        %2480 = vmatprep.subr.bf16.mxu0 0
        %2481 = vmatpush1.bf16.msra.mxu0 0
        %2482 = vmatprep.subr.bf16.mxu0 0
        %2483 = vmatpush1.bf16.msra.mxu0 0
        %2484 = vmatprep.subr.bf16.mxu0 0
        %2485 = vmatpush1.bf16.msra.mxu0 0
        %2486 = vmatprep.subr.bf16.mxu0 0
        %2487 = vmatpush1.bf16.msra.mxu0 0
        %2488 = vmatprep.subr.bf16.mxu0 0
        %2489 = vmatpush1.bf16.msra.mxu0 0
        %2490 = vmatprep.subr.bf16.mxu0 0
        %2491 = vmatpush1.bf16.msra.mxu0 0
        %2492 = vmatprep.subr.bf16.mxu0 0
        %2493 = vmatpush1.bf16.msra.mxu0 %v2476
        %2494 = vmatprep.subr.bf16.mxu0 0
        %2495 = vmatpush2.bf16.msra.mxu0 0
        %2496 = vmatprep.subr.bf16.mxu0 0
        %2497 = vmatpush2.bf16.msra.mxu0 0
        %2498 = vmatprep.subr.bf16.mxu0 0
        %2499 = vmatpush2.bf16.msra.mxu0 0
        %2500 = vmatprep.subr.bf16.mxu0 0
        %2501 = vmatpush2.bf16.msra.mxu0 0
        %2502 = vmatprep.subr.bf16.mxu0 0
        %2503 = vmatpush2.bf16.msra.mxu0 0
        %2504 = vmatprep.subr.bf16.mxu0 0
        %2505 = vmatpush2.bf16.msra.mxu0 0
        %2506 = vmatprep.subr.bf16.mxu0 0
        %2507 = vmatpush2.bf16.msra.mxu0 0
        %2508 = vmatprep.subr.bf16.mxu0 0
        %2509 = vmatpush2.bf16.msra.mxu0 0
        %2510 = vmatprep.mubr.bf16.mxu0 0
        %2511 = vmatmul.mubr.bf16.gmra.mxu0 %v1601
        %v2512 = vpop.f32.mrf.mxu0
        %v2513 = vadd.f32 0.0, %v2512
        %v2514 = vpop.f32.mrf.mxu0
        %v2515 = vpop.f32.mrf.mxu0
        %v2516 = vadd.f32 0.0, %v2515
        %v2517 = vpop.f32.mrf.mxu0
        %2518 = vmatprep.mubr.bf16.mxu0 0
        %2519 = vmatmul.mubr.bf16.gmra.mxu0 %v1604
        %v2520 = vpop.f32.mrf.mxu0
        %v2521 = vadd.f32 0.0, %v2520
        %v2522 = vpop.f32.mrf.mxu0
        %v2523 = vpop.f32.mrf.mxu0
        %v2524 = vadd.f32 0.0, %v2523
        %v2525 = vpop.f32.mrf.mxu0
        %2526 = vmatprep.mubr.bf16.mxu0 0
        %2527 = vmatmul.mubr.bf16.gmra.mxu0 %v1607
        %v2528 = vpop.f32.mrf.mxu0
        %v2529 = vadd.f32 0.0, %v2528
        %v2530 = vpop.f32.mrf.mxu0
        %v2531 = vpop.f32.mrf.mxu0
        %v2532 = vadd.f32 0.0, %v2531
        %v2533 = vpop.f32.mrf.mxu0
        %2534 = vmatprep.mubr.bf16.mxu0 0
        %2535 = vmatmul.mubr.bf16.gmra.mxu0 %v1610
        %v2536 = vpop.f32.mrf.mxu0
        %v2537 = vadd.f32 0.0, %v2536
        %v2538 = vpop.f32.mrf.mxu0
        %v2539 = vpop.f32.mrf.mxu0
        %v2540 = vadd.f32 0.0, %v2539
        %v2541 = vpop.f32.mrf.mxu0
        %2542 = vmatprep.mubr.bf16.mxu0 0
        %2543 = vmatmul.mubr.bf16.gmra.mxu0 %v1613
        %v2544 = vpop.f32.mrf.mxu0
        %v2545 = vadd.f32 0.0, %v2544
        %v2546 = vpop.f32.mrf.mxu0
        %v2547 = vpop.f32.mrf.mxu0
        %v2548 = vadd.f32 0.0, %v2547
        %v2549 = vpop.f32.mrf.mxu0
        %2550 = vmatprep.mubr.bf16.mxu0 0
        %2551 = vmatmul.mubr.bf16.gmra.mxu0 %v1616
        %v2552 = vpop.f32.mrf.mxu0
        %v2553 = vadd.f32 0.0, %v2552
        %v2554 = vpop.f32.mrf.mxu0
        %v2555 = vpop.f32.mrf.mxu0
        %v2556 = vadd.f32 0.0, %v2555
        %v2557 = vpop.f32.mrf.mxu0
        %2558 = vmatprep.mubr.bf16.mxu0 0
        %2559 = vmatmul.mubr.bf16.gmra.mxu0 %v2113
        %v2560 = vpop.f32.mrf.mxu0
        %v2561 = vadd.f32 0.0, %v2560
        %v2562 = vpop.f32.mrf.mxu0
        %v2563 = vpop.f32.mrf.mxu0
        %v2564 = vadd.f32 0.0, %v2563
        %v2565 = vpop.f32.mrf.mxu0
        %2566 = vmatprep.mubr.bf16.mxu0 0
        %2567 = vmatmul.mubr.bf16.gmra.mxu0 %v2473
        %v2568 = vpop.f32.mrf.mxu0
        %v2569 = vadd.f32 0.0, %v2568
        %v2570 = vpop.f32.mrf.mxu0
        %v2571 = vpop.f32.mrf.mxu0
        %v2572 = vadd.f32 0.0, %v2571
        %v2573 = vpop.f32.mrf.mxu0
        %2574 = vdwg.mxu0
        %v2575 = vadd.f32 %v2455, %v2513
        %v2576 = vadd.f32 %v2456, %v2516
        %v2577 = vadd.f32 %v2457, %v2521
        %v2578 = vadd.f32 %v2458, %v2524
        %v2579 = vadd.f32 %v2459, %v2529
        %v2580 = vadd.f32 %v2460, %v2532
        %v2581 = vadd.f32 %v2461, %v2537
        %v2582 = vadd.f32 %v2462, %v2540
        %v2583 = vadd.f32 %v2463, %v2545
        %v2584 = vadd.f32 %v2464, %v2548
        %v2585 = vadd.f32 %v2465, %v2553
        %v2586 = vadd.f32 %v2466, %v2556
        %v2587 = vadd.f32 %v2467, %v2561
        %v2588 = vadd.f32 %v2468, %v2564
        %v2589 = vadd.f32 %v2469, %v2569
        %v2590 = vadd.f32 %v2470, %v2572
        %v2591 = vpack.c.bf16 %v1567, %v1566
        %v2593 = vsel %vm1593, %v2591, 0
        %v2596 = vsel %vm1618, %v1576, 0
        %2598 = vmatprep.subr.bf16.mxu0 0
        %2599 = vmatpush1.bf16.msra.mxu0 0
        %2600 = vmatprep.subr.bf16.mxu0 0
        %2601 = vmatpush1.bf16.msra.mxu0 0
        %2602 = vmatprep.subr.bf16.mxu0 0
        %2603 = vmatpush1.bf16.msra.mxu0 0
        %2604 = vmatprep.subr.bf16.mxu0 0
        %2605 = vmatpush1.bf16.msra.mxu0 0
        %2606 = vmatprep.subr.bf16.mxu0 0
        %2607 = vmatpush1.bf16.msra.mxu0 0
        %2608 = vmatprep.subr.bf16.mxu0 0
        %2609 = vmatpush1.bf16.msra.mxu0 0
        %2610 = vmatprep.subr.bf16.mxu0 0
        %2611 = vmatpush1.bf16.msra.mxu0 0
        %2612 = vmatprep.subr.bf16.mxu0 0
        %2613 = vmatpush1.bf16.msra.mxu0 %v2596
        %2614 = vmatprep.subr.bf16.mxu0 0
        %2615 = vmatpush2.bf16.msra.mxu0 0
        %2616 = vmatprep.subr.bf16.mxu0 0
        %2617 = vmatpush2.bf16.msra.mxu0 0
        %2618 = vmatprep.subr.bf16.mxu0 0
        %2619 = vmatpush2.bf16.msra.mxu0 0
        %2620 = vmatprep.subr.bf16.mxu0 0
        %2621 = vmatpush2.bf16.msra.mxu0 0
        %2622 = vmatprep.subr.bf16.mxu0 0
        %2623 = vmatpush2.bf16.msra.mxu0 0
        %2624 = vmatprep.subr.bf16.mxu0 0
        %2625 = vmatpush2.bf16.msra.mxu0 0
        %2626 = vmatprep.subr.bf16.mxu0 0
        %2627 = vmatpush2.bf16.msra.mxu0 0
        %2628 = vmatprep.subr.bf16.mxu0 0
        %2629 = vmatpush2.bf16.msra.mxu0 0
        %2630 = vmatprep.mubr.bf16.mxu0 0
        %2631 = vmatmul.mubr.bf16.gmra.mxu0 %v1858
        %v2632 = vpop.f32.mrf.mxu0
        %v2633 = vadd.f32 0.0, %v2632
        %v2634 = vpop.f32.mrf.mxu0
        %v2635 = vpop.f32.mrf.mxu0
        %v2636 = vadd.f32 0.0, %v2635
        %v2637 = vpop.f32.mrf.mxu0
        %2638 = vmatprep.mubr.bf16.mxu0 0
        %2639 = vmatmul.mubr.bf16.gmra.mxu0 %v1861
        %v2640 = vpop.f32.mrf.mxu0
        %v2641 = vadd.f32 0.0, %v2640
        %v2642 = vpop.f32.mrf.mxu0
        %v2643 = vpop.f32.mrf.mxu0
        %v2644 = vadd.f32 0.0, %v2643
        %v2645 = vpop.f32.mrf.mxu0
        %2646 = vmatprep.mubr.bf16.mxu0 0
        %2647 = vmatmul.mubr.bf16.gmra.mxu0 %v1864
        %v2648 = vpop.f32.mrf.mxu0
        %v2649 = vadd.f32 0.0, %v2648
        %v2650 = vpop.f32.mrf.mxu0
        %v2651 = vpop.f32.mrf.mxu0
        %v2652 = vadd.f32 0.0, %v2651
        %v2653 = vpop.f32.mrf.mxu0
        %2654 = vmatprep.mubr.bf16.mxu0 0
        %2655 = vmatmul.mubr.bf16.gmra.mxu0 %v1867
        %v2656 = vpop.f32.mrf.mxu0
        %v2657 = vadd.f32 0.0, %v2656
        %v2658 = vpop.f32.mrf.mxu0
        %v2659 = vpop.f32.mrf.mxu0
        %v2660 = vadd.f32 0.0, %v2659
        %v2661 = vpop.f32.mrf.mxu0
        %2662 = vmatprep.mubr.bf16.mxu0 0
        %2663 = vmatmul.mubr.bf16.gmra.mxu0 %v1870
        %v2664 = vpop.f32.mrf.mxu0
        %v2665 = vadd.f32 0.0, %v2664
        %v2666 = vpop.f32.mrf.mxu0
        %v2667 = vpop.f32.mrf.mxu0
        %v2668 = vadd.f32 0.0, %v2667
        %v2669 = vpop.f32.mrf.mxu0
        %2670 = vmatprep.mubr.bf16.mxu0 0
        %2671 = vmatmul.mubr.bf16.gmra.mxu0 %v1873
        %v2672 = vpop.f32.mrf.mxu0
        %v2673 = vadd.f32 0.0, %v2672
        %v2674 = vpop.f32.mrf.mxu0
        %v2675 = vpop.f32.mrf.mxu0
        %v2676 = vadd.f32 0.0, %v2675
        %v2677 = vpop.f32.mrf.mxu0
        %2678 = vmatprep.mubr.bf16.mxu0 0
        %2679 = vmatmul.mubr.bf16.gmra.mxu0 %v2233
        %v2680 = vpop.f32.mrf.mxu0
        %v2681 = vadd.f32 0.0, %v2680
        %v2682 = vpop.f32.mrf.mxu0
        %v2683 = vpop.f32.mrf.mxu0
        %v2684 = vadd.f32 0.0, %v2683
        %v2685 = vpop.f32.mrf.mxu0
        %2686 = vmatprep.mubr.bf16.mxu0 0
        %2687 = vmatmul.mubr.bf16.gmra.mxu0 %v2593
        %v2688 = vpop.f32.mrf.mxu0
        %v2689 = vadd.f32 0.0, %v2688
        %v2690 = vpop.f32.mrf.mxu0
        %v2691 = vpop.f32.mrf.mxu0
        %v2692 = vadd.f32 0.0, %v2691
        %v2693 = vpop.f32.mrf.mxu0
        %2694 = vdwg.mxu0
        %v2695 = vadd.f32 %v2575, %v2633
        %v2696 = vadd.f32 %v2576, %v2636
        %v2697 = vadd.f32 %v2577, %v2641
        %v2698 = vadd.f32 %v2578, %v2644
        %v2699 = vadd.f32 %v2579, %v2649
        %v2700 = vadd.f32 %v2580, %v2652
        %v2701 = vadd.f32 %v2581, %v2657
        %v2702 = vadd.f32 %v2582, %v2660
        %v2703 = vadd.f32 %v2583, %v2665
        %v2704 = vadd.f32 %v2584, %v2668
        %v2705 = vadd.f32 %v2585, %v2673
        %v2706 = vadd.f32 %v2586, %v2676
        %v2707 = vadd.f32 %v2587, %v2681
        %v2708 = vadd.f32 %v2588, %v2684
        %v2709 = vadd.f32 %v2589, %v2689
        %v2710 = vadd.f32 %v2590, %v2692
        %v2711 = vld [vmem:[%s10] sm:$0x1]
        %v2713 = vlaneseq
        %v2714 = vshrl.u32 %v2713, 7
        %v2715 = vsub.s32 0, %v2714
        %v2716 = vrot.slane %v2711, %v2715
        %v2718 = vmul.f32 %v2695, %v2716
        %v2719 = vmul.f32 %v2696, %v2716
        %v2720 = vmul.f32 %v2697, %v2716
        %v2721 = vmul.f32 %v2698, %v2716
        %v2722 = vmul.f32 %v2699, %v2716
        %v2723 = vmul.f32 %v2700, %v2716
        %v2724 = vmul.f32 %v2701, %v2716
        %v2725 = vmul.f32 %v2702, %v2716
        %v2726 = vmul.f32 %v2703, %v2716
        %v2727 = vmul.f32 %v2704, %v2716
        %v2728 = vmul.f32 %v2705, %v2716
        %v2729 = vmul.f32 %v2706, %v2716
        %v2730 = vmul.f32 %v2707, %v2716
        %v2731 = vmul.f32 %v2708, %v2716
        %v2732 = vmul.f32 %v2709, %v2716
        %v2733 = vmul.f32 %v2710, %v2716
        %v2734 = vld [vmem:[%s11] sm:$0x1]
        %v2736 = vlaneseq
        %v2737 = vshrl.u32 %v2736, 7
        %v2738 = vsub.s32 0, %v2737
        %v2739 = vrot.slane %v2734, %v2738
        %v2741 = vadd.f32 %v2718, %v2739
        %v2742 = vadd.f32 %v2719, %v2739
        %v2743 = vadd.f32 %v2720, %v2739
        %v2744 = vadd.f32 %v2721, %v2739
        %v2745 = vadd.f32 %v2722, %v2739
        %v2746 = vadd.f32 %v2723, %v2739
        %v2747 = vadd.f32 %v2724, %v2739
        %v2748 = vadd.f32 %v2725, %v2739
        %v2749 = vadd.f32 %v2726, %v2739
        %v2750 = vadd.f32 %v2727, %v2739
        %v2751 = vadd.f32 %v2728, %v2739
        %v2752 = vadd.f32 %v2729, %v2739
        %v2753 = vadd.f32 %v2730, %v2739
        %v2754 = vadd.f32 %v2731, %v2739
        %v2755 = vadd.f32 %v2732, %v2739
        %v2756 = vadd.f32 %v2733, %v2739
        %vm2757 = vcmp.ge.f32.partialorder %v2741, 0.0
        %vm2758 = vcmp.ge.f32.partialorder %v2742, 0.0
        %vm2759 = vcmp.ge.f32.partialorder %v2743, 0.0
        %vm2760 = vcmp.ge.f32.partialorder %v2744, 0.0
        %vm2761 = vcmp.ge.f32.partialorder %v2745, 0.0
        %vm2762 = vcmp.ge.f32.partialorder %v2746, 0.0
        %vm2763 = vcmp.ge.f32.partialorder %v2747, 0.0
        %vm2764 = vcmp.ge.f32.partialorder %v2748, 0.0
        %vm2765 = vcmp.ge.f32.partialorder %v2749, 0.0
        %vm2766 = vcmp.ge.f32.partialorder %v2750, 0.0
        %vm2767 = vcmp.ge.f32.partialorder %v2751, 0.0
        %vm2768 = vcmp.ge.f32.partialorder %v2752, 0.0
        %vm2769 = vcmp.ge.f32.partialorder %v2753, 0.0
        %vm2770 = vcmp.ge.f32.partialorder %v2754, 0.0
        %vm2771 = vcmp.ge.f32.partialorder %v2755, 0.0
        %vm2772 = vcmp.ge.f32.partialorder %v2756, 0.0
        %v2773 = vstv %s754
        %v2774 = vmul.f32 %v2773, %v2741
        %v2775 = vmul.f32 %v2773, %v2742
        %v2776 = vmul.f32 %v2773, %v2743
        %v2777 = vmul.f32 %v2773, %v2744
        %v2778 = vmul.f32 %v2773, %v2745
        %v2779 = vmul.f32 %v2773, %v2746
        %v2780 = vmul.f32 %v2773, %v2747
        %v2781 = vmul.f32 %v2773, %v2748
        %v2782 = vmul.f32 %v2773, %v2749
        %v2783 = vmul.f32 %v2773, %v2750
        %v2784 = vmul.f32 %v2773, %v2751
        %v2785 = vmul.f32 %v2773, %v2752
        %v2786 = vmul.f32 %v2773, %v2753
        %v2787 = vmul.f32 %v2773, %v2754
        %v2788 = vmul.f32 %v2773, %v2755
        %v2789 = vmul.f32 %v2773, %v2756
        %v2790 = vsel %vm2757, %v2741, %v2774
        %v2791 = vsel %vm2758, %v2742, %v2775
        %v2792 = vsel %vm2759, %v2743, %v2776
        %v2793 = vsel %vm2760, %v2744, %v2777
        %v2794 = vsel %vm2761, %v2745, %v2778
        %v2795 = vsel %vm2762, %v2746, %v2779
        %v2796 = vsel %vm2763, %v2747, %v2780
        %v2797 = vsel %vm2764, %v2748, %v2781
        %v2798 = vsel %vm2765, %v2749, %v2782
        %v2799 = vsel %vm2766, %v2750, %v2783
        %v2800 = vsel %vm2767, %v2751, %v2784
        %v2801 = vsel %vm2768, %v2752, %v2785
        %v2802 = vsel %vm2769, %v2753, %v2786
        %v2803 = vsel %vm2770, %v2754, %v2787
        %v2804 = vsel %vm2771, %v2755, %v2788
        %v2805 = vsel %vm2772, %v2756, %v2789
        %v2806 = vpack.c.bf16 %v2791, %v2790
        %v2807 = vpack.c.bf16 %v2793, %v2792
        %v2808 = vpack.c.bf16 %v2795, %v2794
        %v2809 = vpack.c.bf16 %v2797, %v2796
        %v2810 = vpack.c.bf16 %v2799, %v2798
        %v2811 = vpack.c.bf16 %v2801, %v2800
        %v2812 = vpack.c.bf16 %v2803, %v2802
        %v2813 = vpack.c.bf16 %v2805, %v2804
        %v2814 = vld [vmem:[%s5] sm:$0x3]
        %v2816 = vsel %vm1593, %v2806, 0
        %v2819 = vsel %vm1593, %v2807, 0
        %v2822 = vsel %vm1593, %v2808, 0
        %v2825 = vsel %vm1593, %v2809, 0
        %v2828 = vsel %vm1593, %v2810, 0
        %v2831 = vsel %vm1593, %v2811, 0
        %v2834 = vsel %vm1593, %v2812, 0
        %v2837 = vsel %vm1593, %v2813, 0
        %v2840 = vsel %vm1618, %v2814, 0
        %2842 = vmatprep.subr.bf16.mxu0 0
        %2843 = vmatpush1.bf16.msra.mxu0 0
        %2844 = vmatprep.subr.bf16.mxu0 0
        %2845 = vmatpush1.bf16.msra.mxu0 0
        %2846 = vmatprep.subr.bf16.mxu0 0
        %2847 = vmatpush1.bf16.msra.mxu0 0
        %2848 = vmatprep.subr.bf16.mxu0 0
        %2849 = vmatpush1.bf16.msra.mxu0 0
        %2850 = vmatprep.subr.bf16.mxu0 0
        %2851 = vmatpush1.bf16.msra.mxu0 0
        %2852 = vmatprep.subr.bf16.mxu0 0
        %2853 = vmatpush1.bf16.msra.mxu0 0
        %2854 = vmatprep.subr.bf16.mxu0 0
        %2855 = vmatpush1.bf16.msra.mxu0 0
        %2856 = vmatprep.subr.bf16.mxu0 0
        %2857 = vmatpush1.bf16.msra.mxu0 %v2840
        %2858 = vmatprep.subr.bf16.mxu0 0
        %2859 = vmatpush2.bf16.msra.mxu0 0
        %2860 = vmatprep.subr.bf16.mxu0 0
        %2861 = vmatpush2.bf16.msra.mxu0 0
        %2862 = vmatprep.subr.bf16.mxu0 0
        %2863 = vmatpush2.bf16.msra.mxu0 0
        %2864 = vmatprep.subr.bf16.mxu0 0
        %2865 = vmatpush2.bf16.msra.mxu0 0
        %2866 = vmatprep.subr.bf16.mxu0 0
        %2867 = vmatpush2.bf16.msra.mxu0 0
        %2868 = vmatprep.subr.bf16.mxu0 0
        %2869 = vmatpush2.bf16.msra.mxu0 0
        %2870 = vmatprep.subr.bf16.mxu0 0
        %2871 = vmatpush2.bf16.msra.mxu0 0
        %2872 = vmatprep.subr.bf16.mxu0 0
        %2873 = vmatpush2.bf16.msra.mxu0 0
        %2874 = vmatprep.mubr.bf16.mxu0 0
        %2875 = vmatmul.mubr.bf16.gmra.mxu0 %v2816
        %v2876 = vpop.f32.mrf.mxu0
        %v2877 = vadd.f32 0.0, %v2876
        %v2878 = vpop.f32.mrf.mxu0
        %v2879 = vpop.f32.mrf.mxu0
        %v2880 = vadd.f32 0.0, %v2879
        %v2881 = vpop.f32.mrf.mxu0
        %2882 = vmatprep.mubr.bf16.mxu0 0
        %2883 = vmatmul.mubr.bf16.gmra.mxu0 %v2819
        %v2884 = vpop.f32.mrf.mxu0
        %v2885 = vadd.f32 0.0, %v2884
        %v2886 = vpop.f32.mrf.mxu0
        %v2887 = vpop.f32.mrf.mxu0
        %v2888 = vadd.f32 0.0, %v2887
        %v2889 = vpop.f32.mrf.mxu0
        %2890 = vmatprep.mubr.bf16.mxu0 0
        %2891 = vmatmul.mubr.bf16.gmra.mxu0 %v2822
        %v2892 = vpop.f32.mrf.mxu0
        %v2893 = vadd.f32 0.0, %v2892
        %v2894 = vpop.f32.mrf.mxu0
        %v2895 = vpop.f32.mrf.mxu0
        %v2896 = vadd.f32 0.0, %v2895
        %v2897 = vpop.f32.mrf.mxu0
        %2898 = vmatprep.mubr.bf16.mxu0 0
        %2899 = vmatmul.mubr.bf16.gmra.mxu0 %v2825
        %v2900 = vpop.f32.mrf.mxu0
        %v2901 = vadd.f32 0.0, %v2900
        %v2902 = vpop.f32.mrf.mxu0
        %v2903 = vpop.f32.mrf.mxu0
        %v2904 = vadd.f32 0.0, %v2903
        %v2905 = vpop.f32.mrf.mxu0
        %2906 = vmatprep.mubr.bf16.mxu0 0
        %2907 = vmatmul.mubr.bf16.gmra.mxu0 %v2828
        %v2908 = vpop.f32.mrf.mxu0
        %v2909 = vadd.f32 0.0, %v2908
        %v2910 = vpop.f32.mrf.mxu0
        %v2911 = vpop.f32.mrf.mxu0
        %v2912 = vadd.f32 0.0, %v2911
        %v2913 = vpop.f32.mrf.mxu0
        %2914 = vmatprep.mubr.bf16.mxu0 0
        %2915 = vmatmul.mubr.bf16.gmra.mxu0 %v2831
        %v2916 = vpop.f32.mrf.mxu0
        %v2917 = vadd.f32 0.0, %v2916
        %v2918 = vpop.f32.mrf.mxu0
        %v2919 = vpop.f32.mrf.mxu0
        %v2920 = vadd.f32 0.0, %v2919
        %v2921 = vpop.f32.mrf.mxu0
        %2922 = vmatprep.mubr.bf16.mxu0 0
        %2923 = vmatmul.mubr.bf16.gmra.mxu0 %v2834
        %v2924 = vpop.f32.mrf.mxu0
        %v2925 = vadd.f32 0.0, %v2924
        %v2926 = vpop.f32.mrf.mxu0
        %v2927 = vpop.f32.mrf.mxu0
        %v2928 = vadd.f32 0.0, %v2927
        %v2929 = vpop.f32.mrf.mxu0
        %2930 = vmatprep.mubr.bf16.mxu0 0
        %2931 = vmatmul.mubr.bf16.gmra.mxu0 %v2837
        %v2932 = vpop.f32.mrf.mxu0
        %v2933 = vadd.f32 0.0, %v2932
        %v2934 = vpop.f32.mrf.mxu0
        %v2935 = vpop.f32.mrf.mxu0
        %v2936 = vadd.f32 0.0, %v2935
        %v2937 = vpop.f32.mrf.mxu0
        %2938 = vdwg.mxu0
        %v2939 = vld [vmem:[%s12] sm:$0x1]
        %v2941 = vlaneseq
        %v2942 = vshrl.u32 %v2941, 7
        %v2943 = vsub.s32 0, %v2942
        %v2944 = vrot.slane %v2939, %v2943
        %v2946 = vmul.f32 %v2877, %v2944
        %v2947 = vmul.f32 %v2880, %v2944
        %v2948 = vmul.f32 %v2885, %v2944
        %v2949 = vmul.f32 %v2888, %v2944
        %v2950 = vmul.f32 %v2893, %v2944
        %v2951 = vmul.f32 %v2896, %v2944
        %v2952 = vmul.f32 %v2901, %v2944
        %v2953 = vmul.f32 %v2904, %v2944
        %v2954 = vmul.f32 %v2909, %v2944
        %v2955 = vmul.f32 %v2912, %v2944
        %v2956 = vmul.f32 %v2917, %v2944
        %v2957 = vmul.f32 %v2920, %v2944
        %v2958 = vmul.f32 %v2925, %v2944
        %v2959 = vmul.f32 %v2928, %v2944
        %v2960 = vmul.f32 %v2933, %v2944
        %v2961 = vmul.f32 %v2936, %v2944
        %v2962 = vld [vmem:[%s13] sm:$0x1]
        %v2964 = vlaneseq
        %v2965 = vshrl.u32 %v2964, 7
        %v2966 = vsub.s32 0, %v2965
        %v2967 = vrot.slane %v2962, %v2966
        %v2969 = vadd.f32 %v2946, %v2967
        %v2970 = vadd.f32 %v2947, %v2967
        %v2971 = vadd.f32 %v2948, %v2967
        %v2972 = vadd.f32 %v2949, %v2967
        %v2973 = vadd.f32 %v2950, %v2967
        %v2974 = vadd.f32 %v2951, %v2967
        %v2975 = vadd.f32 %v2952, %v2967
        %v2976 = vadd.f32 %v2953, %v2967
        %v2977 = vadd.f32 %v2954, %v2967
        %v2978 = vadd.f32 %v2955, %v2967
        %v2979 = vadd.f32 %v2956, %v2967
        %v2980 = vadd.f32 %v2957, %v2967
        %v2981 = vadd.f32 %v2958, %v2967
        %v2982 = vadd.f32 %v2959, %v2967
        %v2983 = vadd.f32 %v2960, %v2967
        %v2984 = vadd.f32 %v2961, %v2967
        %2985 = vst.msk [vmem:[%s725] sm:$0xff] %vm851, %v2969
        %2986 = vst.msk [vmem:[%s725 + $0x8] sm:$0xff] %vm851, %v2970
        %2987 = vst.msk [vmem:[%s725 + $0x10] sm:$0xff] %vm851, %v2971
        %2988 = vst.msk [vmem:[%s725 + $0x18] sm:$0xff] %vm851, %v2972
        %2989 = vst.msk [vmem:[%s725 + $0x20] sm:$0xff] %vm851, %v2973
        %2990 = vst.msk [vmem:[%s725 + $0x28] sm:$0xff] %vm851, %v2974
        %2991 = vst.msk [vmem:[%s725 + $0x30] sm:$0xff] %vm851, %v2975
        %2992 = vst.msk [vmem:[%s725 + $0x38] sm:$0xff] %vm851, %v2976
        %2993 = vst.msk [vmem:[%s725 + $0x40] sm:$0xff] %vm851, %v2977
        %2994 = vst.msk [vmem:[%s725 + $0x48] sm:$0xff] %vm851, %v2978
        %2995 = vst.msk [vmem:[%s725 + $0x50] sm:$0xff] %vm851, %v2979
        %2996 = vst.msk [vmem:[%s725 + $0x58] sm:$0xff] %vm851, %v2980
        %2997 = vst.msk [vmem:[%s725 + $0x60] sm:$0xff] %vm851, %v2981
        %2998 = vst.msk [vmem:[%s725 + $0x68] sm:$0xff] %vm851, %v2982
        %2999 = vst.msk [vmem:[%s725 + $0x70] sm:$0xff] %vm851, %v2983
        %3000 = vst.msk [vmem:[%s725 + $0x78] sm:$0xff] %vm851, %v2984
        %p3001 = scmp.eq.s32.totalorder %s48, 0
        // Predicated region
        $region101: #{tpu_custom_call.1} parent=87 // pred_check
          %p3002 = pneg %p3001
        $region102: #{tpu_custom_call.1} parent=87 // pred_check_branch
          %3004 = sbr.rel (%p3002) target = $region104
        $region103: #{tpu_custom_call.1} parent=87 // pred_region
          %vm3005 = vcmask 122880
          %3006 = vst.msk [vmem:[%s731] sm:$0x1] %vm3005, 0.0
        $region104: #{tpu_custom_call.1} parent=87 // pred_fallthru
          _
        %v3007 = vld [vmem:[%s731] sm:$0x1]
        %v3008 = vsel %vm851, %v2969, 0.0
        %v3009 = vsel %vm851, %v2970, 0.0
        %v3010 = vadd.f32 %v3008, %v3009
        %v3011 = vsel %vm851, %v2971, 0.0
        %v3012 = vadd.f32 %v3010, %v3011
        %v3013 = vsel %vm851, %v2972, 0.0
        %v3014 = vadd.f32 %v3012, %v3013
        %v3015 = vsel %vm851, %v2973, 0.0
        %v3016 = vadd.f32 %v3014, %v3015
        %v3017 = vsel %vm851, %v2974, 0.0
        %v3018 = vadd.f32 %v3016, %v3017
        %v3019 = vsel %vm851, %v2975, 0.0
        %v3020 = vadd.f32 %v3018, %v3019
        %v3021 = vsel %vm851, %v2976, 0.0
        %v3022 = vadd.f32 %v3020, %v3021
        %v3023 = vsel %vm851, %v2977, 0.0
        %v3024 = vadd.f32 %v3022, %v3023
        %v3025 = vsel %vm851, %v2978, 0.0
        %v3026 = vadd.f32 %v3024, %v3025
        %v3027 = vsel %vm851, %v2979, 0.0
        %v3028 = vadd.f32 %v3026, %v3027
        %v3029 = vsel %vm851, %v2980, 0.0
        %v3030 = vadd.f32 %v3028, %v3029
        %v3031 = vsel %vm851, %v2981, 0.0
        %v3032 = vadd.f32 %v3030, %v3031
        %v3033 = vsel %vm851, %v2982, 0.0
        %v3034 = vadd.f32 %v3032, %v3033
        %v3035 = vsel %vm851, %v2983, 0.0
        %v3036 = vadd.f32 %v3034, %v3035
        %v3037 = vsel %vm851, %v2984, 0.0
        %v3038 = vadd.f32 %v3036, %v3037
        %v3039 = vrot.slane %v3038, 4
        %v3040 = vadd.f32 %v3038, %v3039
        %v3041 = vrot.slane %v3040, 2
        %v3042 = vadd.f32 %v3040, %v3041
        %v3043 = vrot.slane %v3042, 1
        %v3044 = vadd.f32 %v3042, %v3043
        %v3045 = vmul.f32 %v3044, 0.00390625
        %v3046 = vadd.f32 %v3007, %v3045
        %vm3047 = vcmask 122880
        %3048 = vst.msk [vmem:[%s731] sm:$0x1] %vm3047, %v3046
        %s3049 = sand.u32 %s459, 1
        %s3050 = scalar_lea.sflag [#allocation4], %s3049
        %s3051 = sand.u32 %s459, 1
        %s3052 = smul.addr %s3051, 128
        %s3053 = scalar_lea.vmem [#allocation9], %s3052
        %s3054 = sand.u32 %s485, 1
        %s3055 = scalar_lea.sflag [#allocation11], %s3054
        %s3056 = sand.u32 %s485, 1
        %s3057 = scalar_lea.vmem [#allocation10], %s3056
        // Predicated region
        $region105: #{tpu_custom_call.1} parent=87 // pred_check
          %p3058 = pneg %p469
        $region106: #{tpu_custom_call.1} parent=87 // pred_check_branch
          %3060 = sbr.rel (%p3058) target = $region108
        $region107: #{tpu_custom_call.1} parent=87 // pred_region
          %s3061 = smul.u32 8, %s48
          %s3063 = ssub.s32 2048, 2048
          %3064 = vsyncadd %s3050, %s3063
          %s3065 = smul.addr %s3061, 2
          %s3066 = smul.addr %s47, 32
          %s3067 = sadd.s32 %s3065, %s3066
          %s3068 = smul.addr %s3067, 128
          %s3069 = scalar_lea.hbm %s17, %s3068
          %s3070 = sshll.u32 %s3053, 4
          %s3071 = int_to_ptr.vmem [resolvable:$true] %s3070
          %3076 = dma.vmem_to_hbm [thread:$0]  %s3071, 2048, %s3069, %s3050, 128, 128, 8
        $region108: #{tpu_custom_call.1} parent=87 // pred_fallthru
          _
        // Predicated region
        $region109: #{tpu_custom_call.1} parent=87 // pred_check
          %p3077 = pneg %p495
        $region110: #{tpu_custom_call.1} parent=87 // pred_check_branch
          %3079 = sbr.rel (%p3077) target = $region112
        $region111: #{tpu_custom_call.1} parent=87 // pred_region
          %s3081 = ssub.s32 16, 16
          %3082 = vsyncadd %s3055, %s3081
          %s3083 = smul.addr %s47, 16
          %s3084 = scalar_lea.hbm %s18, %s3083
          %s3086 = sshll.u32 %s3057, 4
          %s3087 = int_to_ptr.vmem [resolvable:$true] %s3086
          %3089 = dma.vmem_to_hbm [thread:$0]  %s3087, 16, %s3084, %s3055
        $region112: #{tpu_custom_call.1} parent=87 // pred_fallthru
          _
      $region88: #{tpu_custom_call.1} parent=5 // pred_fallthru
        _
      %p3090 = scmp.le.s32.totalorder 2, %s38
      // Predicated region
      $region113: #{tpu_custom_call.1} parent=5 // pred_check
        %p3091 = pneg %p3090
      $region114: #{tpu_custom_call.1} parent=5 // pred_check_branch
        %3093 = sbr.rel (%p3091) target = $region116
      $region115: #{tpu_custom_call.1} parent=5 // pred_region
        %s3094 = ssub.s32 %s38, 2
        // Predicated region
        $region117: #{tpu_custom_call.1} parent=115 // pred_check
          %p3095 = pneg %p475
        $region118: #{tpu_custom_call.1} parent=115 // pred_check_branch
          %3097 = sbr.rel (%p3095) target = $region120
        $region119: #{tpu_custom_call.1} parent=115 // pred_region
          %s3098 = sand.u32 %s460, 1
          %s3099 = scalar_lea.sflag [#allocation4], %s3098
          %s3100 = sand.u32 %s460, 1
          %s3101 = smul.addr %s3100, 128
          %s3102 = scalar_lea.vmem [#allocation9], %s3101
          %3103 = dma.done %s3099, 2048
        $region120: #{tpu_custom_call.1} parent=115 // pred_fallthru
          _
        // Predicated region
        $region121: #{tpu_custom_call.1} parent=115 // pred_check
          %p3104 = pneg %p501
        $region122: #{tpu_custom_call.1} parent=115 // pred_check_branch
          %3106 = sbr.rel (%p3104) target = $region124
        $region123: #{tpu_custom_call.1} parent=115 // pred_region
          %s3107 = sand.u32 %s486, 1
          %s3108 = scalar_lea.sflag [#allocation11], %s3107
          %s3109 = sand.u32 %s486, 1
          %s3110 = scalar_lea.vmem [#allocation10], %s3109
          %3111 = dma.done %s3108, 16
        $region124: #{tpu_custom_call.1} parent=115 // pred_fallthru
          _
      $region116: #{tpu_custom_call.1} parent=5 // pred_fallthru
        _
    $region6: #{tpu_custom_call.1} parent=1 // loop_footer
      %s42 = sadd.s32 1, %s38
    $region7: #{tpu_custom_call.1} parent=1 // loop_footer_branch
      %37 = sbr.rel target = $region3
    $region8: #{tpu_custom_call.1} parent=1 // loop_exit
      _
    %3112 = vsyncpa [#allocation3], 1
    %s3113 = scalar_lea.sflag [#allocation3], 1
    %3114 = vsyncpa %s3113, 1
    %3115 = vsyncpa [#allocation7], 1
    %s3116 = scalar_lea.sflag [#allocation7], 1
    %3117 = vsyncpa %s3116, 1
    %3118 = vsyncpa [#allocation4], 1
    %s3119 = scalar_lea.sflag [#allocation4], 1
    %3120 = vsyncpa %s3119, 1
    %3121 = vsyncpa [#allocation11], 1
    %s3122 = scalar_lea.sflag [#allocation11], 1
    %3123 = vsyncpa %s3122, 1
    %3124 = vsyncpa [#allocation5], 1
    %s3125 = scalar_lea.sflag [#allocation5], 1
    %3126 = vsyncpa %s3125, 1

</llo_original>
